<compile_context>
chip_gen: v7x
topology: tpu7x:2x2x1
jax: 0.10.0
libtpu: 0.0.40
codegen_flags: <defaults>
</compile_context>

<pallas_src>
import jax
import jax.numpy as jnp
from jax import lax
from jax.experimental import pallas as pl
from jax.experimental.pallas import tpu as pltpu


def _leaky_relu(x, slope=0.1):
    return jnp.where(x > 0, x, slope * x)


def pneumonia_nn_kernel(x_ref,            # (TILE_B, TILE_K) f32  (rows = batch)
                        w1_ref, b1_ref,   # (128, TILE_K) bf16,  (128, 1) f32
                        w2_ref, b2_ref,   # (64, 128) bf16,      (64, 1)  f32
                        w3_ref, b3_ref,   # (32, 64) bf16,       (32, 1)  f32
                        w4_ref, b4_ref,   # (32, 1) f32,         (1, 1)   f32
                        o_ref,            # (1, TILE_B) f32
                        acc_ref):         # (128, TILE_B) f32 scratch (layer-1 acc)
    k = pl.program_id(1)

    @pl.when(k == 0)
    def _():
        acc_ref[...] = jnp.zeros_like(acc_ref)

    # Layer 1 partial product: contract w1 dim-1 with x dim-1 (== W1 @ x^T
    # without materializing a transpose). bf16 cast happens in-kernel.
    x_bf = x_ref[...].astype(jnp.bfloat16)
    acc_ref[...] += lax.dot_general(
        w1_ref[...], x_bf,
        dimension_numbers=(((1,), (1,)), ((), ())),
        preferred_element_type=jnp.float32)

    @pl.when(k == pl.num_programs(1) - 1)
    def _():
        # Layer 1 epilogue (Dropout = identity in eval mode).
        h = _leaky_relu(acc_ref[...] + b1_ref[...])            # (128, TILE_B) f32

        # Layer 2: Linear(128, 64) + LeakyReLU(0.1)
        h = jnp.dot(w2_ref[...], h.astype(jnp.bfloat16),
                    preferred_element_type=jnp.float32)
        h = _leaky_relu(h + b2_ref[...])                       # (64, TILE_B)

        # Layer 3: Linear(64, 32) + LeakyReLU(0.1)
        h = jnp.dot(w3_ref[...], h.astype(jnp.bfloat16),
                    preferred_element_type=jnp.float32)
        h = _leaky_relu(h + b3_ref[...])                       # (32, TILE_B)

        # Layer 4: Linear(32, 1) + Sigmoid.  N=1 stays off the MXU: VPU
        # broadcast-multiply + cross-sublane reduce; exact divide (not on the
        # critical path) for closer parity with torch.sigmoid.
        z = jnp.sum(h * w4_ref[...], axis=0, keepdims=True) + b4_ref[...]
        o_ref[...] = (1.0 / (1.0 + jnp.exp(-z))).astype(o_ref.dtype)


def _pick_tile_b(batch):
    # Fatter tiles amortize per-step overhead, but keep >= 2 batch grid steps
    # so both v7x TensorCores get work (harmless on single-TC v5e/v6e).
    for cand in (2048, 1024, 512, 256, 128):
        if pl.cdiv(batch, cand) >= 2:
            return cand
    return 128


def pneumonia_nn_forward(x, params, *, tile_b=None, tile_k=512):
    """x: (B, input_size) float32. params: dict (see init_params). Returns (B, 1) f32."""
    B, input_size = x.shape
    if tile_b is None:
        tile_b = _pick_tile_b(B)
    num_b = pl.cdiv(B, tile_b)
    b_pad = num_b * tile_b

    # K (feature) tiling: keeps w1/x tiles bounded for large input_size.
    if input_size <= tile_k:
        tile_k = input_size
        num_k, k_pad = 1, input_size
    else:
        tile_k = max(128, (tile_k // 128) * 128)     # lane-aligned K tiles
        num_k = pl.cdiv(input_size, tile_k)
        k_pad = num_k * tile_k

    if b_pad != B or k_pad != input_size:
        x = jnp.pad(x, ((0, b_pad - B), (0, k_pad - input_size)))  # zero pad

    w1 = params["w1"].astype(jnp.bfloat16)
    if k_pad != input_size:
        w1 = jnp.pad(w1, ((0, 0), (0, k_pad - input_size)))        # zero features
    w2 = params["w2"].astype(jnp.bfloat16)
    w3 = params["w3"].astype(jnp.bfloat16)
    b1, b2, b3 = params["b1"], params["b2"], params["b3"]
    w4, b4 = params["w4"], params["b4"]

    # VMEM budget derived from actual tile sizes (headroom + cap at the
    # smallest physical VMEM, v7x's 64 MiB).
    w1_bufs = 1 if num_k == 1 else 2
    vmem_bytes = (
        2 * tile_b * tile_k * 4                 # x tile (f32), double-buffered
        + w1_bufs * 128 * tile_k * 2            # w1 tile (bf16)
        + 2 * tile_b * 4                        # output row, double-buffered
        + 128 * tile_b * 4                      # layer-1 f32 accumulator scratch
        + (64 * 128 + 32 * 64) * 2              # resident bf16 w2, w3
        + (128 + 64 + 32 + 32 + 1) * 4          # f32 biases + w4
    )
    vmem_limit = int(min(64 << 20, 2 * vmem_bytes + (8 << 20)))

    flops = 2 * b_pad * (k_pad * 128 + 128 * 64 + 64 * 32 + 32)
    bytes_accessed = (b_pad * k_pad * 4                    # x
                      + (128 * k_pad + 64 * 128 + 32 * 64) * 2   # bf16 weights
                      + (128 + 64 + 32 + 32 + 1) * 4             # biases + w4
                      + b_pad * 4)                               # output
    cost = pl.CostEstimate(flops=flops, transcendentals=b_pad,
                           bytes_accessed=bytes_accessed)

    args = (x, w1, b1, w2, b2, w3, b3, w4, b4)

    def run(single_buffer_weights):
        def resident(arr):
            # Constant index_map -> block stays VMEM-resident; single buffer
            # halves its footprint (no pipelining needed for a constant block).
            if single_buffer_weights:
                try:
                    return pl.BlockSpec(arr.shape, lambda i, k: (0, 0),
                                        pipeline_mode=pl.Buffered(1))
                except TypeError:   # older jax without pipeline_mode kwarg
                    pass
            return pl.BlockSpec(arr.shape, lambda i, k: (0, 0))

        if num_k == 1:
            w1_spec = resident(w1)
        else:
            w1_spec = pl.BlockSpec((128, tile_k), lambda i, k: (0, k))

        return pl.pallas_call(
            pneumonia_nn_kernel,
            out_shape=jax.ShapeDtypeStruct((1, b_pad), jnp.float32),
            grid=(num_b, num_k),
            in_specs=[
                pl.BlockSpec((tile_b, tile_k), lambda i, k: (i, k)),  # streamed x
                w1_spec, resident(b1),
                resident(w2), resident(b2),
                resident(w3), resident(b3),
                resident(w4), resident(b4),
            ],
            out_specs=pl.BlockSpec((1, tile_b), lambda i, k: (0, i)),  # lane-dense
            scratch_shapes=[pltpu.VMEM((128, tile_b), jnp.float32)],
            compiler_params=pltpu.CompilerParams(
                dimension_semantics=("parallel", "arbitrary"),
                vmem_limit_bytes=vmem_limit),
            cost_estimate=cost,
        )(*args)

    try:
        out = run(single_buffer_weights=True)
    except Exception:
        # Fallback if single-buffered (Buffered(1)) resident blocks are not
        # supported by this jax/Mosaic version; semantics are identical.
        out = run(single_buffer_weights=False)

    return out[0, :B].reshape(B, 1)


def init_params(key, input_size):
    """Deterministic init matching nn.Linear's U(-1/sqrt(fan_in), 1/sqrt(fan_in)).

    w1..w3 stored PyTorch-style (out, in); w4 stored as the (32, 1) column of
    the PyTorch (1, 32) weight; biases stored as (out, 1) columns.
    """
    dims = [(input_size, 128), (128, 64), (64, 32), (32, 1)]
    params = {}
    for i, (fan_in, fan_out) in enumerate(dims, start=1):
        key, kw, kb = jax.random.split(key, 3)
        bound = float(fan_in) ** -0.5
        w_shape = (fan_out, fan_in) if i < 4 else (fan_in, fan_out)
        params[f"w{i}"] = jax.random.uniform(
            kw, w_shape, jnp.float32, -bound, bound)
        params[f"b{i}"] = jax.random.uniform(
            kb, (fan_out, 1), jnp.float32, -bound, bound)
    return params


def reference_forward(x, params):
    """Pure-JAX f32 reference of the PyTorch eval-mode forward pass."""
    h = x
    for i in (1, 2, 3):
        h = h @ params[f"w{i}"].T + params[f"b{i}"][:, 0]
        h = jnp.where(h > 0, h, 0.1 * h)
    z = h @ params["w4"] + params["b4"]          # (B, 1) + (1, 1)
    return jax.nn.sigmoid(z)


if __name__ == "__main__":
    key = jax.random.PRNGKey(0)
    k_param, k_x, k_param2, k_x2 = jax.random.split(key, 4)

    # Case 1: small feature vector; batch not a multiple of tile_b
    # (exercises tail padding and a 2-step "parallel" batch grid).
    input_size = 64
    batch = 300
    params = init_params(k_param, input_size)
    x = jax.random.normal(k_x, (batch, input_size), dtype=jnp.float32)

    out = jax.block_until_ready(pneumonia_nn_forward(x, params))
    ref = reference_forward(x, params)
    assert out.shape == (batch, 1), out.shape
    # bf16 weights/activations vs f32 reference: loose tolerance.
    assert jnp.allclose(out, ref, atol=2e-2, rtol=2e-2), float(
        jnp.max(jnp.abs(out - ref)))

    # Case 2: larger input_size exercising the K-tiling ("arbitrary") grid axis
    # plus feature-dim zero padding.
    input_size2 = 300
    batch2 = 130
    params2 = init_params(k_param2, input_size2)
    x2 = jax.random.normal(k_x2, (batch2, input_size2), dtype=jnp.float32)

    out2 = jax.block_until_ready(pneumonia_nn_forward(x2, params2, tile_k=128))
    ref2 = reference_forward(x2, params2)
    assert out2.shape == (batch2, 1), out2.shape
    assert jnp.allclose(out2, ref2, atol=2e-2, rtol=2e-2), float(
        jnp.max(jnp.abs(out2 - ref2)))

    print("KERNEL_OK")
</pallas_src>

<mosaic_0001>
module attributes {stable_mosaic.version = 11 : i64} {
  func.func @pneumonia_nn_kernel(%arg0: i32, %arg1: i32, %arg2: memref<256x64xf32, #tpu.memory_space<vmem>>, %arg3: memref<128x64xbf16, #tpu.memory_space<vmem>>, %arg4: memref<128x1xf32, #tpu.memory_space<vmem>>, %arg5: memref<64x128xbf16, #tpu.memory_space<vmem>>, %arg6: memref<64x1xf32, #tpu.memory_space<vmem>>, %arg7: memref<32x64xbf16, #tpu.memory_space<vmem>>, %arg8: memref<32x1xf32, #tpu.memory_space<vmem>>, %arg9: memref<32x1xf32, #tpu.memory_space<vmem>>, %arg10: memref<1x1xf32, #tpu.memory_space<vmem>>, %arg11: memref<1x256xf32, #tpu.memory_space<vmem>>, %arg12: memref<128x256xf32, #tpu.memory_space<vmem>>) attributes {dimension_semantics = [#tpu.dimension_semantics<parallel>, #tpu.dimension_semantics<arbitrary>], iteration_bounds = array<i64: 2, 1>, scalar_prefetch = 0 : i64, scratch_operands = 1 : i64, tpu.core_type = #tpu.core_type<tc>, window_params = [{transform_indices = @transform_0, window_bounds = array<i64: 256, 64>}, {pipeline_mode = #tpu.pipeline_mode<synchronous>, transform_indices = @transform_1, window_bounds = array<i64: 128, 64>}, {pipeline_mode = #tpu.pipeline_mode<synchronous>, transform_indices = @transform_2, window_bounds = array<i64: 128, 1>}, {pipeline_mode = #tpu.pipeline_mode<synchronous>, transform_indices = @transform_3, window_bounds = array<i64: 64, 128>}, {pipeline_mode = #tpu.pipeline_mode<synchronous>, transform_indices = @transform_4, window_bounds = array<i64: 64, 1>}, {pipeline_mode = #tpu.pipeline_mode<synchronous>, transform_indices = @transform_5, window_bounds = array<i64: 32, 64>}, {pipeline_mode = #tpu.pipeline_mode<synchronous>, transform_indices = @transform_6, window_bounds = array<i64: 32, 1>}, {pipeline_mode = #tpu.pipeline_mode<synchronous>, transform_indices = @transform_7, window_bounds = array<i64: 32, 1>}, {pipeline_mode = #tpu.pipeline_mode<synchronous>, transform_indices = @transform_8, window_bounds = array<i64: 1, 1>}, {transform_indices = @transform_9, window_bounds = array<i64: 1, 256>}]} {
    %c0_i32 = arith.constant 0 : i32
    %0 = arith.cmpi eq, %arg1, %c0_i32 : i32
    %1 = arith.extui %0 : i1 to i32
    %c0_i32_0 = arith.constant 0 : i32
    %2 = arith.cmpi ne, %1, %c0_i32_0 : i32
    scf.if %2 {
      %cst_10 = arith.constant 0.000000e+00 : f32
      %13 = vector.broadcast %cst_10 : f32 to vector<128x256xf32>
      %c0_11 = arith.constant 0 : index
      %c0_12 = arith.constant 0 : index
      %14 = vector.load %arg12[%c0_11, %c0_12] : memref<128x256xf32, #tpu.memory_space<vmem>>, vector<128x256xf32>
      tpu.vector_store %arg12[%c0_11, %c0_12], %13 {strides = array<i32>} : memref<128x256xf32, #tpu.memory_space<vmem>>, vector<128x256xf32>,
    } else {
    }
    %c0 = arith.constant 0 : index
    %c0_1 = arith.constant 0 : index
    %3 = vector.load %arg2[%c0, %c0_1] : memref<256x64xf32, #tpu.memory_space<vmem>>, vector<256x64xf32>
    %4 = arith.truncf %3 : vector<256x64xf32> to vector<256x64xbf16>
    %c0_2 = arith.constant 0 : index
    %c0_3 = arith.constant 0 : index
    %5 = vector.load %arg12[%c0_2, %c0_3] : memref<128x256xf32, #tpu.memory_space<vmem>>, vector<128x256xf32>
    %c0_4 = arith.constant 0 : index
    %c0_5 = arith.constant 0 : index
    %6 = vector.load %arg3[%c0_4, %c0_5] : memref<128x64xbf16, #tpu.memory_space<vmem>>, vector<128x64xbf16>
    %cst = arith.constant dense<0.000000e+00> : vector<128x256xf32>
    %7 = tpu.matmul %6, %4, %cst {dimension_numbers = #tpu.dot_dimension_numbers<[1], [1], [0], [0], [0, 0, 1, 0], [], []>} : vector<128x64xbf16>, vector<256x64xbf16>, vector<128x256xf32> -> vector<128x256xf32>
    %8 = arith.addf %5, %7 : vector<128x256xf32>
    %c0_6 = arith.constant 0 : index
    %c0_7 = arith.constant 0 : index
    %9 = vector.load %arg12[%c0_6, %c0_7] : memref<128x256xf32, #tpu.memory_space<vmem>>, vector<128x256xf32>
    tpu.vector_store %arg12[%c0_6, %c0_7], %8 {strides = array<i32>} : memref<128x256xf32, #tpu.memory_space<vmem>>, vector<128x256xf32>,
    %c0_i32_8 = arith.constant 0 : i32
    %10 = arith.cmpi eq, %arg1, %c0_i32_8 : i32
    %11 = arith.extui %10 : i1 to i32
    %c0_i32_9 = arith.constant 0 : i32
    %12 = arith.cmpi ne, %11, %c0_i32_9 : i32
    scf.if %12 {
      %c0_10 = arith.constant 0 : index
      %c0_11 = arith.constant 0 : index
      %13 = vector.load %arg12[%c0_10, %c0_11] : memref<128x256xf32, #tpu.memory_space<vmem>>, vector<128x256xf32>
      %c0_12 = arith.constant 0 : index
      %c0_13 = arith.constant 0 : index
      %14 = vector.load %arg4[%c0_12, %c0_13] : memref<128x1xf32, #tpu.memory_space<vmem>>, vector<128x1xf32>
      %15 = vector.broadcast %14 : vector<128x1xf32> to vector<128x256xf32>
      %16 = arith.addf %13, %15 : vector<128x256xf32>
      %cst_14 = arith.constant 0.000000e+00 : f32
      %17 = vector.broadcast %cst_14 : f32 to vector<128x256xf32>
      %18 = arith.cmpf ogt, %16, %17 : vector<128x256xf32>
      %cst_15 = arith.constant 1.000000e-01 : f32
      %19 = vector.broadcast %cst_15 : f32 to vector<128x256xf32>
      %20 = arith.mulf %19, %16 : vector<128x256xf32>
      %21 = arith.select %18, %16, %20 : vector<128x256xi1>, vector<128x256xf32>
      %c0_16 = arith.constant 0 : index
      %c0_17 = arith.constant 0 : index
      %22 = vector.load %arg5[%c0_16, %c0_17] : memref<64x128xbf16, #tpu.memory_space<vmem>>, vector<64x128xbf16>
      %23 = arith.truncf %21 : vector<128x256xf32> to vector<128x256xbf16>
      %cst_18 = arith.constant dense<0.000000e+00> : vector<64x256xf32>
      %24 = tpu.matmul %22, %23, %cst_18 {dimension_numbers = #tpu.dot_dimension_numbers<[1], [0], [0], [1], [0, 0, 1, 1], [], []>} : vector<64x128xbf16>, vector<128x256xbf16>, vector<64x256xf32> -> vector<64x256xf32>
      %c0_19 = arith.constant 0 : index
      %c0_20 = arith.constant 0 : index
      %25 = vector.load %arg6[%c0_19, %c0_20] : memref<64x1xf32, #tpu.memory_space<vmem>>, vector<64x1xf32>
      %26 = vector.broadcast %25 : vector<64x1xf32> to vector<64x256xf32>
      %27 = arith.addf %24, %26 : vector<64x256xf32>
      %cst_21 = arith.constant 0.000000e+00 : f32
      %28 = vector.broadcast %cst_21 : f32 to vector<64x256xf32>
      %29 = arith.cmpf ogt, %27, %28 : vector<64x256xf32>
      %cst_22 = arith.constant 1.000000e-01 : f32
      %30 = vector.broadcast %cst_22 : f32 to vector<64x256xf32>
      %31 = arith.mulf %30, %27 : vector<64x256xf32>
      %32 = arith.select %29, %27, %31 : vector<64x256xi1>, vector<64x256xf32>
      %c0_23 = arith.constant 0 : index
      %c0_24 = arith.constant 0 : index
      %33 = vector.load %arg7[%c0_23, %c0_24] : memref<32x64xbf16, #tpu.memory_space<vmem>>, vector<32x64xbf16>
      %34 = arith.truncf %32 : vector<64x256xf32> to vector<64x256xbf16>
      %cst_25 = arith.constant dense<0.000000e+00> : vector<32x256xf32>
      %35 = tpu.matmul %33, %34, %cst_25 {dimension_numbers = #tpu.dot_dimension_numbers<[1], [0], [0], [1], [0, 0, 1, 1], [], []>} : vector<32x64xbf16>, vector<64x256xbf16>, vector<32x256xf32> -> vector<32x256xf32>
      %c0_26 = arith.constant 0 : index
      %c0_27 = arith.constant 0 : index
      %36 = vector.load %arg8[%c0_26, %c0_27] : memref<32x1xf32, #tpu.memory_space<vmem>>, vector<32x1xf32>
      %37 = vector.broadcast %36 : vector<32x1xf32> to vector<32x256xf32>
      %38 = arith.addf %35, %37 : vector<32x256xf32>
      %cst_28 = arith.constant 0.000000e+00 : f32
      %39 = vector.broadcast %cst_28 : f32 to vector<32x256xf32>
      %40 = arith.cmpf ogt, %38, %39 : vector<32x256xf32>
      %cst_29 = arith.constant 1.000000e-01 : f32
      %41 = vector.broadcast %cst_29 : f32 to vector<32x256xf32>
      %42 = arith.mulf %41, %38 : vector<32x256xf32>
      %43 = arith.select %40, %38, %42 : vector<32x256xi1>, vector<32x256xf32>
      %c0_30 = arith.constant 0 : index
      %c0_31 = arith.constant 0 : index
      %44 = vector.load %arg9[%c0_30, %c0_31] : memref<32x1xf32, #tpu.memory_space<vmem>>, vector<32x1xf32>
      %45 = vector.broadcast %44 : vector<32x1xf32> to vector<32x256xf32>
      %46 = arith.mulf %43, %45 : vector<32x256xf32>
      %cst_32 = arith.constant dense<0.000000e+00> : vector<256xf32>
      %47 = vector.multi_reduction <add>, %46, %cst_32 [0] : vector<32x256xf32> to vector<256xf32>
      %48 = vector.shape_cast %47 : vector<256xf32> to vector<1x256xf32>
      %c0_33 = arith.constant 0 : index
      %c0_34 = arith.constant 0 : index
      %49 = vector.load %arg10[%c0_33, %c0_34] : memref<1x1xf32, #tpu.memory_space<vmem>>, vector<1x1xf32>
      %50 = vector.broadcast %49 : vector<1x1xf32> to vector<1x256xf32>
      %51 = arith.addf %48, %50 : vector<1x256xf32>
      %cst_35 = arith.constant 0.000000e+00 : f32
      %52 = vector.broadcast %cst_35 : f32 to vector<1x256xf32>
      %53 = arith.subf %52, %51 : vector<1x256xf32>
      %54 = math.exp %53 : vector<1x256xf32>
      %cst_36 = arith.constant 1.000000e+00 : f32
      %55 = vector.broadcast %cst_36 : f32 to vector<1x256xf32>
      %56 = arith.addf %55, %54 : vector<1x256xf32>
      %cst_37 = arith.constant 1.000000e+00 : f32
      %57 = vector.broadcast %cst_37 : f32 to vector<1x256xf32>
      %58 = arith.divf %57, %56 : vector<1x256xf32>
      %c0_38 = arith.constant 0 : index
      %c0_39 = arith.constant 0 : index
      %59 = vector.load %arg11[%c0_38, %c0_39] : memref<1x256xf32, #tpu.memory_space<vmem>>, vector<1x256xf32>
      tpu.vector_store %arg11[%c0_38, %c0_39], %58 {strides = array<i32>} : memref<1x256xf32, #tpu.memory_space<vmem>>, vector<1x256xf32>,
    } else {
    }
    return
  }
  func.func @transform_0(%arg0: i32, %arg1: i32) -> (i32, i32) {
    %c0_i32 = arith.constant 0 : i32
    return %arg0, %arg1 : i32, i32
  }
  func.func @transform_1(%arg0: i32, %arg1: i32) -> (i32, i32) {
    %c0_i32 = arith.constant 0 : i32
    %c0_i32_0 = arith.constant 0 : i32
    %c0_i32_1 = arith.constant 0 : i32
    return %c0_i32, %c0_i32_0 : i32, i32
  }
  func.func @transform_2(%arg0: i32, %arg1: i32) -> (i32, i32) {
    %c0_i32 = arith.constant 0 : i32
    %c0_i32_0 = arith.constant 0 : i32
    %c0_i32_1 = arith.constant 0 : i32
    return %c0_i32, %c0_i32_0 : i32, i32
  }
  func.func @transform_3(%arg0: i32, %arg1: i32) -> (i32, i32) {
    %c0_i32 = arith.constant 0 : i32
    %c0_i32_0 = arith.constant 0 : i32
    %c0_i32_1 = arith.constant 0 : i32
    return %c0_i32, %c0_i32_0 : i32, i32
  }
  func.func @transform_4(%arg0: i32, %arg1: i32) -> (i32, i32) {
    %c0_i32 = arith.constant 0 : i32
    %c0_i32_0 = arith.constant 0 : i32
    %c0_i32_1 = arith.constant 0 : i32
    return %c0_i32, %c0_i32_0 : i32, i32
  }
  func.func @transform_5(%arg0: i32, %arg1: i32) -> (i32, i32) {
    %c0_i32 = arith.constant 0 : i32
    %c0_i32_0 = arith.constant 0 : i32
    %c0_i32_1 = arith.constant 0 : i32
    return %c0_i32, %c0_i32_0 : i32, i32
  }
  func.func @transform_6(%arg0: i32, %arg1: i32) -> (i32, i32) {
    %c0_i32 = arith.constant 0 : i32
    %c0_i32_0 = arith.constant 0 : i32
    %c0_i32_1 = arith.constant 0 : i32
    return %c0_i32, %c0_i32_0 : i32, i32
  }
  func.func @transform_7(%arg0: i32, %arg1: i32) -> (i32, i32) {
    %c0_i32 = arith.constant 0 : i32
    %c0_i32_0 = arith.constant 0 : i32
    %c0_i32_1 = arith.constant 0 : i32
    return %c0_i32, %c0_i32_0 : i32, i32
  }
  func.func @transform_8(%arg0: i32, %arg1: i32) -> (i32, i32) {
    %c0_i32 = arith.constant 0 : i32
    %c0_i32_0 = arith.constant 0 : i32
    %c0_i32_1 = arith.constant 0 : i32
    return %c0_i32, %c0_i32_0 : i32, i32
  }
  func.func @transform_9(%arg0: i32, %arg1: i32) -> (i32, i32) {
    %c0_i32 = arith.constant 0 : i32
    %c0_i32_0 = arith.constant 0 : i32
    return %c0_i32, %arg0 : i32, i32
  }
}

module attributes {stable_mosaic.version = 11 : i64} {
  func.func @pneumonia_nn_kernel(%arg0: i32, %arg1: i32, %arg2: memref<256x64xf32, #tpu.memory_space<vmem>>, %arg3: memref<128x64xbf16, #tpu.memory_space<vmem>>, %arg4: memref<128x1xf32, #tpu.memory_space<vmem>>, %arg5: memref<64x128xbf16, #tpu.memory_space<vmem>>, %arg6: memref<64x1xf32, #tpu.memory_space<vmem>>, %arg7: memref<32x64xbf16, #tpu.memory_space<vmem>>, %arg8: memref<32x1xf32, #tpu.memory_space<vmem>>, %arg9: memref<32x1xf32, #tpu.memory_space<vmem>>, %arg10: memref<1x1xf32, #tpu.memory_space<vmem>>, %arg11: memref<1x256xf32, #tpu.memory_space<vmem>>, %arg12: memref<128x256xf32, #tpu.memory_space<vmem>>) attributes {dimension_semantics = [#tpu.dimension_semantics<parallel>, #tpu.dimension_semantics<arbitrary>], iteration_bounds = array<i64: 2, 1>, scalar_prefetch = 0 : i64, scratch_operands = 1 : i64, tpu.core_type = #tpu.core_type<tc>, window_params = [{transform_indices = @transform_0, window_bounds = array<i64: 256, 64>}, {pipeline_mode = #tpu.pipeline_mode<synchronous>, transform_indices = @transform_1, window_bounds = array<i64: 128, 64>}, {pipeline_mode = #tpu.pipeline_mode<synchronous>, transform_indices = @transform_2, window_bounds = array<i64: 128, 1>}, {pipeline_mode = #tpu.pipeline_mode<synchronous>, transform_indices = @transform_3, window_bounds = array<i64: 64, 128>}, {pipeline_mode = #tpu.pipeline_mode<synchronous>, transform_indices = @transform_4, window_bounds = array<i64: 64, 1>}, {pipeline_mode = #tpu.pipeline_mode<synchronous>, transform_indices = @transform_5, window_bounds = array<i64: 32, 64>}, {pipeline_mode = #tpu.pipeline_mode<synchronous>, transform_indices = @transform_6, window_bounds = array<i64: 32, 1>}, {pipeline_mode = #tpu.pipeline_mode<synchronous>, transform_indices = @transform_7, window_bounds = array<i64: 32, 1>}, {pipeline_mode = #tpu.pipeline_mode<synchronous>, transform_indices = @transform_8, window_bounds = array<i64: 1, 1>}, {transform_indices = @transform_9, window_bounds = array<i64: 1, 256>}]} {
    %c0_i32 = arith.constant 0 : i32
    %0 = arith.cmpi eq, %arg1, %c0_i32 : i32
    %1 = arith.extui %0 : i1 to i32
    %c0_i32_0 = arith.constant 0 : i32
    %2 = arith.cmpi ne, %1, %c0_i32_0 : i32
    scf.if %2 {
      %cst_10 = arith.constant 0.000000e+00 : f32
      %13 = vector.broadcast %cst_10 : f32 to vector<128x256xf32>
      %c0_11 = arith.constant 0 : index
      %c0_12 = arith.constant 0 : index
      %14 = vector.load %arg12[%c0_11, %c0_12] : memref<128x256xf32, #tpu.memory_space<vmem>>, vector<128x256xf32>
      tpu.vector_store %arg12[%c0_11, %c0_12], %13 {strides = array<i32>} : memref<128x256xf32, #tpu.memory_space<vmem>>, vector<128x256xf32>,
    } else {
    }
    %c0 = arith.constant 0 : index
    %c0_1 = arith.constant 0 : index
    %3 = vector.load %arg2[%c0, %c0_1] : memref<256x64xf32, #tpu.memory_space<vmem>>, vector<256x64xf32>
    %4 = arith.truncf %3 : vector<256x64xf32> to vector<256x64xbf16>
    %c0_2 = arith.constant 0 : index
    %c0_3 = arith.constant 0 : index
    %5 = vector.load %arg12[%c0_2, %c0_3] : memref<128x256xf32, #tpu.memory_space<vmem>>, vector<128x256xf32>
    %c0_4 = arith.constant 0 : index
    %c0_5 = arith.constant 0 : index
    %6 = vector.load %arg3[%c0_4, %c0_5] : memref<128x64xbf16, #tpu.memory_space<vmem>>, vector<128x64xbf16>
    %cst = arith.constant dense<0.000000e+00> : vector<128x256xf32>
    %7 = tpu.matmul %6, %4, %cst {dimension_numbers = #tpu.dot_dimension_numbers<[1], [1], [0], [0], [0, 0, 1, 0], [], []>} : vector<128x64xbf16>, vector<256x64xbf16>, vector<128x256xf32> -> vector<128x256xf32>
    %8 = arith.addf %5, %7 : vector<128x256xf32>
    %c0_6 = arith.constant 0 : index
    %c0_7 = arith.constant 0 : index
    %9 = vector.load %arg12[%c0_6, %c0_7] : memref<128x256xf32, #tpu.memory_space<vmem>>, vector<128x256xf32>
    tpu.vector_store %arg12[%c0_6, %c0_7], %8 {strides = array<i32>} : memref<128x256xf32, #tpu.memory_space<vmem>>, vector<128x256xf32>,
    %c0_i32_8 = arith.constant 0 : i32
    %10 = arith.cmpi eq, %arg1, %c0_i32_8 : i32
    %11 = arith.extui %10 : i1 to i32
    %c0_i32_9 = arith.constant 0 : i32
    %12 = arith.cmpi ne, %11, %c0_i32_9 : i32
    scf.if %12 {
      %c0_10 = arith.constant 0 : index
      %c0_11 = arith.constant 0 : index
      %13 = vector.load %arg12[%c0_10, %c0_11] : memref<128x256xf32, #tpu.memory_space<vmem>>, vector<128x256xf32>
      %c0_12 = arith.constant 0 : index
      %c0_13 = arith.constant 0 : index
      %14 = vector.load %arg4[%c0_12, %c0_13] : memref<128x1xf32, #tpu.memory_space<vmem>>, vector<128x1xf32>
      %15 = vector.broadcast %14 : vector<128x1xf32> to vector<128x256xf32>
      %16 = arith.addf %13, %15 : vector<128x256xf32>
      %cst_14 = arith.constant 0.000000e+00 : f32
      %17 = vector.broadcast %cst_14 : f32 to vector<128x256xf32>
      %18 = arith.cmpf ogt, %16, %17 : vector<128x256xf32>
      %cst_15 = arith.constant 1.000000e-01 : f32
      %19 = vector.broadcast %cst_15 : f32 to vector<128x256xf32>
      %20 = arith.mulf %19, %16 : vector<128x256xf32>
      %21 = arith.select %18, %16, %20 : vector<128x256xi1>, vector<128x256xf32>
      %c0_16 = arith.constant 0 : index
      %c0_17 = arith.constant 0 : index
      %22 = vector.load %arg5[%c0_16, %c0_17] : memref<64x128xbf16, #tpu.memory_space<vmem>>, vector<64x128xbf16>
      %23 = arith.truncf %21 : vector<128x256xf32> to vector<128x256xbf16>
      %cst_18 = arith.constant dense<0.000000e+00> : vector<64x256xf32>
      %24 = tpu.matmul %22, %23, %cst_18 {dimension_numbers = #tpu.dot_dimension_numbers<[1], [0], [0], [1], [0, 0, 1, 1], [], []>} : vector<64x128xbf16>, vector<128x256xbf16>, vector<64x256xf32> -> vector<64x256xf32>
      %c0_19 = arith.constant 0 : index
      %c0_20 = arith.constant 0 : index
      %25 = vector.load %arg6[%c0_19, %c0_20] : memref<64x1xf32, #tpu.memory_space<vmem>>, vector<64x1xf32>
      %26 = vector.broadcast %25 : vector<64x1xf32> to vector<64x256xf32>
      %27 = arith.addf %24, %26 : vector<64x256xf32>
      %cst_21 = arith.constant 0.000000e+00 : f32
      %28 = vector.broadcast %cst_21 : f32 to vector<64x256xf32>
      %29 = arith.cmpf ogt, %27, %28 : vector<64x256xf32>
      %cst_22 = arith.constant 1.000000e-01 : f32
      %30 = vector.broadcast %cst_22 : f32 to vector<64x256xf32>
      %31 = arith.mulf %30, %27 : vector<64x256xf32>
      %32 = arith.select %29, %27, %31 : vector<64x256xi1>, vector<64x256xf32>
      %c0_23 = arith.constant 0 : index
      %c0_24 = arith.constant 0 : index
      %33 = vector.load %arg7[%c0_23, %c0_24] : memref<32x64xbf16, #tpu.memory_space<vmem>>, vector<32x64xbf16>
      %34 = arith.truncf %32 : vector<64x256xf32> to vector<64x256xbf16>
      %cst_25 = arith.constant dense<0.000000e+00> : vector<32x256xf32>
      %35 = tpu.matmul %33, %34, %cst_25 {dimension_numbers = #tpu.dot_dimension_numbers<[1], [0], [0], [1], [0, 0, 1, 1], [], []>} : vector<32x64xbf16>, vector<64x256xbf16>, vector<32x256xf32> -> vector<32x256xf32>
      %c0_26 = arith.constant 0 : index
      %c0_27 = arith.constant 0 : index
      %36 = vector.load %arg8[%c0_26, %c0_27] : memref<32x1xf32, #tpu.memory_space<vmem>>, vector<32x1xf32>
      %37 = vector.broadcast %36 : vector<32x1xf32> to vector<32x256xf32>
      %38 = arith.addf %35, %37 : vector<32x256xf32>
      %cst_28 = arith.constant 0.000000e+00 : f32
      %39 = vector.broadcast %cst_28 : f32 to vector<32x256xf32>
      %40 = arith.cmpf ogt, %38, %39 : vector<32x256xf32>
      %cst_29 = arith.constant 1.000000e-01 : f32
      %41 = vector.broadcast %cst_29 : f32 to vector<32x256xf32>
      %42 = arith.mulf %41, %38 : vector<32x256xf32>
      %43 = arith.select %40, %38, %42 : vector<32x256xi1>, vector<32x256xf32>
      %c0_30 = arith.constant 0 : index
      %c0_31 = arith.constant 0 : index
      %44 = vector.load %arg9[%c0_30, %c0_31] : memref<32x1xf32, #tpu.memory_space<vmem>>, vector<32x1xf32>
      %45 = vector.broadcast %44 : vector<32x1xf32> to vector<32x256xf32>
      %46 = arith.mulf %43, %45 : vector<32x256xf32>
      %cst_32 = arith.constant dense<0.000000e+00> : vector<256xf32>
      %47 = vector.multi_reduction <add>, %46, %cst_32 [0] : vector<32x256xf32> to vector<256xf32>
      %48 = vector.shape_cast %47 : vector<256xf32> to vector<1x256xf32>
      %c0_33 = arith.constant 0 : index
      %c0_34 = arith.constant 0 : index
      %49 = vector.load %arg10[%c0_33, %c0_34] : memref<1x1xf32, #tpu.memory_space<vmem>>, vector<1x1xf32>
      %50 = vector.broadcast %49 : vector<1x1xf32> to vector<1x256xf32>
      %51 = arith.addf %48, %50 : vector<1x256xf32>
      %cst_35 = arith.constant 0.000000e+00 : f32
      %52 = vector.broadcast %cst_35 : f32 to vector<1x256xf32>
      %53 = arith.subf %52, %51 : vector<1x256xf32>
      %54 = math.exp %53 : vector<1x256xf32>
      %cst_36 = arith.constant 1.000000e+00 : f32
      %55 = vector.broadcast %cst_36 : f32 to vector<1x256xf32>
      %56 = arith.addf %55, %54 : vector<1x256xf32>
      %cst_37 = arith.constant 1.000000e+00 : f32
      %57 = vector.broadcast %cst_37 : f32 to vector<1x256xf32>
      %58 = arith.divf %57, %56 : vector<1x256xf32>
      %c0_38 = arith.constant 0 : index
      %c0_39 = arith.constant 0 : index
      %59 = vector.load %arg11[%c0_38, %c0_39] : memref<1x256xf32, #tpu.memory_space<vmem>>, vector<1x256xf32>
      tpu.vector_store %arg11[%c0_38, %c0_39], %58 {strides = array<i32>} : memref<1x256xf32, #tpu.memory_space<vmem>>, vector<1x256xf32>,
    } else {
    }
    return
  }
  func.func @transform_0(%arg0: i32, %arg1: i32) -> (i32, i32) {
    %c0_i32 = arith.constant 0 : i32
    return %arg0, %arg1 : i32, i32
  }
  func.func @transform_1(%arg0: i32, %arg1: i32) -> (i32, i32) {
    %c0_i32 = arith.constant 0 : i32
    %c0_i32_0 = arith.constant 0 : i32
    %c0_i32_1 = arith.constant 0 : i32
    return %c0_i32, %c0_i32_0 : i32, i32
  }
  func.func @transform_2(%arg0: i32, %arg1: i32) -> (i32, i32) {
    %c0_i32 = arith.constant 0 : i32
    %c0_i32_0 = arith.constant 0 : i32
    %c0_i32_1 = arith.constant 0 : i32
    return %c0_i32, %c0_i32_0 : i32, i32
  }
  func.func @transform_3(%arg0: i32, %arg1: i32) -> (i32, i32) {
    %c0_i32 = arith.constant 0 : i32
    %c0_i32_0 = arith.constant 0 : i32
    %c0_i32_1 = arith.constant 0 : i32
    return %c0_i32, %c0_i32_0 : i32, i32
  }
  func.func @transform_4(%arg0: i32, %arg1: i32) -> (i32, i32) {
    %c0_i32 = arith.constant 0 : i32
    %c0_i32_0 = arith.constant 0 : i32
    %c0_i32_1 = arith.constant 0 : i32
    return %c0_i32, %c0_i32_0 : i32, i32
  }
  func.func @transform_5(%arg0: i32, %arg1: i32) -> (i32, i32) {
    %c0_i32 = arith.constant 0 : i32
    %c0_i32_0 = arith.constant 0 : i32
    %c0_i32_1 = arith.constant 0 : i32
    return %c0_i32, %c0_i32_0 : i32, i32
  }
  func.func @transform_6(%arg0: i32, %arg1: i32) -> (i32, i32) {
    %c0_i32 = arith.constant 0 : i32
    %c0_i32_0 = arith.constant 0 : i32
    %c0_i32_1 = arith.constant 0 : i32
    return %c0_i32, %c0_i32_0 : i32, i32
  }
  func.func @transform_7(%arg0: i32, %arg1: i32) -> (i32, i32) {
    %c0_i32 = arith.constant 0 : i32
    %c0_i32_0 = arith.constant 0 : i32
    %c0_i32_1 = arith.constant 0 : i32
    return %c0_i32, %c0_i32_0 : i32, i32
  }
  func.func @transform_8(%arg0: i32, %arg1: i32) -> (i32, i32) {
    %c0_i32 = arith.constant 0 : i32
    %c0_i32_0 = arith.constant 0 : i32
    %c0_i32_1 = arith.constant 0 : i32
    return %c0_i32, %c0_i32_0 : i32, i32
  }
  func.func @transform_9(%arg0: i32, %arg1: i32) -> (i32, i32) {
    %c0_i32 = arith.constant 0 : i32
    %c0_i32_0 = arith.constant 0 : i32
    return %c0_i32, %arg0 : i32, i32
  }
}

</mosaic_0001>

<llo_original>
// kernel: tpu_custom_call.1
$region0: #{tpu_custom_call.1}
  #allocation0 [shape = 'u32[]', space=smem, size = 0x4, offset = 0x4, fixed_abs, tag = 'smem constant byte address 0x4 - core index']
  #allocation1 [shape = 'u32[144,128]{1,0:T(1,128)}', space=vmem, size = 0x12000, scoped, tag = 'internal scratch']
  #allocation2 [shape = 'f32[128,256]{1,0:T(8,128)}', space=vmem, size = 0x20000, scoped, tag = 'scratch operand']
  #allocation3 [shape = 'f32[1,1]{1,0:T(1,128)S(1)}', space=vmem, size = 0x200, scoped, tag = 'scoped memory for tpu_custom_call.1']
  %s0 = inlined_call_operand.vmem [shape: f32[512,64], index: 0, kind: input, shape index: {}]
  %s1 = inlined_call_operand.vmem [shape: bf16[128,64], index: 1, kind: input, shape index: {}]
  %s2 = inlined_call_operand.vmem [shape: f32[128,1], index: 2, kind: input, shape index: {}]
  %s3 = inlined_call_operand.vmem [shape: bf16[64,128], index: 3, kind: input, shape index: {}]
  %s4 = inlined_call_operand.vmem [shape: f32[64,1], index: 4, kind: input, shape index: {}]
  %s5 = inlined_call_operand.vmem [shape: bf16[32,64], index: 5, kind: input, shape index: {}]
  %s6 = inlined_call_operand.vmem [shape: f32[32,1], index: 6, kind: input, shape index: {}]
  %s7 = inlined_call_operand.vmem [shape: f32[32,1], index: 7, kind: input, shape index: {}]
  %s8 = inlined_call_operand.<no memory space> [shape: f32[1,1], index: 8, kind: input, shape index: {}]
  %s9 = inlined_call_operand.hbm [shape: f32[1,512], index: 9, kind: output, shape index: {}]
  %s10 = sld [smem:[#allocation0]]
  $region77: #{tpu_custom_call.1} parent=0
    _
  %s12 = ssub.s32 1, %s10
  %s13 = scalar_select 0, %s12, %s10
  %v14 = vstv %s8
  %15 = vst [vmem:[#allocation3] sm:$0x1] %v14
  $region1: #{tpu_custom_call.1} parent=0
    #allocation4 [shape = 'u8[2048]{0}', space=vmem, size = 0x800, scoped, tag = 'output window, operand 0']
    #allocation5 [shape = 's32[2]{0}', space=sflag, size = 0x8, scoped, tag = 'scoped memory for tpu_custom_call.1']
    %16 = vsyncpa [#allocation5], 0
    %s17 = scalar_lea.sflag [#allocation5], 1
    %18 = vsyncpa %s17, 0
    loop: start=0, step=1, limit=4
    $region2: #{tpu_custom_call.1} parent=1 // loop_pre_header
      _
    $region3: #{tpu_custom_call.1} parent=1 // loop_header
      %s20 = sphi 0, %s24
      %p21 = scmp.ge.s32.totalorder %s20, 4
      %s27 = sphi 0, %s39
      %s28 = sphi 0, %s35
      %s29 = sphi 0, %s27
      %s30 = sphi 0, %s28
      %s31 = sphi 0, %s29
      %s32 = sphi 0, %s30
      %s44 = sphi 0, %s46
      %s47 = sphi 0, %s44
      %s48 = sphi 0, %s47
      %s64 = sphi 0, %s48
      %s68 = sphi 0, %s68
      %s70 = sphi 0, %s68
      %s71 = sphi 0, %s70
      %s85 = sphi 0, %s71
      %s89 = sphi 0, %s89
      %s91 = sphi 0, %s89
      %s92 = sphi 0, %s91
      %s106 = sphi 0, %s92
      %s110 = sphi 0, %s110
      %s112 = sphi 0, %s110
      %s113 = sphi 0, %s112
      %s127 = sphi 0, %s113
      %s131 = sphi 0, %s131
      %s133 = sphi 0, %s131
      %s134 = sphi 0, %s133
      %s148 = sphi 0, %s134
      %s152 = sphi 0, %s152
      %s154 = sphi 0, %s152
      %s155 = sphi 0, %s154
      %s169 = sphi 0, %s155
      %s173 = sphi 0, %s173
      %s175 = sphi 0, %s173
      %s176 = sphi 0, %s175
      %s190 = sphi 0, %s176
      %s194 = sphi 0, %s194
      %s196 = sphi 0, %s194
      %s197 = sphi 0, %s196
      %s211 = sphi 0, %s197
      %s215 = sphi 0, %s215
      %s217 = sphi 0, %s215
      %s218 = sphi 0, %s217
      %s232 = sphi 0, %s218
      %s238 = sphi 0, %s240
      %s241 = sphi 0, %s238
      %s242 = sphi 0, %s241
      %s258 = sphi 0, %s242
    $region4: #{tpu_custom_call.1} parent=1 // loop_header_branch
      %23 = sbr.rel (%p21) target = $region8
    $region5: #{tpu_custom_call.1} parent=1 // loop_body
      %s25 = ssub.s32 %s20, 1
      %s26 = ssub.s32 %s20, 2
      %s33 = sadd.s32 1, %s28
      %p34 = scmp.ge.s32.totalorder %s33, 1
      %s35 = scalar_select %p34, 0, %s33
      %s36 = sadd.s32 1, %s27
      %s37 = scalar_select %p34, %s36, %s27
      %p38 = scmp.ge.s32.totalorder %s37, 2
      %s39 = scalar_select %p38, 0, %s37
      %s40 = ssub.s32 %s27, %s39
      %s41 = ssub.s32 %s28, %s35
      %s42 = sor.u32 %s40, %s41
      %p43 = scmp.eq.s32.totalorder %s42, 0
      %s45 = sadd.s32 %s44, 1
      %s46 = scalar_select %p43, %s44, %s45
      %p49 = pneg %p43
      %p50 = scmp.eq.s32.totalorder %s20, 1
      %p51 = por %p49, %p50
      %p52 = scmp.ne.s32.totalorder %s44, %s47
      %p53 = scmp.eq.s32.totalorder %s20, 0
      %p54 = por %p52, %p53
      %p55 = scmp.ne.s32.totalorder %s44, %s47
      %p56 = scmp.eq.s32.totalorder %s25, 1
      %p57 = por %p55, %p56
      %p58 = scmp.ne.s32.totalorder %s47, %s48
      %p59 = scmp.eq.s32.totalorder %s25, 0
      %p60 = por %p58, %p59
      %p61 = scmp.ne.s32.totalorder %s47, %s48
      %p62 = scmp.eq.s32.totalorder %s26, 1
      %p63 = por %p61, %p62
      %p65 = scmp.ne.s32.totalorder %s48, %s64
      %p66 = scmp.eq.s32.totalorder %s26, 0
      %p67 = por %p65, %p66
      %s69 = sadd.s32 %s68, 1
      %p72 = scmp.eq.s32.totalorder %s20, 1
      %p73 = scmp.ne.s32.totalorder %s68, %s70
      %p74 = scmp.eq.s32.totalorder %s20, 0
      %p75 = por %p73, %p74
      %p76 = scmp.ne.s32.totalorder %s68, %s70
      %p77 = scmp.eq.s32.totalorder %s25, 1
      %p78 = por %p76, %p77
      %p79 = scmp.ne.s32.totalorder %s70, %s71
      %p80 = scmp.eq.s32.totalorder %s25, 0
      %p81 = por %p79, %p80
      %p82 = scmp.ne.s32.totalorder %s70, %s71
      %p83 = scmp.eq.s32.totalorder %s26, 1
      %p84 = por %p82, %p83
      %p86 = scmp.ne.s32.totalorder %s71, %s85
      %p87 = scmp.eq.s32.totalorder %s26, 0
      %p88 = por %p86, %p87
      %s90 = sadd.s32 %s89, 1
      %p93 = scmp.eq.s32.totalorder %s20, 1
      %p94 = scmp.ne.s32.totalorder %s89, %s91
      %p95 = scmp.eq.s32.totalorder %s20, 0
      %p96 = por %p94, %p95
      %p97 = scmp.ne.s32.totalorder %s89, %s91
      %p98 = scmp.eq.s32.totalorder %s25, 1
      %p99 = por %p97, %p98
      %p100 = scmp.ne.s32.totalorder %s91, %s92
      %p101 = scmp.eq.s32.totalorder %s25, 0
      %p102 = por %p100, %p101
      %p103 = scmp.ne.s32.totalorder %s91, %s92
      %p104 = scmp.eq.s32.totalorder %s26, 1
      %p105 = por %p103, %p104
      %p107 = scmp.ne.s32.totalorder %s92, %s106
      %p108 = scmp.eq.s32.totalorder %s26, 0
      %p109 = por %p107, %p108
      %s111 = sadd.s32 %s110, 1
      %p114 = scmp.eq.s32.totalorder %s20, 1
      %p115 = scmp.ne.s32.totalorder %s110, %s112
      %p116 = scmp.eq.s32.totalorder %s20, 0
      %p117 = por %p115, %p116
      %p118 = scmp.ne.s32.totalorder %s110, %s112
      %p119 = scmp.eq.s32.totalorder %s25, 1
      %p120 = por %p118, %p119
      %p121 = scmp.ne.s32.totalorder %s112, %s113
      %p122 = scmp.eq.s32.totalorder %s25, 0
      %p123 = por %p121, %p122
      %p124 = scmp.ne.s32.totalorder %s112, %s113
      %p125 = scmp.eq.s32.totalorder %s26, 1
      %p126 = por %p124, %p125
      %p128 = scmp.ne.s32.totalorder %s113, %s127
      %p129 = scmp.eq.s32.totalorder %s26, 0
      %p130 = por %p128, %p129
      %s132 = sadd.s32 %s131, 1
      %p135 = scmp.eq.s32.totalorder %s20, 1
      %p136 = scmp.ne.s32.totalorder %s131, %s133
      %p137 = scmp.eq.s32.totalorder %s20, 0
      %p138 = por %p136, %p137
      %p139 = scmp.ne.s32.totalorder %s131, %s133
      %p140 = scmp.eq.s32.totalorder %s25, 1
      %p141 = por %p139, %p140
      %p142 = scmp.ne.s32.totalorder %s133, %s134
      %p143 = scmp.eq.s32.totalorder %s25, 0
      %p144 = por %p142, %p143
      %p145 = scmp.ne.s32.totalorder %s133, %s134
      %p146 = scmp.eq.s32.totalorder %s26, 1
      %p147 = por %p145, %p146
      %p149 = scmp.ne.s32.totalorder %s134, %s148
      %p150 = scmp.eq.s32.totalorder %s26, 0
      %p151 = por %p149, %p150
      %s153 = sadd.s32 %s152, 1
      %p156 = scmp.eq.s32.totalorder %s20, 1
      %p157 = scmp.ne.s32.totalorder %s152, %s154
      %p158 = scmp.eq.s32.totalorder %s20, 0
      %p159 = por %p157, %p158
      %p160 = scmp.ne.s32.totalorder %s152, %s154
      %p161 = scmp.eq.s32.totalorder %s25, 1
      %p162 = por %p160, %p161
      %p163 = scmp.ne.s32.totalorder %s154, %s155
      %p164 = scmp.eq.s32.totalorder %s25, 0
      %p165 = por %p163, %p164
      %p166 = scmp.ne.s32.totalorder %s154, %s155
      %p167 = scmp.eq.s32.totalorder %s26, 1
      %p168 = por %p166, %p167
      %p170 = scmp.ne.s32.totalorder %s155, %s169
      %p171 = scmp.eq.s32.totalorder %s26, 0
      %p172 = por %p170, %p171
      %s174 = sadd.s32 %s173, 1
      %p177 = scmp.eq.s32.totalorder %s20, 1
      %p178 = scmp.ne.s32.totalorder %s173, %s175
      %p179 = scmp.eq.s32.totalorder %s20, 0
      %p180 = por %p178, %p179
      %p181 = scmp.ne.s32.totalorder %s173, %s175
      %p182 = scmp.eq.s32.totalorder %s25, 1
      %p183 = por %p181, %p182
      %p184 = scmp.ne.s32.totalorder %s175, %s176
      %p185 = scmp.eq.s32.totalorder %s25, 0
      %p186 = por %p184, %p185
      %p187 = scmp.ne.s32.totalorder %s175, %s176
      %p188 = scmp.eq.s32.totalorder %s26, 1
      %p189 = por %p187, %p188
      %p191 = scmp.ne.s32.totalorder %s176, %s190
      %p192 = scmp.eq.s32.totalorder %s26, 0
      %p193 = por %p191, %p192
      %s195 = sadd.s32 %s194, 1
      %p198 = scmp.eq.s32.totalorder %s20, 1
      %p199 = scmp.ne.s32.totalorder %s194, %s196
      %p200 = scmp.eq.s32.totalorder %s20, 0
      %p201 = por %p199, %p200
      %p202 = scmp.ne.s32.totalorder %s194, %s196
      %p203 = scmp.eq.s32.totalorder %s25, 1
      %p204 = por %p202, %p203
      %p205 = scmp.ne.s32.totalorder %s196, %s197
      %p206 = scmp.eq.s32.totalorder %s25, 0
      %p207 = por %p205, %p206
      %p208 = scmp.ne.s32.totalorder %s196, %s197
      %p209 = scmp.eq.s32.totalorder %s26, 1
      %p210 = por %p208, %p209
      %p212 = scmp.ne.s32.totalorder %s197, %s211
      %p213 = scmp.eq.s32.totalorder %s26, 0
      %p214 = por %p212, %p213
      %s216 = sadd.s32 %s215, 1
      %p219 = scmp.eq.s32.totalorder %s20, 1
      %p220 = scmp.ne.s32.totalorder %s215, %s217
      %p221 = scmp.eq.s32.totalorder %s20, 0
      %p222 = por %p220, %p221
      %p223 = scmp.ne.s32.totalorder %s215, %s217
      %p224 = scmp.eq.s32.totalorder %s25, 1
      %p225 = por %p223, %p224
      %p226 = scmp.ne.s32.totalorder %s217, %s218
      %p227 = scmp.eq.s32.totalorder %s25, 0
      %p228 = por %p226, %p227
      %p229 = scmp.ne.s32.totalorder %s217, %s218
      %p230 = scmp.eq.s32.totalorder %s26, 1
      %p231 = por %p229, %p230
      %p233 = scmp.ne.s32.totalorder %s218, %s232
      %p234 = scmp.eq.s32.totalorder %s26, 0
      %p235 = por %p233, %p234
      %s236 = ssub.s32 %s27, %s39
      %p237 = scmp.eq.s32.totalorder %s236, 0
      %s239 = sadd.s32 %s238, 1
      %s240 = scalar_select %p237, %s238, %s239
      %p243 = pneg %p237
      %p244 = scmp.eq.s32.totalorder %s20, 1
      %p245 = por %p243, %p244
      %p246 = scmp.ne.s32.totalorder %s238, %s241
      %p247 = scmp.eq.s32.totalorder %s20, 0
      %p248 = por %p246, %p247
      %p249 = scmp.ne.s32.totalorder %s238, %s241
      %p250 = scmp.eq.s32.totalorder %s25, 1
      %p251 = por %p249, %p250
      %p252 = scmp.ne.s32.totalorder %s241, %s242
      %p253 = scmp.eq.s32.totalorder %s25, 0
      %p254 = por %p252, %p253
      %p255 = scmp.ne.s32.totalorder %s241, %s242
      %p256 = scmp.eq.s32.totalorder %s26, 1
      %p257 = por %p255, %p256
      %p259 = scmp.ne.s32.totalorder %s242, %s258
      %p260 = scmp.eq.s32.totalorder %s26, 0
      %p261 = por %p259, %p260
      %p262 = scmp.le.s32.totalorder 1, %s20
      %p263 = scmp.lt.s32.totalorder %s20, 3
      %p264 = pnand %p262, %p263
      %p265 = pneg %p264
      // Predicated region
      $region9: #{tpu_custom_call.1} parent=5 // pred_check
        _
      $region10: #{tpu_custom_call.1} parent=5 // pred_check_branch
        %267 = sbr.rel (%p264) target = $region12
      $region11: #{tpu_custom_call.1} parent=5 // pred_region
        %s268 = ssub.s32 %s20, 1
        // Predicated region
        $region13: #{tpu_custom_call.1} parent=11 // pred_check
          %p269 = pneg %p81
        $region14: #{tpu_custom_call.1} parent=11 // pred_check_branch
          %271 = sbr.rel (%p269) target = $region16
        $region15: #{tpu_custom_call.1} parent=11 // pred_region
          _
        $region16: #{tpu_custom_call.1} parent=11 // pred_fallthru
          _
        // Predicated region
        $region17: #{tpu_custom_call.1} parent=11 // pred_check
          %p272 = pneg %p102
        $region18: #{tpu_custom_call.1} parent=11 // pred_check_branch
          %274 = sbr.rel (%p272) target = $region20
        $region19: #{tpu_custom_call.1} parent=11 // pred_region
          _
        $region20: #{tpu_custom_call.1} parent=11 // pred_fallthru
          _
        // Predicated region
        $region21: #{tpu_custom_call.1} parent=11 // pred_check
          %p275 = pneg %p123
        $region22: #{tpu_custom_call.1} parent=11 // pred_check_branch
          %277 = sbr.rel (%p275) target = $region24
        $region23: #{tpu_custom_call.1} parent=11 // pred_region
          _
        $region24: #{tpu_custom_call.1} parent=11 // pred_fallthru
          _
        // Predicated region
        $region25: #{tpu_custom_call.1} parent=11 // pred_check
          %p278 = pneg %p144
        $region26: #{tpu_custom_call.1} parent=11 // pred_check_branch
          %280 = sbr.rel (%p278) target = $region28
        $region27: #{tpu_custom_call.1} parent=11 // pred_region
          _
        $region28: #{tpu_custom_call.1} parent=11 // pred_fallthru
          _
        // Predicated region
        $region29: #{tpu_custom_call.1} parent=11 // pred_check
          %p281 = pneg %p165
        $region30: #{tpu_custom_call.1} parent=11 // pred_check_branch
          %283 = sbr.rel (%p281) target = $region32
        $region31: #{tpu_custom_call.1} parent=11 // pred_region
          _
        $region32: #{tpu_custom_call.1} parent=11 // pred_fallthru
          _
        // Predicated region
        $region33: #{tpu_custom_call.1} parent=11 // pred_check
          %p284 = pneg %p186
        $region34: #{tpu_custom_call.1} parent=11 // pred_check_branch
          %286 = sbr.rel (%p284) target = $region36
        $region35: #{tpu_custom_call.1} parent=11 // pred_region
          _
        $region36: #{tpu_custom_call.1} parent=11 // pred_fallthru
          _
        // Predicated region
        $region37: #{tpu_custom_call.1} parent=11 // pred_check
          %p287 = pneg %p207
        $region38: #{tpu_custom_call.1} parent=11 // pred_check_branch
          %289 = sbr.rel (%p287) target = $region40
        $region39: #{tpu_custom_call.1} parent=11 // pred_region
          _
        $region40: #{tpu_custom_call.1} parent=11 // pred_fallthru
          _
        // Predicated region
        $region41: #{tpu_custom_call.1} parent=11 // pred_check
          %p290 = pneg %p228
        $region42: #{tpu_custom_call.1} parent=11 // pred_check_branch
          %292 = sbr.rel (%p290) target = $region44
        $region43: #{tpu_custom_call.1} parent=11 // pred_region
          _
        $region44: #{tpu_custom_call.1} parent=11 // pred_fallthru
          _
      $region12: #{tpu_custom_call.1} parent=5 // pred_fallthru
        _
      %p293 = scmp.lt.s32.totalorder %s20, 2
      // Predicated region
      $region45: #{tpu_custom_call.1} parent=5 // pred_check
        %p294 = pneg %p293
      $region46: #{tpu_custom_call.1} parent=5 // pred_check_branch
        %296 = sbr.rel (%p294) target = $region48
      $region47: #{tpu_custom_call.1} parent=5 // pred_region
        // Predicated region
        $region49: #{tpu_custom_call.1} parent=47 // pred_check
          %p297 = pneg %p54
        $region50: #{tpu_custom_call.1} parent=47 // pred_check_branch
          %299 = sbr.rel (%p297) target = $region52
        $region51: #{tpu_custom_call.1} parent=47 // pred_region
          %s300 = smul.u32 32, %s27
          %p301 = scmp.lt.s32.totalorder %s300, 63
          %s302 = scalar_select %p301, %s300, 63
          %p303 = scmp.lt.s32.totalorder %s28, 0
          %s304 = scalar_select %p303, %s28, 0
          %s305 = sadd.s32 %s304, %s302
          %s306 = smul.addr %s305, 8
          %s307 = scalar_lea.vmem %s0, %s306
          %s308 = smul.u32 32, %s27
        $region52: #{tpu_custom_call.1} parent=47 // pred_fallthru
          _
      $region48: #{tpu_custom_call.1} parent=5 // pred_fallthru
        _
      %p309 = scmp.le.s32.totalorder 1, %s20
      %p310 = scmp.lt.s32.totalorder %s20, 3
      %p311 = pnand %p309, %p310
      %p312 = pneg %p311
      // Predicated region
      $region53: #{tpu_custom_call.1} parent=5 // pred_check
        _
      $region54: #{tpu_custom_call.1} parent=5 // pred_check_branch
        %314 = sbr.rel (%p311) target = $region56
      $region55: #{tpu_custom_call.1} parent=5 // pred_region
        %s315 = ssub.s32 %s20, 1
        %s316 = smul.u32 32, %s29
        %p317 = scmp.lt.s32.totalorder %s316, 63
        %s318 = scalar_select %p317, %s316, 63
        %p319 = scmp.lt.s32.totalorder %s30, 0
        %s320 = scalar_select %p319, %s30, 0
        %s321 = sadd.s32 %s320, %s318
        %s322 = smul.addr %s321, 8
        %s323 = scalar_lea.vmem %s0, %s322
        %p324 = pneg %p60
        %p325 = pneg %p57
        %p326 = pneg %p81
        %p327 = pneg %p78
        %p328 = pneg %p102
        %p329 = pneg %p99
        %p330 = pneg %p123
        %p331 = pneg %p120
        %p332 = pneg %p144
        %p333 = pneg %p141
        %p334 = pneg %p165
        %p335 = pneg %p162
        %p336 = pneg %p186
        %p337 = pneg %p183
        %p338 = pneg %p207
        %p339 = pneg %p204
        %p340 = pneg %p228
        %p341 = pneg %p225
        %p342 = pneg %p254
        %p343 = pneg %p251
        %s344 = sand.u32 %s241, 1
        %s345 = scalar_lea.sflag [#allocation5], %s344
        %s346 = sand.u32 %s241, 1
        %s347 = smul.addr %s346, 2
        %s348 = scalar_lea.vmem [#allocation4], %s347
        %s349 = smul.u32 32, %s29
        %p350 = scmp.lt.s32.totalorder %s349, 63
        %s351 = scalar_select %p350, %s349, 63
        %p352 = scmp.lt.s32.totalorder %s30, 0
        %s353 = scalar_select %p352, %s30, 0
        %s354 = sadd.s32 %s353, %s351
        %s355 = smul.addr %s354, 8
        %s356 = scalar_lea.vmem %s0, %s355
        %s357 = smul.u32 32, %s29
        %s358 = smul.u32 2, %s29
        %p360 = scmp.eq.s32.totalorder %s30, 0
        // Predicated region
        $region57: #{tpu_custom_call.1} parent=55 // pred_check
          %p361 = pneg %p360
        $region58: #{tpu_custom_call.1} parent=55 // pred_check_branch
          %363 = sbr.rel (%p361) target = $region60
        $region59: #{tpu_custom_call.1} parent=55 // pred_region
          %364 = vst [vmem:[#allocation2] sm:$0xff] 0.0
          %365 = vst [vmem:[#allocation2 + $0x8] sm:$0xff] 0.0
          %366 = vst [vmem:[#allocation2 + $0x10] sm:$0xff] 0.0
          %367 = vst [vmem:[#allocation2 + $0x18] sm:$0xff] 0.0
          %368 = vst [vmem:[#allocation2 + $0x20] sm:$0xff] 0.0
          %369 = vst [vmem:[#allocation2 + $0x28] sm:$0xff] 0.0
          %370 = vst [vmem:[#allocation2 + $0x30] sm:$0xff] 0.0
          %371 = vst [vmem:[#allocation2 + $0x38] sm:$0xff] 0.0
          %372 = vst [vmem:[#allocation2 + $0x40] sm:$0xff] 0.0
          %373 = vst [vmem:[#allocation2 + $0x48] sm:$0xff] 0.0
          %374 = vst [vmem:[#allocation2 + $0x50] sm:$0xff] 0.0
          %375 = vst [vmem:[#allocation2 + $0x58] sm:$0xff] 0.0
          %376 = vst [vmem:[#allocation2 + $0x60] sm:$0xff] 0.0
          %377 = vst [vmem:[#allocation2 + $0x68] sm:$0xff] 0.0
          %378 = vst [vmem:[#allocation2 + $0x70] sm:$0xff] 0.0
          %379 = vst [vmem:[#allocation2 + $0x78] sm:$0xff] 0.0
          %380 = vst [vmem:[#allocation2 + $0x80] sm:$0xff] 0.0
          %381 = vst [vmem:[#allocation2 + $0x88] sm:$0xff] 0.0
          %382 = vst [vmem:[#allocation2 + $0x90] sm:$0xff] 0.0
          %383 = vst [vmem:[#allocation2 + $0x98] sm:$0xff] 0.0
          %384 = vst [vmem:[#allocation2 + $0xa0] sm:$0xff] 0.0
          %385 = vst [vmem:[#allocation2 + $0xa8] sm:$0xff] 0.0
          %386 = vst [vmem:[#allocation2 + $0xb0] sm:$0xff] 0.0
          %387 = vst [vmem:[#allocation2 + $0xb8] sm:$0xff] 0.0
          %388 = vst [vmem:[#allocation2 + $0xc0] sm:$0xff] 0.0
          %389 = vst [vmem:[#allocation2 + $0xc8] sm:$0xff] 0.0
          %390 = vst [vmem:[#allocation2 + $0xd0] sm:$0xff] 0.0
          %391 = vst [vmem:[#allocation2 + $0xd8] sm:$0xff] 0.0
          %392 = vst [vmem:[#allocation2 + $0xe0] sm:$0xff] 0.0
          %393 = vst [vmem:[#allocation2 + $0xe8] sm:$0xff] 0.0
          %394 = vst [vmem:[#allocation2 + $0xf0] sm:$0xff] 0.0
          %395 = vst [vmem:[#allocation2 + $0xf8] sm:$0xff] 0.0
        $region60: #{tpu_custom_call.1} parent=55 // pred_fallthru
          _
        %v396 = vld [vmem:[%s356] sm:$0xff]
        %v397 = vld [vmem:[%s356 + $0x8] sm:$0xff]
        %v398 = vld [vmem:[%s356 + $0x10] sm:$0xff]
        %v399 = vld [vmem:[%s356 + $0x18] sm:$0xff]
        %v400 = vld [vmem:[%s356 + $0x20] sm:$0xff]
        %v401 = vld [vmem:[%s356 + $0x28] sm:$0xff]
        %v402 = vld [vmem:[%s356 + $0x30] sm:$0xff]
        %v403 = vld [vmem:[%s356 + $0x38] sm:$0xff]
        %v404 = vld [vmem:[%s356 + $0x40] sm:$0xff]
        %v405 = vld [vmem:[%s356 + $0x48] sm:$0xff]
        %v406 = vld [vmem:[%s356 + $0x50] sm:$0xff]
        %v407 = vld [vmem:[%s356 + $0x58] sm:$0xff]
        %v408 = vld [vmem:[%s356 + $0x60] sm:$0xff]
        %v409 = vld [vmem:[%s356 + $0x68] sm:$0xff]
        %v410 = vld [vmem:[%s356 + $0x70] sm:$0xff]
        %v411 = vld [vmem:[%s356 + $0x78] sm:$0xff]
        %v412 = vld [vmem:[%s356 + $0x80] sm:$0xff]
        %v413 = vld [vmem:[%s356 + $0x88] sm:$0xff]
        %v414 = vld [vmem:[%s356 + $0x90] sm:$0xff]
        %v415 = vld [vmem:[%s356 + $0x98] sm:$0xff]
        %v416 = vld [vmem:[%s356 + $0xa0] sm:$0xff]
        %v417 = vld [vmem:[%s356 + $0xa8] sm:$0xff]
        %v418 = vld [vmem:[%s356 + $0xb0] sm:$0xff]
        %v419 = vld [vmem:[%s356 + $0xb8] sm:$0xff]
        %v420 = vld [vmem:[%s356 + $0xc0] sm:$0xff]
        %v421 = vld [vmem:[%s356 + $0xc8] sm:$0xff]
        %v422 = vld [vmem:[%s356 + $0xd0] sm:$0xff]
        %v423 = vld [vmem:[%s356 + $0xd8] sm:$0xff]
        %v424 = vld [vmem:[%s356 + $0xe0] sm:$0xff]
        %v425 = vld [vmem:[%s356 + $0xe8] sm:$0xff]
        %v426 = vld [vmem:[%s356 + $0xf0] sm:$0xff]
        %v427 = vld [vmem:[%s356 + $0xf8] sm:$0xff]
        %v428 = vpack.c.bf16 %v397, %v396
        %v429 = vpack.c.bf16 %v399, %v398
        %v430 = vpack.c.bf16 %v401, %v400
        %v431 = vpack.c.bf16 %v403, %v402
        %v432 = vpack.c.bf16 %v405, %v404
        %v433 = vpack.c.bf16 %v407, %v406
        %v434 = vpack.c.bf16 %v409, %v408
        %v435 = vpack.c.bf16 %v411, %v410
        %v436 = vpack.c.bf16 %v413, %v412
        %v437 = vpack.c.bf16 %v415, %v414
        %v438 = vpack.c.bf16 %v417, %v416
        %v439 = vpack.c.bf16 %v419, %v418
        %v440 = vpack.c.bf16 %v421, %v420
        %v441 = vpack.c.bf16 %v423, %v422
        %v442 = vpack.c.bf16 %v425, %v424
        %v443 = vpack.c.bf16 %v427, %v426
        %v444 = vld [vmem:[#allocation2] sm:$0xff]
        %v445 = vld [vmem:[#allocation2 + $0x8] sm:$0xff]
        %v446 = vld [vmem:[#allocation2 + $0x10] sm:$0xff]
        %v447 = vld [vmem:[#allocation2 + $0x18] sm:$0xff]
        %v448 = vld [vmem:[#allocation2 + $0x20] sm:$0xff]
        %v449 = vld [vmem:[#allocation2 + $0x28] sm:$0xff]
        %v450 = vld [vmem:[#allocation2 + $0x30] sm:$0xff]
        %v451 = vld [vmem:[#allocation2 + $0x38] sm:$0xff]
        %v452 = vld [vmem:[#allocation2 + $0x40] sm:$0xff]
        %v453 = vld [vmem:[#allocation2 + $0x48] sm:$0xff]
        %v454 = vld [vmem:[#allocation2 + $0x50] sm:$0xff]
        %v455 = vld [vmem:[#allocation2 + $0x58] sm:$0xff]
        %v456 = vld [vmem:[#allocation2 + $0x60] sm:$0xff]
        %v457 = vld [vmem:[#allocation2 + $0x68] sm:$0xff]
        %v458 = vld [vmem:[#allocation2 + $0x70] sm:$0xff]
        %v459 = vld [vmem:[#allocation2 + $0x78] sm:$0xff]
        %v460 = vld [vmem:[#allocation2 + $0x80] sm:$0xff]
        %v461 = vld [vmem:[#allocation2 + $0x88] sm:$0xff]
        %v462 = vld [vmem:[#allocation2 + $0x90] sm:$0xff]
        %v463 = vld [vmem:[#allocation2 + $0x98] sm:$0xff]
        %v464 = vld [vmem:[#allocation2 + $0xa0] sm:$0xff]
        %v465 = vld [vmem:[#allocation2 + $0xa8] sm:$0xff]
        %v466 = vld [vmem:[#allocation2 + $0xb0] sm:$0xff]
        %v467 = vld [vmem:[#allocation2 + $0xb8] sm:$0xff]
        %v468 = vld [vmem:[#allocation2 + $0xc0] sm:$0xff]
        %v469 = vld [vmem:[#allocation2 + $0xc8] sm:$0xff]
        %v470 = vld [vmem:[#allocation2 + $0xd0] sm:$0xff]
        %v471 = vld [vmem:[#allocation2 + $0xd8] sm:$0xff]
        %v472 = vld [vmem:[#allocation2 + $0xe0] sm:$0xff]
        %v473 = vld [vmem:[#allocation2 + $0xe8] sm:$0xff]
        %v474 = vld [vmem:[#allocation2 + $0xf0] sm:$0xff]
        %v475 = vld [vmem:[#allocation2 + $0xf8] sm:$0xff]
        %v476 = vld [vmem:[%s1] sm:$0xf]
        %v477 = vld [vmem:[%s1 + $0x4] sm:$0xf]
        %v478 = vld [vmem:[%s1 + $0x8] sm:$0xf]
        %v479 = vld [vmem:[%s1 + $0xc] sm:$0xf]
        %v480 = vld [vmem:[%s1 + $0x10] sm:$0xf]
        %v481 = vld [vmem:[%s1 + $0x14] sm:$0xf]
        %v482 = vld [vmem:[%s1 + $0x18] sm:$0xf]
        %v483 = vld [vmem:[%s1 + $0x1c] sm:$0xf]
        %v484 = vld [vmem:[%s1 + $0x20] sm:$0xf]
        %v485 = vld [vmem:[%s1 + $0x24] sm:$0xf]
        %v486 = vld [vmem:[%s1 + $0x28] sm:$0xf]
        %v487 = vld [vmem:[%s1 + $0x2c] sm:$0xf]
        %v488 = vld [vmem:[%s1 + $0x30] sm:$0xf]
        %v489 = vld [vmem:[%s1 + $0x34] sm:$0xf]
        %v490 = vld [vmem:[%s1 + $0x38] sm:$0xf]
        %v491 = vld [vmem:[%s1 + $0x3c] sm:$0xf]
        %v508 = vunpack.c.l.b16 %v476
        %v509 = vunpack.c.l.b16 %v477
        %v510 = vunpack.c.l.b16 %v478
        %v511 = vunpack.c.l.b16 %v479
        %v512 = vunpack.c.l.b16 %v480
        %v513 = vunpack.c.l.b16 %v481
        %v514 = vunpack.c.l.b16 %v482
        %v515 = vunpack.c.l.b16 %v483
        %v516 = vunpack.c.l.b16 %v484
        %v517 = vunpack.c.l.b16 %v485
        %v518 = vunpack.c.l.b16 %v486
        %v519 = vunpack.c.l.b16 %v487
        %v520 = vunpack.c.l.b16 %v488
        %v521 = vunpack.c.l.b16 %v489
        %v522 = vunpack.c.l.b16 %v490
        %v523 = vunpack.c.l.b16 %v491
        %v524 = vpack.c.b16 %v509, %v508
        %v525 = vpack.c.b16 %v511, %v510
        %v526 = vpack.c.b16 %v513, %v512
        %v527 = vpack.c.b16 %v515, %v514
        %v528 = vpack.c.b16 %v517, %v516
        %v529 = vpack.c.b16 %v519, %v518
        %v530 = vpack.c.b16 %v521, %v520
        %v531 = vpack.c.b16 %v523, %v522
        %vm532 = vcmask 523264
        %v534 = vsel %vm532, %v524, 0
        %v537 = vsel %vm532, %v525, 0
        %v540 = vsel %vm532, %v526, 0
        %v543 = vsel %vm532, %v527, 0
        %v546 = vsel %vm532, %v528, 0
        %v549 = vsel %vm532, %v529, 0
        %v552 = vsel %vm532, %v530, 0
        %v555 = vsel %vm532, %v531, 0
        %v558 = vsel %vm532, %v428, 0
        %v561 = vsel %vm532, %v429, 0
        %v564 = vsel %vm532, %v430, 0
        %v567 = vsel %vm532, %v431, 0
        %v570 = vsel %vm532, %v432, 0
        %v573 = vsel %vm532, %v433, 0
        %v576 = vsel %vm532, %v434, 0
        %v579 = vsel %vm532, %v435, 0
        %v582 = vsel %vm532, %v436, 0
        %v585 = vsel %vm532, %v437, 0
        %v588 = vsel %vm532, %v438, 0
        %v591 = vsel %vm532, %v439, 0
        %v594 = vsel %vm532, %v440, 0
        %v597 = vsel %vm532, %v441, 0
        %v600 = vsel %vm532, %v442, 0
        %v603 = vsel %vm532, %v443, 0
        %605 = vmatprep.subr.bf16.mxu0 0
        %606 = vmatpush1.bf16.xpose.msra.mxu0 %v558
        %607 = vmatprep.subr.bf16.mxu0 0
        %608 = vmatpush1.bf16.xpose.msra.mxu0 %v561
        %609 = vmatprep.subr.bf16.mxu0 0
        %610 = vmatpush1.bf16.xpose.msra.mxu0 %v564
        %611 = vmatprep.subr.bf16.mxu0 0
        %612 = vmatpush1.bf16.xpose.msra.mxu0 %v567
        %613 = vmatprep.subr.bf16.mxu0 0
        %614 = vmatpush1.bf16.xpose.msra.mxu0 %v570
        %615 = vmatprep.subr.bf16.mxu0 0
        %616 = vmatpush1.bf16.xpose.msra.mxu0 %v573
        %617 = vmatprep.subr.bf16.mxu0 0
        %618 = vmatpush1.bf16.xpose.msra.mxu0 %v576
        %619 = vmatprep.subr.bf16.mxu0 0
        %620 = vmatpush1.bf16.xpose.msra.mxu0 %v579
        %621 = vmatprep.subr.bf16.mxu0 0
        %622 = vmatpush1.bf16.xpose.msra.mxu0 %v582
        %623 = vmatprep.subr.bf16.mxu0 0
        %624 = vmatpush1.bf16.xpose.msra.mxu0 %v585
        %625 = vmatprep.subr.bf16.mxu0 0
        %626 = vmatpush1.bf16.xpose.msra.mxu0 %v588
        %627 = vmatprep.subr.bf16.mxu0 0
        %628 = vmatpush1.bf16.xpose.msra.mxu0 %v591
        %629 = vmatprep.subr.bf16.mxu0 0
        %630 = vmatpush1.bf16.xpose.msra.mxu0 %v594
        %631 = vmatprep.subr.bf16.mxu0 0
        %632 = vmatpush1.bf16.xpose.msra.mxu0 %v597
        %633 = vmatprep.subr.bf16.mxu0 0
        %634 = vmatpush1.bf16.xpose.msra.mxu0 %v600
        %635 = vmatprep.subr.bf16.mxu0 0
        %636 = vmatpush1.bf16.xpose.msra.mxu0 %v603
        %637 = vmatprep.mubr.bf16.mxu0 0
        %638 = vmatmul.mubr.bf16.gmra.mrb[0].mxu0 %v534
        %v639 = vpop.f32.mrb[0].mxu0
        %v640 = vadd.f32 0.0, %v639
        %v641 = vpop.f32.mrb[0].mxu0
        %v642 = vadd.f32 0.0, %v641
        %v643 = vpop.f32.mrb[0].mxu0
        %v644 = vadd.f32 0.0, %v643
        %v645 = vpop.f32.mrb[0].mxu0
        %v646 = vadd.f32 0.0, %v645
        %647 = vmatprep.mubr.bf16.mxu0 0
        %648 = vmatmul.mubr.bf16.gmra.mrb[0].mxu0 %v537
        %v649 = vpop.f32.mrb[0].mxu0
        %v650 = vadd.f32 0.0, %v649
        %v651 = vpop.f32.mrb[0].mxu0
        %v652 = vadd.f32 0.0, %v651
        %v653 = vpop.f32.mrb[0].mxu0
        %v654 = vadd.f32 0.0, %v653
        %v655 = vpop.f32.mrb[0].mxu0
        %v656 = vadd.f32 0.0, %v655
        %657 = vmatprep.mubr.bf16.mxu0 0
        %658 = vmatmul.mubr.bf16.gmra.mrb[0].mxu0 %v540
        %v659 = vpop.f32.mrb[0].mxu0
        %v660 = vadd.f32 0.0, %v659
        %v661 = vpop.f32.mrb[0].mxu0
        %v662 = vadd.f32 0.0, %v661
        %v663 = vpop.f32.mrb[0].mxu0
        %v664 = vadd.f32 0.0, %v663
        %v665 = vpop.f32.mrb[0].mxu0
        %v666 = vadd.f32 0.0, %v665
        %667 = vmatprep.mubr.bf16.mxu0 0
        %668 = vmatmul.mubr.bf16.gmra.mrb[0].mxu0 %v543
        %v669 = vpop.f32.mrb[0].mxu0
        %v670 = vadd.f32 0.0, %v669
        %v671 = vpop.f32.mrb[0].mxu0
        %v672 = vadd.f32 0.0, %v671
        %v673 = vpop.f32.mrb[0].mxu0
        %v674 = vadd.f32 0.0, %v673
        %v675 = vpop.f32.mrb[0].mxu0
        %v676 = vadd.f32 0.0, %v675
        %677 = vmatprep.mubr.bf16.mxu0 0
        %678 = vmatmul.mubr.bf16.gmra.mrb[0].mxu0 %v546
        %v679 = vpop.f32.mrb[0].mxu0
        %v680 = vadd.f32 0.0, %v679
        %v681 = vpop.f32.mrb[0].mxu0
        %v682 = vadd.f32 0.0, %v681
        %v683 = vpop.f32.mrb[0].mxu0
        %v684 = vadd.f32 0.0, %v683
        %v685 = vpop.f32.mrb[0].mxu0
        %v686 = vadd.f32 0.0, %v685
        %687 = vmatprep.mubr.bf16.mxu0 0
        %688 = vmatmul.mubr.bf16.gmra.mrb[0].mxu0 %v549
        %v689 = vpop.f32.mrb[0].mxu0
        %v690 = vadd.f32 0.0, %v689
        %v691 = vpop.f32.mrb[0].mxu0
        %v692 = vadd.f32 0.0, %v691
        %v693 = vpop.f32.mrb[0].mxu0
        %v694 = vadd.f32 0.0, %v693
        %v695 = vpop.f32.mrb[0].mxu0
        %v696 = vadd.f32 0.0, %v695
        %697 = vmatprep.mubr.bf16.mxu0 0
        %698 = vmatmul.mubr.bf16.gmra.mrb[0].mxu0 %v552
        %v699 = vpop.f32.mrb[0].mxu0
        %v700 = vadd.f32 0.0, %v699
        %v701 = vpop.f32.mrb[0].mxu0
        %v702 = vadd.f32 0.0, %v701
        %v703 = vpop.f32.mrb[0].mxu0
        %v704 = vadd.f32 0.0, %v703
        %v705 = vpop.f32.mrb[0].mxu0
        %v706 = vadd.f32 0.0, %v705
        %707 = vmatprep.mubr.bf16.mxu0 0
        %708 = vmatmul.mubr.bf16.gmra.mrb[0].mxu0 %v555
        %v709 = vpop.f32.mrb[0].mxu0
        %v710 = vadd.f32 0.0, %v709
        %v711 = vpop.f32.mrb[0].mxu0
        %v712 = vadd.f32 0.0, %v711
        %v713 = vpop.f32.mrb[0].mxu0
        %v714 = vadd.f32 0.0, %v713
        %v715 = vpop.f32.mrb[0].mxu0
        %v716 = vadd.f32 0.0, %v715
        %717 = vdwg.mxu0
        %v718 = vadd.f32 %v444, %v640
        %v719 = vadd.f32 %v445, %v642
        %v720 = vadd.f32 %v446, %v644
        %v721 = vadd.f32 %v447, %v646
        %v722 = vadd.f32 %v448, %v650
        %v723 = vadd.f32 %v449, %v652
        %v724 = vadd.f32 %v450, %v654
        %v725 = vadd.f32 %v451, %v656
        %v726 = vadd.f32 %v452, %v660
        %v727 = vadd.f32 %v453, %v662
        %v728 = vadd.f32 %v454, %v664
        %v729 = vadd.f32 %v455, %v666
        %v730 = vadd.f32 %v456, %v670
        %v731 = vadd.f32 %v457, %v672
        %v732 = vadd.f32 %v458, %v674
        %v733 = vadd.f32 %v459, %v676
        %v734 = vadd.f32 %v460, %v680
        %v735 = vadd.f32 %v461, %v682
        %v736 = vadd.f32 %v462, %v684
        %v737 = vadd.f32 %v463, %v686
        %v738 = vadd.f32 %v464, %v690
        %v739 = vadd.f32 %v465, %v692
        %v740 = vadd.f32 %v466, %v694
        %v741 = vadd.f32 %v467, %v696
        %v742 = vadd.f32 %v468, %v700
        %v743 = vadd.f32 %v469, %v702
        %v744 = vadd.f32 %v470, %v704
        %v745 = vadd.f32 %v471, %v706
        %v746 = vadd.f32 %v472, %v710
        %v747 = vadd.f32 %v473, %v712
        %v748 = vadd.f32 %v474, %v714
        %v749 = vadd.f32 %v475, %v716
        %750 = vst [vmem:[#allocation2] sm:$0xff] %v718
        %751 = vst [vmem:[#allocation2 + $0x8] sm:$0xff] %v719
        %752 = vst [vmem:[#allocation2 + $0x10] sm:$0xff] %v720
        %753 = vst [vmem:[#allocation2 + $0x18] sm:$0xff] %v721
        %754 = vst [vmem:[#allocation2 + $0x20] sm:$0xff] %v722
        %755 = vst [vmem:[#allocation2 + $0x28] sm:$0xff] %v723
        %756 = vst [vmem:[#allocation2 + $0x30] sm:$0xff] %v724
        %757 = vst [vmem:[#allocation2 + $0x38] sm:$0xff] %v725
        %758 = vst [vmem:[#allocation2 + $0x40] sm:$0xff] %v726
        %759 = vst [vmem:[#allocation2 + $0x48] sm:$0xff] %v727
        %760 = vst [vmem:[#allocation2 + $0x50] sm:$0xff] %v728
        %761 = vst [vmem:[#allocation2 + $0x58] sm:$0xff] %v729
        %762 = vst [vmem:[#allocation2 + $0x60] sm:$0xff] %v730
        %763 = vst [vmem:[#allocation2 + $0x68] sm:$0xff] %v731
        %764 = vst [vmem:[#allocation2 + $0x70] sm:$0xff] %v732
        %765 = vst [vmem:[#allocation2 + $0x78] sm:$0xff] %v733
        %766 = vst [vmem:[#allocation2 + $0x80] sm:$0xff] %v734
        %767 = vst [vmem:[#allocation2 + $0x88] sm:$0xff] %v735
        %768 = vst [vmem:[#allocation2 + $0x90] sm:$0xff] %v736
        %769 = vst [vmem:[#allocation2 + $0x98] sm:$0xff] %v737
        %770 = vst [vmem:[#allocation2 + $0xa0] sm:$0xff] %v738
        %771 = vst [vmem:[#allocation2 + $0xa8] sm:$0xff] %v739
        %772 = vst [vmem:[#allocation2 + $0xb0] sm:$0xff] %v740
        %773 = vst [vmem:[#allocation2 + $0xb8] sm:$0xff] %v741
        %774 = vst [vmem:[#allocation2 + $0xc0] sm:$0xff] %v742
        %775 = vst [vmem:[#allocation2 + $0xc8] sm:$0xff] %v743
        %776 = vst [vmem:[#allocation2 + $0xd0] sm:$0xff] %v744
        %777 = vst [vmem:[#allocation2 + $0xd8] sm:$0xff] %v745
        %778 = vst [vmem:[#allocation2 + $0xe0] sm:$0xff] %v746
        %779 = vst [vmem:[#allocation2 + $0xe8] sm:$0xff] %v747
        %780 = vst [vmem:[#allocation2 + $0xf0] sm:$0xff] %v748
        %781 = vst [vmem:[#allocation2 + $0xf8] sm:$0xff] %v749
        // Predicated region
        $region61: #{tpu_custom_call.1} parent=55 // pred_check
          %p782 = pneg %p360
        $region62: #{tpu_custom_call.1} parent=55 // pred_check_branch
          %784 = sbr.rel (%p782) target = $region64
        $region63: #{tpu_custom_call.1} parent=55 // pred_region
          %v785 = vld [vmem:[#allocation2] sm:$0xff]
          %v786 = vld [vmem:[#allocation2 + $0x8] sm:$0xff]
          %v787 = vld [vmem:[#allocation2 + $0x10] sm:$0xff]
          %v788 = vld [vmem:[#allocation2 + $0x18] sm:$0xff]
          %v789 = vld [vmem:[#allocation2 + $0x20] sm:$0xff]
          %v790 = vld [vmem:[#allocation2 + $0x28] sm:$0xff]
          %v791 = vld [vmem:[#allocation2 + $0x30] sm:$0xff]
          %v792 = vld [vmem:[#allocation2 + $0x38] sm:$0xff]
          %v793 = vld [vmem:[#allocation2 + $0x40] sm:$0xff]
          %v794 = vld [vmem:[#allocation2 + $0x48] sm:$0xff]
          %v795 = vld [vmem:[#allocation2 + $0x50] sm:$0xff]
          %v796 = vld [vmem:[#allocation2 + $0x58] sm:$0xff]
          %v797 = vld [vmem:[#allocation2 + $0x60] sm:$0xff]
          %v798 = vld [vmem:[#allocation2 + $0x68] sm:$0xff]
          %v799 = vld [vmem:[#allocation2 + $0x70] sm:$0xff]
          %v800 = vld [vmem:[#allocation2 + $0x78] sm:$0xff]
          %v801 = vld [vmem:[#allocation2 + $0x80] sm:$0xff]
          %v802 = vld [vmem:[#allocation2 + $0x88] sm:$0xff]
          %v803 = vld [vmem:[#allocation2 + $0x90] sm:$0xff]
          %v804 = vld [vmem:[#allocation2 + $0x98] sm:$0xff]
          %v805 = vld [vmem:[#allocation2 + $0xa0] sm:$0xff]
          %v806 = vld [vmem:[#allocation2 + $0xa8] sm:$0xff]
          %v807 = vld [vmem:[#allocation2 + $0xb0] sm:$0xff]
          %v808 = vld [vmem:[#allocation2 + $0xb8] sm:$0xff]
          %v809 = vld [vmem:[#allocation2 + $0xc0] sm:$0xff]
          %v810 = vld [vmem:[#allocation2 + $0xc8] sm:$0xff]
          %v811 = vld [vmem:[#allocation2 + $0xd0] sm:$0xff]
          %v812 = vld [vmem:[#allocation2 + $0xd8] sm:$0xff]
          %v813 = vld [vmem:[#allocation2 + $0xe0] sm:$0xff]
          %v814 = vld [vmem:[#allocation2 + $0xe8] sm:$0xff]
          %v815 = vld [vmem:[#allocation2 + $0xf0] sm:$0xff]
          %v816 = vld [vmem:[#allocation2 + $0xf8] sm:$0xff]
          %v817 = vld [vmem:[%s2] sm:$0xff]
          %v818 = vld [vmem:[%s2 + $0x8] sm:$0xff]
          %v819 = vld [vmem:[%s2 + $0x10] sm:$0xff]
          %v820 = vld [vmem:[%s2 + $0x18] sm:$0xff]
          %v821 = vld [vmem:[%s2 + $0x20] sm:$0xff]
          %v822 = vld [vmem:[%s2 + $0x28] sm:$0xff]
          %v823 = vld [vmem:[%s2 + $0x30] sm:$0xff]
          %v824 = vld [vmem:[%s2 + $0x38] sm:$0xff]
          %v825 = vld [vmem:[%s2 + $0x40] sm:$0xff]
          %v826 = vld [vmem:[%s2 + $0x48] sm:$0xff]
          %v827 = vld [vmem:[%s2 + $0x50] sm:$0xff]
          %v828 = vld [vmem:[%s2 + $0x58] sm:$0xff]
          %v829 = vld [vmem:[%s2 + $0x60] sm:$0xff]
          %v830 = vld [vmem:[%s2 + $0x68] sm:$0xff]
          %v831 = vld [vmem:[%s2 + $0x70] sm:$0xff]
          %v832 = vld [vmem:[%s2 + $0x78] sm:$0xff]
          %834 = vset.pattern.permute.xlu0 0
          %835 = vperm.xlu0 %834, %v817
          %v836 = vpop.permute.xlu0 %835
          %839 = vset.pattern.permute.xlu0 0
          %840 = vperm.xlu0 %839, %v818
          %v841 = vpop.permute.xlu0 %840
          %844 = vset.pattern.permute.xlu0 0
          %845 = vperm.xlu0 %844, %v819
          %v846 = vpop.permute.xlu0 %845
          %849 = vset.pattern.permute.xlu0 0
          %850 = vperm.xlu0 %849, %v820
          %v851 = vpop.permute.xlu0 %850
          %854 = vset.pattern.permute.xlu0 0
          %855 = vperm.xlu0 %854, %v821
          %v856 = vpop.permute.xlu0 %855
          %859 = vset.pattern.permute.xlu0 0
          %860 = vperm.xlu0 %859, %v822
          %v861 = vpop.permute.xlu0 %860
          %864 = vset.pattern.permute.xlu0 0
          %865 = vperm.xlu0 %864, %v823
          %v866 = vpop.permute.xlu0 %865
          %869 = vset.pattern.permute.xlu0 0
          %870 = vperm.xlu0 %869, %v824
          %v871 = vpop.permute.xlu0 %870
          %874 = vset.pattern.permute.xlu0 0
          %875 = vperm.xlu0 %874, %v825
          %v876 = vpop.permute.xlu0 %875
          %879 = vset.pattern.permute.xlu0 0
          %880 = vperm.xlu0 %879, %v826
          %v881 = vpop.permute.xlu0 %880
          %884 = vset.pattern.permute.xlu0 0
          %885 = vperm.xlu0 %884, %v827
          %v886 = vpop.permute.xlu0 %885
          %889 = vset.pattern.permute.xlu0 0
          %890 = vperm.xlu0 %889, %v828
          %v891 = vpop.permute.xlu0 %890
          %894 = vset.pattern.permute.xlu0 0
          %895 = vperm.xlu0 %894, %v829
          %v896 = vpop.permute.xlu0 %895
          %899 = vset.pattern.permute.xlu0 0
          %900 = vperm.xlu0 %899, %v830
          %v901 = vpop.permute.xlu0 %900
          %904 = vset.pattern.permute.xlu0 0
          %905 = vperm.xlu0 %904, %v831
          %v906 = vpop.permute.xlu0 %905
          %909 = vset.pattern.permute.xlu0 0
          %910 = vperm.xlu0 %909, %v832
          %v911 = vpop.permute.xlu0 %910
          %v913 = vadd.f32 %v785, %v836
          %v914 = vadd.f32 %v786, %v836
          %v915 = vadd.f32 %v787, %v841
          %v916 = vadd.f32 %v788, %v841
          %v917 = vadd.f32 %v789, %v846
          %v918 = vadd.f32 %v790, %v846
          %v919 = vadd.f32 %v791, %v851
          %v920 = vadd.f32 %v792, %v851
          %v921 = vadd.f32 %v793, %v856
          %v922 = vadd.f32 %v794, %v856
          %v923 = vadd.f32 %v795, %v861
          %v924 = vadd.f32 %v796, %v861
          %v925 = vadd.f32 %v797, %v866
          %v926 = vadd.f32 %v798, %v866
          %v927 = vadd.f32 %v799, %v871
          %v928 = vadd.f32 %v800, %v871
          %v929 = vadd.f32 %v801, %v876
          %v930 = vadd.f32 %v802, %v876
          %v931 = vadd.f32 %v803, %v881
          %v932 = vadd.f32 %v804, %v881
          %v933 = vadd.f32 %v805, %v886
          %v934 = vadd.f32 %v806, %v886
          %v935 = vadd.f32 %v807, %v891
          %v936 = vadd.f32 %v808, %v891
          %v937 = vadd.f32 %v809, %v896
          %v938 = vadd.f32 %v810, %v896
          %v939 = vadd.f32 %v811, %v901
          %v940 = vadd.f32 %v812, %v901
          %v941 = vadd.f32 %v813, %v906
          %v942 = vadd.f32 %v814, %v906
          %v943 = vadd.f32 %v815, %v911
          %v944 = vadd.f32 %v816, %v911
          %vm945 = vcmp.gt.f32.partialorder %v913, 0.0
          %vm946 = vcmp.gt.f32.partialorder %v914, 0.0
          %vm947 = vcmp.gt.f32.partialorder %v915, 0.0
          %vm948 = vcmp.gt.f32.partialorder %v916, 0.0
          %vm949 = vcmp.gt.f32.partialorder %v917, 0.0
          %vm950 = vcmp.gt.f32.partialorder %v918, 0.0
          %vm951 = vcmp.gt.f32.partialorder %v919, 0.0
          %vm952 = vcmp.gt.f32.partialorder %v920, 0.0
          %vm953 = vcmp.gt.f32.partialorder %v921, 0.0
          %vm954 = vcmp.gt.f32.partialorder %v922, 0.0
          %vm955 = vcmp.gt.f32.partialorder %v923, 0.0
          %vm956 = vcmp.gt.f32.partialorder %v924, 0.0
          %vm957 = vcmp.gt.f32.partialorder %v925, 0.0
          %vm958 = vcmp.gt.f32.partialorder %v926, 0.0
          %vm959 = vcmp.gt.f32.partialorder %v927, 0.0
          %vm960 = vcmp.gt.f32.partialorder %v928, 0.0
          %vm961 = vcmp.gt.f32.partialorder %v929, 0.0
          %vm962 = vcmp.gt.f32.partialorder %v930, 0.0
          %vm963 = vcmp.gt.f32.partialorder %v931, 0.0
          %vm964 = vcmp.gt.f32.partialorder %v932, 0.0
          %vm965 = vcmp.gt.f32.partialorder %v933, 0.0
          %vm966 = vcmp.gt.f32.partialorder %v934, 0.0
          %vm967 = vcmp.gt.f32.partialorder %v935, 0.0
          %vm968 = vcmp.gt.f32.partialorder %v936, 0.0
          %vm969 = vcmp.gt.f32.partialorder %v937, 0.0
          %vm970 = vcmp.gt.f32.partialorder %v938, 0.0
          %vm971 = vcmp.gt.f32.partialorder %v939, 0.0
          %vm972 = vcmp.gt.f32.partialorder %v940, 0.0
          %vm973 = vcmp.gt.f32.partialorder %v941, 0.0
          %vm974 = vcmp.gt.f32.partialorder %v942, 0.0
          %vm975 = vcmp.gt.f32.partialorder %v943, 0.0
          %vm976 = vcmp.gt.f32.partialorder %v944, 0.0
          %v977 = vmul.f32 %v913, 0.1
          %v978 = vmul.f32 %v914, 0.1
          %v979 = vmul.f32 %v915, 0.1
          %v980 = vmul.f32 %v916, 0.1
          %v981 = vmul.f32 %v917, 0.1
          %v982 = vmul.f32 %v918, 0.1
          %v983 = vmul.f32 %v919, 0.1
          %v984 = vmul.f32 %v920, 0.1
          %v985 = vmul.f32 %v921, 0.1
          %v986 = vmul.f32 %v922, 0.1
          %v987 = vmul.f32 %v923, 0.1
          %v988 = vmul.f32 %v924, 0.1
          %v989 = vmul.f32 %v925, 0.1
          %v990 = vmul.f32 %v926, 0.1
          %v991 = vmul.f32 %v927, 0.1
          %v992 = vmul.f32 %v928, 0.1
          %v993 = vmul.f32 %v929, 0.1
          %v994 = vmul.f32 %v930, 0.1
          %v995 = vmul.f32 %v931, 0.1
          %v996 = vmul.f32 %v932, 0.1
          %v997 = vmul.f32 %v933, 0.1
          %v998 = vmul.f32 %v934, 0.1
          %v999 = vmul.f32 %v935, 0.1
          %v1000 = vmul.f32 %v936, 0.1
          %v1001 = vmul.f32 %v937, 0.1
          %v1002 = vmul.f32 %v938, 0.1
          %v1003 = vmul.f32 %v939, 0.1
          %v1004 = vmul.f32 %v940, 0.1
          %v1005 = vmul.f32 %v941, 0.1
          %v1006 = vmul.f32 %v942, 0.1
          %v1007 = vmul.f32 %v943, 0.1
          %v1008 = vmul.f32 %v944, 0.1
          %v1009 = vsel %vm945, %v913, %v977
          %v1010 = vsel %vm946, %v914, %v978
          %v1011 = vsel %vm947, %v915, %v979
          %v1012 = vsel %vm948, %v916, %v980
          %v1013 = vsel %vm949, %v917, %v981
          %v1014 = vsel %vm950, %v918, %v982
          %v1015 = vsel %vm951, %v919, %v983
          %v1016 = vsel %vm952, %v920, %v984
          %v1017 = vsel %vm953, %v921, %v985
          %v1018 = vsel %vm954, %v922, %v986
          %v1019 = vsel %vm955, %v923, %v987
          %v1020 = vsel %vm956, %v924, %v988
          %v1021 = vsel %vm957, %v925, %v989
          %v1022 = vsel %vm958, %v926, %v990
          %v1023 = vsel %vm959, %v927, %v991
          %v1024 = vsel %vm960, %v928, %v992
          %v1025 = vsel %vm961, %v929, %v993
          %v1026 = vsel %vm962, %v930, %v994
          %v1027 = vsel %vm963, %v931, %v995
          %v1028 = vsel %vm964, %v932, %v996
          %v1029 = vsel %vm965, %v933, %v997
          %v1030 = vsel %vm966, %v934, %v998
          %v1031 = vsel %vm967, %v935, %v999
          %v1032 = vsel %vm968, %v936, %v1000
          %v1033 = vsel %vm969, %v937, %v1001
          %v1034 = vsel %vm970, %v938, %v1002
          %v1035 = vsel %vm971, %v939, %v1003
          %v1036 = vsel %vm972, %v940, %v1004
          %v1037 = vsel %vm973, %v941, %v1005
          %v1038 = vsel %vm974, %v942, %v1006
          %v1039 = vsel %vm975, %v943, %v1007
          %v1040 = vsel %vm976, %v944, %v1008
          %v1041 = vld [vmem:[%s3] sm:$0xf]
          %v1042 = vld [vmem:[%s3 + $0x4] sm:$0xf]
          %v1043 = vld [vmem:[%s3 + $0x8] sm:$0xf]
          %v1044 = vld [vmem:[%s3 + $0xc] sm:$0xf]
          %v1045 = vld [vmem:[%s3 + $0x10] sm:$0xf]
          %v1046 = vld [vmem:[%s3 + $0x14] sm:$0xf]
          %v1047 = vld [vmem:[%s3 + $0x18] sm:$0xf]
          %v1048 = vld [vmem:[%s3 + $0x1c] sm:$0xf]
          %v1049 = vpack.c.bf16 %v1011, %v1009
          %v1050 = vpack.c.bf16 %v1012, %v1010
          %v1051 = vpack.c.bf16 %v1015, %v1013
          %v1052 = vpack.c.bf16 %v1016, %v1014
          %v1053 = vpack.c.bf16 %v1019, %v1017
          %v1054 = vpack.c.bf16 %v1020, %v1018
          %v1055 = vpack.c.bf16 %v1023, %v1021
          %v1056 = vpack.c.bf16 %v1024, %v1022
          %v1057 = vpack.c.bf16 %v1027, %v1025
          %v1058 = vpack.c.bf16 %v1028, %v1026
          %v1059 = vpack.c.bf16 %v1031, %v1029
          %v1060 = vpack.c.bf16 %v1032, %v1030
          %v1061 = vpack.c.bf16 %v1035, %v1033
          %v1062 = vpack.c.bf16 %v1036, %v1034
          %v1063 = vpack.c.bf16 %v1039, %v1037
          %v1064 = vpack.c.bf16 %v1040, %v1038
          %v1065 = vld [vmem:[%s4] sm:$0xff]
          %v1066 = vld [vmem:[%s4 + $0x8] sm:$0xff]
          %v1067 = vld [vmem:[%s4 + $0x10] sm:$0xff]
          %v1068 = vld [vmem:[%s4 + $0x18] sm:$0xff]
          %v1069 = vld [vmem:[%s4 + $0x20] sm:$0xff]
          %v1070 = vld [vmem:[%s4 + $0x28] sm:$0xff]
          %v1071 = vld [vmem:[%s4 + $0x30] sm:$0xff]
          %v1072 = vld [vmem:[%s4 + $0x38] sm:$0xff]
          %1074 = vset.pattern.permute.xlu0 0
          %1075 = vperm.xlu0 %1074, %v1065
          %v1076 = vpop.permute.xlu0 %1075
          %1079 = vset.pattern.permute.xlu0 0
          %1080 = vperm.xlu0 %1079, %v1066
          %v1081 = vpop.permute.xlu0 %1080
          %1084 = vset.pattern.permute.xlu0 0
          %1085 = vperm.xlu0 %1084, %v1067
          %v1086 = vpop.permute.xlu0 %1085
          %1089 = vset.pattern.permute.xlu0 0
          %1090 = vperm.xlu0 %1089, %v1068
          %v1091 = vpop.permute.xlu0 %1090
          %1094 = vset.pattern.permute.xlu0 0
          %1095 = vperm.xlu0 %1094, %v1069
          %v1096 = vpop.permute.xlu0 %1095
          %1099 = vset.pattern.permute.xlu0 0
          %1100 = vperm.xlu0 %1099, %v1070
          %v1101 = vpop.permute.xlu0 %1100
          %1104 = vset.pattern.permute.xlu0 0
          %1105 = vperm.xlu0 %1104, %v1071
          %v1106 = vpop.permute.xlu0 %1105
          %1109 = vset.pattern.permute.xlu0 0
          %1110 = vperm.xlu0 %1109, %v1072
          %v1111 = vpop.permute.xlu0 %1110
          %v1121 = vunpack.c.l.b16 %v1041
          %v1122 = vunpack.c.l.b16 %v1042
          %v1123 = vunpack.c.l.b16 %v1043
          %v1124 = vunpack.c.l.b16 %v1044
          %v1125 = vunpack.c.l.b16 %v1045
          %v1126 = vunpack.c.l.b16 %v1046
          %v1127 = vunpack.c.l.b16 %v1047
          %v1128 = vunpack.c.l.b16 %v1048
          %v1129 = vpack.c.b16 %v1122, %v1121
          %v1130 = vpack.c.b16 %v1124, %v1123
          %v1131 = vpack.c.b16 %v1126, %v1125
          %v1132 = vpack.c.b16 %v1128, %v1127
          %1137 = vmatprep.subr.bf16.mxu0 %v1050
          %1138 = vmatpush1.bf16.msra.mxu0 %v1049
          %1139 = vmatprep.subr.bf16.mxu0 %v1052
          %1140 = vmatpush1.bf16.msra.mxu0 %v1051
          %1141 = vmatprep.subr.bf16.mxu0 %v1054
          %1142 = vmatpush1.bf16.msra.mxu0 %v1053
          %1143 = vmatprep.subr.bf16.mxu0 %v1056
          %1144 = vmatpush1.bf16.msra.mxu0 %v1055
          %1145 = vmatprep.subr.bf16.mxu0 %v1058
          %1146 = vmatpush1.bf16.msra.mxu0 %v1057
          %1147 = vmatprep.subr.bf16.mxu0 %v1060
          %1148 = vmatpush1.bf16.msra.mxu0 %v1059
          %1149 = vmatprep.subr.bf16.mxu0 %v1062
          %1150 = vmatpush1.bf16.msra.mxu0 %v1061
          %1151 = vmatprep.subr.bf16.mxu0 %v1064
          %1152 = vmatpush1.bf16.msra.mxu0 %v1063
          %1153 = vmatprep.subr.bf16.mxu0 0
          %1154 = vmatpush1.bf16.msra.mxu0 0
          %1155 = vmatprep.subr.bf16.mxu0 0
          %1156 = vmatpush1.bf16.msra.mxu0 0
          %1157 = vmatprep.subr.bf16.mxu0 0
          %1158 = vmatpush1.bf16.msra.mxu0 0
          %1159 = vmatprep.subr.bf16.mxu0 0
          %1160 = vmatpush1.bf16.msra.mxu0 0
          %1161 = vmatprep.subr.bf16.mxu0 0
          %1162 = vmatpush1.bf16.msra.mxu0 0
          %1163 = vmatprep.subr.bf16.mxu0 0
          %1164 = vmatpush1.bf16.msra.mxu0 0
          %1165 = vmatprep.subr.bf16.mxu0 0
          %1166 = vmatpush1.bf16.msra.mxu0 0
          %1167 = vmatprep.subr.bf16.mxu0 0
          %1168 = vmatpush1.bf16.msra.mxu0 0
          %1169 = vmatprep.mubr.bf16.mxu0 0
          %1170 = vmatmul.mubr.bf16.gmra.mrb[0].mxu0 %v1129
          %v1171 = vpop.f32.mrb[0].mxu0
          %v1172 = vadd.f32 %v1076, %v1171
          %v1173 = vpop.f32.mrb[0].mxu0
          %v1174 = vadd.f32 %v1076, %v1173
          %v1175 = vpop.f32.mrb[0].mxu0
          %v1176 = vadd.f32 %v1081, %v1175
          %v1177 = vpop.f32.mrb[0].mxu0
          %v1178 = vadd.f32 %v1081, %v1177
          %1179 = vmatprep.mubr.bf16.mxu0 0
          %1180 = vmatmul.mubr.bf16.gmra.mrb[0].mxu0 %v1130
          %v1181 = vpop.f32.mrb[0].mxu0
          %v1182 = vadd.f32 %v1086, %v1181
          %v1183 = vpop.f32.mrb[0].mxu0
          %v1184 = vadd.f32 %v1086, %v1183
          %v1185 = vpop.f32.mrb[0].mxu0
          %v1186 = vadd.f32 %v1091, %v1185
          %v1187 = vpop.f32.mrb[0].mxu0
          %v1188 = vadd.f32 %v1091, %v1187
          %1189 = vmatprep.mubr.bf16.mxu0 0
          %1190 = vmatmul.mubr.bf16.gmra.mrb[0].mxu0 %v1131
          %v1191 = vpop.f32.mrb[0].mxu0
          %v1192 = vadd.f32 %v1096, %v1191
          %v1193 = vpop.f32.mrb[0].mxu0
          %v1194 = vadd.f32 %v1096, %v1193
          %v1195 = vpop.f32.mrb[0].mxu0
          %v1196 = vadd.f32 %v1101, %v1195
          %v1197 = vpop.f32.mrb[0].mxu0
          %v1198 = vadd.f32 %v1101, %v1197
          %1199 = vmatprep.mubr.bf16.mxu0 0
          %1200 = vmatmul.mubr.bf16.gmra.mrb[0].mxu0 %v1132
          %v1201 = vpop.f32.mrb[0].mxu0
          %v1202 = vadd.f32 %v1106, %v1201
          %v1203 = vpop.f32.mrb[0].mxu0
          %v1204 = vadd.f32 %v1106, %v1203
          %v1205 = vpop.f32.mrb[0].mxu0
          %v1206 = vadd.f32 %v1111, %v1205
          %v1207 = vpop.f32.mrb[0].mxu0
          %v1208 = vadd.f32 %v1111, %v1207
          %1209 = vdwg.mxu0
          %vm1210 = vcmp.gt.f32.partialorder %v1172, 0.0
          %vm1211 = vcmp.gt.f32.partialorder %v1174, 0.0
          %vm1212 = vcmp.gt.f32.partialorder %v1176, 0.0
          %vm1213 = vcmp.gt.f32.partialorder %v1178, 0.0
          %vm1214 = vcmp.gt.f32.partialorder %v1182, 0.0
          %vm1215 = vcmp.gt.f32.partialorder %v1184, 0.0
          %vm1216 = vcmp.gt.f32.partialorder %v1186, 0.0
          %vm1217 = vcmp.gt.f32.partialorder %v1188, 0.0
          %vm1218 = vcmp.gt.f32.partialorder %v1192, 0.0
          %vm1219 = vcmp.gt.f32.partialorder %v1194, 0.0
          %vm1220 = vcmp.gt.f32.partialorder %v1196, 0.0
          %vm1221 = vcmp.gt.f32.partialorder %v1198, 0.0
          %vm1222 = vcmp.gt.f32.partialorder %v1202, 0.0
          %vm1223 = vcmp.gt.f32.partialorder %v1204, 0.0
          %vm1224 = vcmp.gt.f32.partialorder %v1206, 0.0
          %vm1225 = vcmp.gt.f32.partialorder %v1208, 0.0
          %v1226 = vmul.f32 %v1172, 0.1
          %v1227 = vmul.f32 %v1174, 0.1
          %v1228 = vmul.f32 %v1176, 0.1
          %v1229 = vmul.f32 %v1178, 0.1
          %v1230 = vmul.f32 %v1182, 0.1
          %v1231 = vmul.f32 %v1184, 0.1
          %v1232 = vmul.f32 %v1186, 0.1
          %v1233 = vmul.f32 %v1188, 0.1
          %v1234 = vmul.f32 %v1192, 0.1
          %v1235 = vmul.f32 %v1194, 0.1
          %v1236 = vmul.f32 %v1196, 0.1
          %v1237 = vmul.f32 %v1198, 0.1
          %v1238 = vmul.f32 %v1202, 0.1
          %v1239 = vmul.f32 %v1204, 0.1
          %v1240 = vmul.f32 %v1206, 0.1
          %v1241 = vmul.f32 %v1208, 0.1
          %v1242 = vsel %vm1210, %v1172, %v1226
          %v1243 = vsel %vm1211, %v1174, %v1227
          %v1244 = vsel %vm1212, %v1176, %v1228
          %v1245 = vsel %vm1213, %v1178, %v1229
          %v1246 = vsel %vm1214, %v1182, %v1230
          %v1247 = vsel %vm1215, %v1184, %v1231
          %v1248 = vsel %vm1216, %v1186, %v1232
          %v1249 = vsel %vm1217, %v1188, %v1233
          %v1250 = vsel %vm1218, %v1192, %v1234
          %v1251 = vsel %vm1219, %v1194, %v1235
          %v1252 = vsel %vm1220, %v1196, %v1236
          %v1253 = vsel %vm1221, %v1198, %v1237
          %v1254 = vsel %vm1222, %v1202, %v1238
          %v1255 = vsel %vm1223, %v1204, %v1239
          %v1256 = vsel %vm1224, %v1206, %v1240
          %v1257 = vsel %vm1225, %v1208, %v1241
          %v1258 = vld [vmem:[%s5] sm:$0xf]
          %v1259 = vld [vmem:[%s5 + $0x4] sm:$0xf]
          %v1260 = vld [vmem:[%s5 + $0x8] sm:$0xf]
          %v1261 = vld [vmem:[%s5 + $0xc] sm:$0xf]
          %v1262 = vpack.c.bf16 %v1244, %v1242
          %v1263 = vpack.c.bf16 %v1245, %v1243
          %v1264 = vpack.c.bf16 %v1248, %v1246
          %v1265 = vpack.c.bf16 %v1249, %v1247
          %v1266 = vpack.c.bf16 %v1252, %v1250
          %v1267 = vpack.c.bf16 %v1253, %v1251
          %v1268 = vpack.c.bf16 %v1256, %v1254
          %v1269 = vpack.c.bf16 %v1257, %v1255
          %v1270 = vld [vmem:[%s6] sm:$0xff]
          %v1271 = vld [vmem:[%s6 + $0x8] sm:$0xff]
          %v1272 = vld [vmem:[%s6 + $0x10] sm:$0xff]
          %v1273 = vld [vmem:[%s6 + $0x18] sm:$0xff]
          %1275 = vset.pattern.permute.xlu0 0
          %1276 = vperm.xlu0 %1275, %v1270
          %v1277 = vpop.permute.xlu0 %1276
          %1280 = vset.pattern.permute.xlu0 0
          %1281 = vperm.xlu0 %1280, %v1271
          %v1282 = vpop.permute.xlu0 %1281
          %1285 = vset.pattern.permute.xlu0 0
          %1286 = vperm.xlu0 %1285, %v1272
          %v1287 = vpop.permute.xlu0 %1286
          %1290 = vset.pattern.permute.xlu0 0
          %1291 = vperm.xlu0 %1290, %v1273
          %v1292 = vpop.permute.xlu0 %1291
          %v1298 = vunpack.c.l.b16 %v1258
          %v1299 = vunpack.c.l.b16 %v1259
          %v1300 = vunpack.c.l.b16 %v1260
          %v1301 = vunpack.c.l.b16 %v1261
          %v1302 = vpack.c.b16 %v1299, %v1298
          %v1303 = vpack.c.b16 %v1301, %v1300
          %v1305 = vsel %vm532, %v1302, 0
          %v1308 = vsel %vm532, %v1303, 0
          %1310 = vmatprep.subr.bf16.mxu0 %v1263
          %1311 = vmatpush1.bf16.msra.mxu0 %v1262
          %1312 = vmatprep.subr.bf16.mxu0 %v1265
          %1313 = vmatpush1.bf16.msra.mxu0 %v1264
          %1314 = vmatprep.subr.bf16.mxu0 %v1267
          %1315 = vmatpush1.bf16.msra.mxu0 %v1266
          %1316 = vmatprep.subr.bf16.mxu0 %v1269
          %1317 = vmatpush1.bf16.msra.mxu0 %v1268
          %1318 = vmatprep.subr.bf16.mxu0 0
          %1319 = vmatpush1.bf16.msra.mxu0 0
          %1320 = vmatprep.subr.bf16.mxu0 0
          %1321 = vmatpush1.bf16.msra.mxu0 0
          %1322 = vmatprep.subr.bf16.mxu0 0
          %1323 = vmatpush1.bf16.msra.mxu0 0
          %1324 = vmatprep.subr.bf16.mxu0 0
          %1325 = vmatpush1.bf16.msra.mxu0 0
          %1326 = vmatprep.subr.bf16.mxu0 0
          %1327 = vmatpush1.bf16.msra.mxu0 0
          %1328 = vmatprep.subr.bf16.mxu0 0
          %1329 = vmatpush1.bf16.msra.mxu0 0
          %1330 = vmatprep.subr.bf16.mxu0 0
          %1331 = vmatpush1.bf16.msra.mxu0 0
          %1332 = vmatprep.subr.bf16.mxu0 0
          %1333 = vmatpush1.bf16.msra.mxu0 0
          %1334 = vmatprep.subr.bf16.mxu0 0
          %1335 = vmatpush1.bf16.msra.mxu0 0
          %1336 = vmatprep.subr.bf16.mxu0 0
          %1337 = vmatpush1.bf16.msra.mxu0 0
          %1338 = vmatprep.subr.bf16.mxu0 0
          %1339 = vmatpush1.bf16.msra.mxu0 0
          %1340 = vmatprep.subr.bf16.mxu0 0
          %1341 = vmatpush1.bf16.msra.mxu0 0
          %1342 = vmatprep.mubr.bf16.mxu0 0
          %1343 = vmatmul.mubr.bf16.gmra.mrb[0].mxu0 %v1305
          %v1344 = vpop.f32.mrb[0].mxu0
          %v1345 = vadd.f32 %v1277, %v1344
          %v1346 = vpop.f32.mrb[0].mxu0
          %v1347 = vadd.f32 %v1277, %v1346
          %v1348 = vpop.f32.mrb[0].mxu0
          %v1349 = vadd.f32 %v1282, %v1348
          %v1350 = vpop.f32.mrb[0].mxu0
          %v1351 = vadd.f32 %v1282, %v1350
          %1352 = vmatprep.mubr.bf16.mxu0 0
          %1353 = vmatmul.mubr.bf16.gmra.mrb[0].mxu0 %v1308
          %v1354 = vpop.f32.mrb[0].mxu0
          %v1355 = vadd.f32 %v1287, %v1354
          %v1356 = vpop.f32.mrb[0].mxu0
          %v1357 = vadd.f32 %v1287, %v1356
          %v1358 = vpop.f32.mrb[0].mxu0
          %v1359 = vadd.f32 %v1292, %v1358
          %v1360 = vpop.f32.mrb[0].mxu0
          %v1361 = vadd.f32 %v1292, %v1360
          %1362 = vdwg.mxu0
          %vm1363 = vcmp.gt.f32.partialorder %v1345, 0.0
          %vm1364 = vcmp.gt.f32.partialorder %v1347, 0.0
          %vm1365 = vcmp.gt.f32.partialorder %v1349, 0.0
          %vm1366 = vcmp.gt.f32.partialorder %v1351, 0.0
          %vm1367 = vcmp.gt.f32.partialorder %v1355, 0.0
          %vm1368 = vcmp.gt.f32.partialorder %v1357, 0.0
          %vm1369 = vcmp.gt.f32.partialorder %v1359, 0.0
          %vm1370 = vcmp.gt.f32.partialorder %v1361, 0.0
          %v1371 = vmul.f32 %v1345, 0.1
          %v1372 = vmul.f32 %v1347, 0.1
          %v1373 = vmul.f32 %v1349, 0.1
          %v1374 = vmul.f32 %v1351, 0.1
          %v1375 = vmul.f32 %v1355, 0.1
          %v1376 = vmul.f32 %v1357, 0.1
          %v1377 = vmul.f32 %v1359, 0.1
          %v1378 = vmul.f32 %v1361, 0.1
          %v1379 = vsel %vm1363, %v1345, %v1371
          %v1380 = vsel %vm1364, %v1347, %v1372
          %v1381 = vsel %vm1365, %v1349, %v1373
          %v1382 = vsel %vm1366, %v1351, %v1374
          %v1383 = vsel %vm1367, %v1355, %v1375
          %v1384 = vsel %vm1368, %v1357, %v1376
          %v1385 = vsel %vm1369, %v1359, %v1377
          %v1386 = vsel %vm1370, %v1361, %v1378
          %v1387 = vld [vmem:[%s7] sm:$0xff]
          %v1388 = vld [vmem:[%s7 + $0x8] sm:$0xff]
          %v1389 = vld [vmem:[%s7 + $0x10] sm:$0xff]
          %v1390 = vld [vmem:[%s7 + $0x18] sm:$0xff]
          %1392 = vset.pattern.permute.xlu0 0
          %1393 = vperm.xlu0 %1392, %v1387
          %v1394 = vpop.permute.xlu0 %1393
          %1397 = vset.pattern.permute.xlu0 0
          %1398 = vperm.xlu0 %1397, %v1388
          %v1399 = vpop.permute.xlu0 %1398
          %1402 = vset.pattern.permute.xlu0 0
          %1403 = vperm.xlu0 %1402, %v1389
          %v1404 = vpop.permute.xlu0 %1403
          %1407 = vset.pattern.permute.xlu0 0
          %1408 = vperm.xlu0 %1407, %v1390
          %v1409 = vpop.permute.xlu0 %1408
          %v1411 = vmul.f32 %v1379, %v1394
          %v1412 = vmul.f32 %v1380, %v1394
          %v1413 = vmul.f32 %v1381, %v1399
          %v1414 = vmul.f32 %v1382, %v1399
          %v1415 = vmul.f32 %v1383, %v1404
          %v1416 = vmul.f32 %v1384, %v1404
          %v1417 = vmul.f32 %v1385, %v1409
          %v1418 = vmul.f32 %v1386, %v1409
          %v1419 = vadd.f32 %v1411, %v1413
          %v1420 = vadd.f32 %v1419, %v1415
          %v1421 = vadd.f32 %v1420, %v1417
          %v1422 = vrot.slane %v1421, 4
          %v1423 = vadd.f32 %v1421, %v1422
          %v1424 = vrot.slane %v1423, 2
          %v1425 = vadd.f32 %v1423, %v1424
          %v1426 = vrot.slane %v1425, 1
          %v1427 = vadd.f32 %v1425, %v1426
          %v1428 = vadd.f32 %v1412, %v1414
          %v1429 = vadd.f32 %v1428, %v1416
          %v1430 = vadd.f32 %v1429, %v1418
          %v1431 = vrot.slane %v1430, 4
          %v1432 = vadd.f32 %v1430, %v1431
          %v1433 = vrot.slane %v1432, 2
          %v1434 = vadd.f32 %v1432, %v1433
          %v1435 = vrot.slane %v1434, 1
          %v1436 = vadd.f32 %v1434, %v1435
          %v1437 = vld [vmem:[#allocation3] sm:$0x1]
          %1439 = vset.pattern.permute.xlu0 0
          %1440 = vperm.xlu0 %1439, %v1437
          %v1441 = vpop.permute.xlu0 %1440
          %v1443 = vlaneseq
          %v1444 = vshrl.u32 %v1443, 7
          %v1445 = vsub.s32 0, %v1444
          %v1446 = vrot.slane %v1441, %v1445
          %v1447 = vadd.f32 %v1427, %v1446
          %v1448 = vadd.f32 %v1436, %v1446
          %v1449 = vsub.f32 0.0, %v1447
          %v1450 = vsub.f32 0.0, %v1448
          %v1451 = vmul.f32 %v1449, 1.442695
          %v1452 = vpow.pop %v1451
          %v1453 = vmul.f32 %v1450, 1.442695
          %v1454 = vpow.pop %v1453
          %v1455 = vadd.f32 %v1452, 1.0
          %v1456 = vadd.f32 %v1454, 1.0
          %v1457 = vrcp.pop %v1455
          %v1458 = vmul.f32 1.0, %v1457
          %v1459 = vrcp.pop %v1456
          %v1460 = vmul.f32 1.0, %v1459
          %v1463 = vcombine.low %v1458, %v1460
          %v1465 = vunpack.c.l.s4 1966171168
          %v1466 = vunpack.c.0.s8 %v1465
          %v1467 = vlaneseq
          %v1468 = vshrl.u32 %v1467, 7
          %v1469 = vsub.s32 %v1466, %v1468
          %v1470 = vrot.slane %v1463, %v1469
          %v1472 = vunpack.c.l.s4 1966171168
          %v1473 = vunpack.c.0.s8 %v1472
          %v1474 = vlaneseq
          %v1475 = vshrl.u32 %v1474, 7
          %v1476 = vsub.s32 %v1473, %v1475
          %v1477 = vrot.slane %v1470, %v1476
          %v1479 = vlaneseq
          %vm1480 = vcmp.ge.s32.totalorder %v1479, 0
          %vm1481 = vcmp.lt.s32.totalorder %v1479, 256
          %vm1482 = vmand %vm1480, %vm1481
          %1483 = vst.msk [vmem:[%s348] sm:$0x3] %vm1482, %v1477
        $region64: #{tpu_custom_call.1} parent=55 // pred_fallthru
          _
        %s1484 = sand.u32 %s241, 1
        %s1485 = scalar_lea.sflag [#allocation5], %s1484
        %s1486 = sand.u32 %s241, 1
        %s1487 = smul.addr %s1486, 2
        %s1488 = scalar_lea.vmem [#allocation4], %s1487
        // Predicated region
        $region65: #{tpu_custom_call.1} parent=55 // pred_check
          %p1489 = pneg %p251
        $region66: #{tpu_custom_call.1} parent=55 // pred_check_branch
          %1491 = sbr.rel (%p1489) target = $region68
        $region67: #{tpu_custom_call.1} parent=55 // pred_region
          %s1492 = smul.u32 2, %s29
          %s1494 = ssub.s32 32, 32
          %1495 = vsyncadd %s1485, %s1494
          %s1496 = smul.addr %s1492, 16
          %s1497 = scalar_lea.hbm %s9, %s1496
          %s1499 = sshll.u32 %s1488, 4
          %s1500 = int_to_ptr.vmem [resolvable:$true] %s1499
          %1502 = dma.vmem_to_hbm [thread:$0]  %s1500, 32, %s1497, %s1485
        $region68: #{tpu_custom_call.1} parent=55 // pred_fallthru
          _
      $region56: #{tpu_custom_call.1} parent=5 // pred_fallthru
        _
      %p1503 = scmp.le.s32.totalorder 2, %s20
      // Predicated region
      $region69: #{tpu_custom_call.1} parent=5 // pred_check
        %p1504 = pneg %p1503
      $region70: #{tpu_custom_call.1} parent=5 // pred_check_branch
        %1506 = sbr.rel (%p1504) target = $region72
      $region71: #{tpu_custom_call.1} parent=5 // pred_region
        %s1507 = ssub.s32 %s20, 2
        // Predicated region
        $region73: #{tpu_custom_call.1} parent=71 // pred_check
          %p1508 = pneg %p257
        $region74: #{tpu_custom_call.1} parent=71 // pred_check_branch
          %1510 = sbr.rel (%p1508) target = $region76
        $region75: #{tpu_custom_call.1} parent=71 // pred_region
          %s1511 = sand.u32 %s242, 1
          %s1512 = scalar_lea.sflag [#allocation5], %s1511
          %s1513 = sand.u32 %s242, 1
          %s1514 = smul.addr %s1513, 2
          %s1515 = scalar_lea.vmem [#allocation4], %s1514
          %1516 = dma.done %s1512, 32
        $region76: #{tpu_custom_call.1} parent=71 // pred_fallthru
          _
      $region72: #{tpu_custom_call.1} parent=5 // pred_fallthru
        _
    $region6: #{tpu_custom_call.1} parent=1 // loop_footer
      %s24 = sadd.s32 1, %s20
    $region7: #{tpu_custom_call.1} parent=1 // loop_footer_branch
      %19 = sbr.rel target = $region3
    $region8: #{tpu_custom_call.1} parent=1 // loop_exit
      _
    %1517 = vsyncpa [#allocation5], 1
    %s1518 = scalar_lea.sflag [#allocation5], 1
    %1519 = vsyncpa %s1518, 1

// kernel: tpu_custom_call.1
$region0: #{tpu_custom_call.1}
  #allocation0 [shape = 'u32[]', space=smem, size = 0x4, offset = 0x4, fixed_abs, tag = 'smem constant byte address 0x4 - core index']
  #allocation1 [shape = 'u32[144,128]{1,0:T(1,128)}', space=vmem, size = 0x12000, scoped, tag = 'internal scratch']
  #allocation2 [shape = 'f32[128,256]{1,0:T(8,128)}', space=vmem, size = 0x20000, scoped, tag = 'scratch operand']
  #allocation3 [shape = 'f32[1,1]{1,0:T(1,128)S(1)}', space=vmem, size = 0x200, scoped, tag = 'scoped memory for tpu_custom_call.1']
  %s0 = inlined_call_operand.vmem [shape: f32[512,64], index: 0, kind: input, shape index: {}]
  %s1 = inlined_call_operand.vmem [shape: bf16[128,64], index: 1, kind: input, shape index: {}]
  %s2 = inlined_call_operand.vmem [shape: f32[128,1], index: 2, kind: input, shape index: {}]
  %s3 = inlined_call_operand.vmem [shape: bf16[64,128], index: 3, kind: input, shape index: {}]
  %s4 = inlined_call_operand.vmem [shape: f32[64,1], index: 4, kind: input, shape index: {}]
  %s5 = inlined_call_operand.vmem [shape: bf16[32,64], index: 5, kind: input, shape index: {}]
  %s6 = inlined_call_operand.vmem [shape: f32[32,1], index: 6, kind: input, shape index: {}]
  %s7 = inlined_call_operand.vmem [shape: f32[32,1], index: 7, kind: input, shape index: {}]
  %s8 = inlined_call_operand.<no memory space> [shape: f32[1,1], index: 8, kind: input, shape index: {}]
  %s9 = inlined_call_operand.hbm [shape: f32[1,512], index: 9, kind: output, shape index: {}]
  %s10 = sld [smem:[#allocation0]]
  $region77: #{tpu_custom_call.1} parent=0
    _
  %s12 = ssub.s32 1, %s10
  %s13 = scalar_select 0, %s12, %s10
  %v14 = vstv %s8
  %15 = vst [vmem:[#allocation3] sm:$0x1] %v14
  $region1: #{tpu_custom_call.1} parent=0
    #allocation4 [shape = 'u8[2048]{0}', space=vmem, size = 0x800, scoped, tag = 'output window, operand 0']
    #allocation5 [shape = 's32[2]{0}', space=sflag, size = 0x8, scoped, tag = 'scoped memory for tpu_custom_call.1']
    %16 = vsyncpa [#allocation5], 0
    %s17 = scalar_lea.sflag [#allocation5], 1
    %18 = vsyncpa %s17, 0
    loop: start=0, step=1, limit=4
    $region2: #{tpu_custom_call.1} parent=1 // loop_pre_header
      _
    $region3: #{tpu_custom_call.1} parent=1 // loop_header
      %s20 = sphi 0, %s24
      %p21 = scmp.ge.s32.totalorder %s20, 4
      %s27 = sphi 0, %s39
      %s28 = sphi 0, %s35
      %s29 = sphi 0, %s27
      %s30 = sphi 0, %s28
      %s31 = sphi 0, %s29
      %s32 = sphi 0, %s30
      %s44 = sphi 0, %s46
      %s47 = sphi 0, %s44
      %s48 = sphi 0, %s47
      %s64 = sphi 0, %s48
      %s68 = sphi 0, %s68
      %s70 = sphi 0, %s68
      %s71 = sphi 0, %s70
      %s85 = sphi 0, %s71
      %s89 = sphi 0, %s89
      %s91 = sphi 0, %s89
      %s92 = sphi 0, %s91
      %s106 = sphi 0, %s92
      %s110 = sphi 0, %s110
      %s112 = sphi 0, %s110
      %s113 = sphi 0, %s112
      %s127 = sphi 0, %s113
      %s131 = sphi 0, %s131
      %s133 = sphi 0, %s131
      %s134 = sphi 0, %s133
      %s148 = sphi 0, %s134
      %s152 = sphi 0, %s152
      %s154 = sphi 0, %s152
      %s155 = sphi 0, %s154
      %s169 = sphi 0, %s155
      %s173 = sphi 0, %s173
      %s175 = sphi 0, %s173
      %s176 = sphi 0, %s175
      %s190 = sphi 0, %s176
      %s194 = sphi 0, %s194
      %s196 = sphi 0, %s194
      %s197 = sphi 0, %s196
      %s211 = sphi 0, %s197
      %s215 = sphi 0, %s215
      %s217 = sphi 0, %s215
      %s218 = sphi 0, %s217
      %s232 = sphi 0, %s218
      %s238 = sphi 0, %s240
      %s241 = sphi 0, %s238
      %s242 = sphi 0, %s241
      %s258 = sphi 0, %s242
    $region4: #{tpu_custom_call.1} parent=1 // loop_header_branch
      %23 = sbr.rel (%p21) target = $region8
    $region5: #{tpu_custom_call.1} parent=1 // loop_body
      %s25 = ssub.s32 %s20, 1
      %s26 = ssub.s32 %s20, 2
      %s33 = sadd.s32 1, %s28
      %p34 = scmp.ge.s32.totalorder %s33, 1
      %s35 = scalar_select %p34, 0, %s33
      %s36 = sadd.s32 1, %s27
      %s37 = scalar_select %p34, %s36, %s27
      %p38 = scmp.ge.s32.totalorder %s37, 2
      %s39 = scalar_select %p38, 0, %s37
      %s40 = ssub.s32 %s27, %s39
      %s41 = ssub.s32 %s28, %s35
      %s42 = sor.u32 %s40, %s41
      %p43 = scmp.eq.s32.totalorder %s42, 0
      %s45 = sadd.s32 %s44, 1
      %s46 = scalar_select %p43, %s44, %s45
      %p49 = pneg %p43
      %p50 = scmp.eq.s32.totalorder %s20, 1
      %p51 = por %p49, %p50
      %p52 = scmp.ne.s32.totalorder %s44, %s47
      %p53 = scmp.eq.s32.totalorder %s20, 0
      %p54 = por %p52, %p53
      %p55 = scmp.ne.s32.totalorder %s44, %s47
      %p56 = scmp.eq.s32.totalorder %s25, 1
      %p57 = por %p55, %p56
      %p58 = scmp.ne.s32.totalorder %s47, %s48
      %p59 = scmp.eq.s32.totalorder %s25, 0
      %p60 = por %p58, %p59
      %p61 = scmp.ne.s32.totalorder %s47, %s48
      %p62 = scmp.eq.s32.totalorder %s26, 1
      %p63 = por %p61, %p62
      %p65 = scmp.ne.s32.totalorder %s48, %s64
      %p66 = scmp.eq.s32.totalorder %s26, 0
      %p67 = por %p65, %p66
      %s69 = sadd.s32 %s68, 1
      %p72 = scmp.eq.s32.totalorder %s20, 1
      %p73 = scmp.ne.s32.totalorder %s68, %s70
      %p74 = scmp.eq.s32.totalorder %s20, 0
      %p75 = por %p73, %p74
      %p76 = scmp.ne.s32.totalorder %s68, %s70
      %p77 = scmp.eq.s32.totalorder %s25, 1
      %p78 = por %p76, %p77
      %p79 = scmp.ne.s32.totalorder %s70, %s71
      %p80 = scmp.eq.s32.totalorder %s25, 0
      %p81 = por %p79, %p80
      %p82 = scmp.ne.s32.totalorder %s70, %s71
      %p83 = scmp.eq.s32.totalorder %s26, 1
      %p84 = por %p82, %p83
      %p86 = scmp.ne.s32.totalorder %s71, %s85
      %p87 = scmp.eq.s32.totalorder %s26, 0
      %p88 = por %p86, %p87
      %s90 = sadd.s32 %s89, 1
      %p93 = scmp.eq.s32.totalorder %s20, 1
      %p94 = scmp.ne.s32.totalorder %s89, %s91
      %p95 = scmp.eq.s32.totalorder %s20, 0
      %p96 = por %p94, %p95
      %p97 = scmp.ne.s32.totalorder %s89, %s91
      %p98 = scmp.eq.s32.totalorder %s25, 1
      %p99 = por %p97, %p98
      %p100 = scmp.ne.s32.totalorder %s91, %s92
      %p101 = scmp.eq.s32.totalorder %s25, 0
      %p102 = por %p100, %p101
      %p103 = scmp.ne.s32.totalorder %s91, %s92
      %p104 = scmp.eq.s32.totalorder %s26, 1
      %p105 = por %p103, %p104
      %p107 = scmp.ne.s32.totalorder %s92, %s106
      %p108 = scmp.eq.s32.totalorder %s26, 0
      %p109 = por %p107, %p108
      %s111 = sadd.s32 %s110, 1
      %p114 = scmp.eq.s32.totalorder %s20, 1
      %p115 = scmp.ne.s32.totalorder %s110, %s112
      %p116 = scmp.eq.s32.totalorder %s20, 0
      %p117 = por %p115, %p116
      %p118 = scmp.ne.s32.totalorder %s110, %s112
      %p119 = scmp.eq.s32.totalorder %s25, 1
      %p120 = por %p118, %p119
      %p121 = scmp.ne.s32.totalorder %s112, %s113
      %p122 = scmp.eq.s32.totalorder %s25, 0
      %p123 = por %p121, %p122
      %p124 = scmp.ne.s32.totalorder %s112, %s113
      %p125 = scmp.eq.s32.totalorder %s26, 1
      %p126 = por %p124, %p125
      %p128 = scmp.ne.s32.totalorder %s113, %s127
      %p129 = scmp.eq.s32.totalorder %s26, 0
      %p130 = por %p128, %p129
      %s132 = sadd.s32 %s131, 1
      %p135 = scmp.eq.s32.totalorder %s20, 1
      %p136 = scmp.ne.s32.totalorder %s131, %s133
      %p137 = scmp.eq.s32.totalorder %s20, 0
      %p138 = por %p136, %p137
      %p139 = scmp.ne.s32.totalorder %s131, %s133
      %p140 = scmp.eq.s32.totalorder %s25, 1
      %p141 = por %p139, %p140
      %p142 = scmp.ne.s32.totalorder %s133, %s134
      %p143 = scmp.eq.s32.totalorder %s25, 0
      %p144 = por %p142, %p143
      %p145 = scmp.ne.s32.totalorder %s133, %s134
      %p146 = scmp.eq.s32.totalorder %s26, 1
      %p147 = por %p145, %p146
      %p149 = scmp.ne.s32.totalorder %s134, %s148
      %p150 = scmp.eq.s32.totalorder %s26, 0
      %p151 = por %p149, %p150
      %s153 = sadd.s32 %s152, 1
      %p156 = scmp.eq.s32.totalorder %s20, 1
      %p157 = scmp.ne.s32.totalorder %s152, %s154
      %p158 = scmp.eq.s32.totalorder %s20, 0
      %p159 = por %p157, %p158
      %p160 = scmp.ne.s32.totalorder %s152, %s154
      %p161 = scmp.eq.s32.totalorder %s25, 1
      %p162 = por %p160, %p161
      %p163 = scmp.ne.s32.totalorder %s154, %s155
      %p164 = scmp.eq.s32.totalorder %s25, 0
      %p165 = por %p163, %p164
      %p166 = scmp.ne.s32.totalorder %s154, %s155
      %p167 = scmp.eq.s32.totalorder %s26, 1
      %p168 = por %p166, %p167
      %p170 = scmp.ne.s32.totalorder %s155, %s169
      %p171 = scmp.eq.s32.totalorder %s26, 0
      %p172 = por %p170, %p171
      %s174 = sadd.s32 %s173, 1
      %p177 = scmp.eq.s32.totalorder %s20, 1
      %p178 = scmp.ne.s32.totalorder %s173, %s175
      %p179 = scmp.eq.s32.totalorder %s20, 0
      %p180 = por %p178, %p179
      %p181 = scmp.ne.s32.totalorder %s173, %s175
      %p182 = scmp.eq.s32.totalorder %s25, 1
      %p183 = por %p181, %p182
      %p184 = scmp.ne.s32.totalorder %s175, %s176
      %p185 = scmp.eq.s32.totalorder %s25, 0
      %p186 = por %p184, %p185
      %p187 = scmp.ne.s32.totalorder %s175, %s176
      %p188 = scmp.eq.s32.totalorder %s26, 1
      %p189 = por %p187, %p188
      %p191 = scmp.ne.s32.totalorder %s176, %s190
      %p192 = scmp.eq.s32.totalorder %s26, 0
      %p193 = por %p191, %p192
      %s195 = sadd.s32 %s194, 1
      %p198 = scmp.eq.s32.totalorder %s20, 1
      %p199 = scmp.ne.s32.totalorder %s194, %s196
      %p200 = scmp.eq.s32.totalorder %s20, 0
      %p201 = por %p199, %p200
      %p202 = scmp.ne.s32.totalorder %s194, %s196
      %p203 = scmp.eq.s32.totalorder %s25, 1
      %p204 = por %p202, %p203
      %p205 = scmp.ne.s32.totalorder %s196, %s197
      %p206 = scmp.eq.s32.totalorder %s25, 0
      %p207 = por %p205, %p206
      %p208 = scmp.ne.s32.totalorder %s196, %s197
      %p209 = scmp.eq.s32.totalorder %s26, 1
      %p210 = por %p208, %p209
      %p212 = scmp.ne.s32.totalorder %s197, %s211
      %p213 = scmp.eq.s32.totalorder %s26, 0
      %p214 = por %p212, %p213
      %s216 = sadd.s32 %s215, 1
      %p219 = scmp.eq.s32.totalorder %s20, 1
      %p220 = scmp.ne.s32.totalorder %s215, %s217
      %p221 = scmp.eq.s32.totalorder %s20, 0
      %p222 = por %p220, %p221
      %p223 = scmp.ne.s32.totalorder %s215, %s217
      %p224 = scmp.eq.s32.totalorder %s25, 1
      %p225 = por %p223, %p224
      %p226 = scmp.ne.s32.totalorder %s217, %s218
      %p227 = scmp.eq.s32.totalorder %s25, 0
      %p228 = por %p226, %p227
      %p229 = scmp.ne.s32.totalorder %s217, %s218
      %p230 = scmp.eq.s32.totalorder %s26, 1
      %p231 = por %p229, %p230
      %p233 = scmp.ne.s32.totalorder %s218, %s232
      %p234 = scmp.eq.s32.totalorder %s26, 0
      %p235 = por %p233, %p234
      %s236 = ssub.s32 %s27, %s39
      %p237 = scmp.eq.s32.totalorder %s236, 0
      %s239 = sadd.s32 %s238, 1
      %s240 = scalar_select %p237, %s238, %s239
      %p243 = pneg %p237
      %p244 = scmp.eq.s32.totalorder %s20, 1
      %p245 = por %p243, %p244
      %p246 = scmp.ne.s32.totalorder %s238, %s241
      %p247 = scmp.eq.s32.totalorder %s20, 0
      %p248 = por %p246, %p247
      %p249 = scmp.ne.s32.totalorder %s238, %s241
      %p250 = scmp.eq.s32.totalorder %s25, 1
      %p251 = por %p249, %p250
      %p252 = scmp.ne.s32.totalorder %s241, %s242
      %p253 = scmp.eq.s32.totalorder %s25, 0
      %p254 = por %p252, %p253
      %p255 = scmp.ne.s32.totalorder %s241, %s242
      %p256 = scmp.eq.s32.totalorder %s26, 1
      %p257 = por %p255, %p256
      %p259 = scmp.ne.s32.totalorder %s242, %s258
      %p260 = scmp.eq.s32.totalorder %s26, 0
      %p261 = por %p259, %p260
      %p262 = scmp.le.s32.totalorder 1, %s20
      %p263 = scmp.lt.s32.totalorder %s20, 3
      %p264 = pnand %p262, %p263
      %p265 = pneg %p264
      // Predicated region
      $region9: #{tpu_custom_call.1} parent=5 // pred_check
        _
      $region10: #{tpu_custom_call.1} parent=5 // pred_check_branch
        %267 = sbr.rel (%p264) target = $region12
      $region11: #{tpu_custom_call.1} parent=5 // pred_region
        %s268 = ssub.s32 %s20, 1
        // Predicated region
        $region13: #{tpu_custom_call.1} parent=11 // pred_check
          %p269 = pneg %p81
        $region14: #{tpu_custom_call.1} parent=11 // pred_check_branch
          %271 = sbr.rel (%p269) target = $region16
        $region15: #{tpu_custom_call.1} parent=11 // pred_region
          _
        $region16: #{tpu_custom_call.1} parent=11 // pred_fallthru
          _
        // Predicated region
        $region17: #{tpu_custom_call.1} parent=11 // pred_check
          %p272 = pneg %p102
        $region18: #{tpu_custom_call.1} parent=11 // pred_check_branch
          %274 = sbr.rel (%p272) target = $region20
        $region19: #{tpu_custom_call.1} parent=11 // pred_region
          _
        $region20: #{tpu_custom_call.1} parent=11 // pred_fallthru
          _
        // Predicated region
        $region21: #{tpu_custom_call.1} parent=11 // pred_check
          %p275 = pneg %p123
        $region22: #{tpu_custom_call.1} parent=11 // pred_check_branch
          %277 = sbr.rel (%p275) target = $region24
        $region23: #{tpu_custom_call.1} parent=11 // pred_region
          _
        $region24: #{tpu_custom_call.1} parent=11 // pred_fallthru
          _
        // Predicated region
        $region25: #{tpu_custom_call.1} parent=11 // pred_check
          %p278 = pneg %p144
        $region26: #{tpu_custom_call.1} parent=11 // pred_check_branch
          %280 = sbr.rel (%p278) target = $region28
        $region27: #{tpu_custom_call.1} parent=11 // pred_region
          _
        $region28: #{tpu_custom_call.1} parent=11 // pred_fallthru
          _
        // Predicated region
        $region29: #{tpu_custom_call.1} parent=11 // pred_check
          %p281 = pneg %p165
        $region30: #{tpu_custom_call.1} parent=11 // pred_check_branch
          %283 = sbr.rel (%p281) target = $region32
        $region31: #{tpu_custom_call.1} parent=11 // pred_region
          _
        $region32: #{tpu_custom_call.1} parent=11 // pred_fallthru
          _
        // Predicated region
        $region33: #{tpu_custom_call.1} parent=11 // pred_check
          %p284 = pneg %p186
        $region34: #{tpu_custom_call.1} parent=11 // pred_check_branch
          %286 = sbr.rel (%p284) target = $region36
        $region35: #{tpu_custom_call.1} parent=11 // pred_region
          _
        $region36: #{tpu_custom_call.1} parent=11 // pred_fallthru
          _
        // Predicated region
        $region37: #{tpu_custom_call.1} parent=11 // pred_check
          %p287 = pneg %p207
        $region38: #{tpu_custom_call.1} parent=11 // pred_check_branch
          %289 = sbr.rel (%p287) target = $region40
        $region39: #{tpu_custom_call.1} parent=11 // pred_region
          _
        $region40: #{tpu_custom_call.1} parent=11 // pred_fallthru
          _
        // Predicated region
        $region41: #{tpu_custom_call.1} parent=11 // pred_check
          %p290 = pneg %p228
        $region42: #{tpu_custom_call.1} parent=11 // pred_check_branch
          %292 = sbr.rel (%p290) target = $region44
        $region43: #{tpu_custom_call.1} parent=11 // pred_region
          _
        $region44: #{tpu_custom_call.1} parent=11 // pred_fallthru
          _
      $region12: #{tpu_custom_call.1} parent=5 // pred_fallthru
        _
      %p293 = scmp.lt.s32.totalorder %s20, 2
      // Predicated region
      $region45: #{tpu_custom_call.1} parent=5 // pred_check
        %p294 = pneg %p293
      $region46: #{tpu_custom_call.1} parent=5 // pred_check_branch
        %296 = sbr.rel (%p294) target = $region48
      $region47: #{tpu_custom_call.1} parent=5 // pred_region
        // Predicated region
        $region49: #{tpu_custom_call.1} parent=47 // pred_check
          %p297 = pneg %p54
        $region50: #{tpu_custom_call.1} parent=47 // pred_check_branch
          %299 = sbr.rel (%p297) target = $region52
        $region51: #{tpu_custom_call.1} parent=47 // pred_region
          %s300 = smul.u32 32, %s27
          %p301 = scmp.lt.s32.totalorder %s300, 63
          %s302 = scalar_select %p301, %s300, 63
          %p303 = scmp.lt.s32.totalorder %s28, 0
          %s304 = scalar_select %p303, %s28, 0
          %s305 = sadd.s32 %s304, %s302
          %s306 = smul.addr %s305, 8
          %s307 = scalar_lea.vmem %s0, %s306
          %s308 = smul.u32 32, %s27
        $region52: #{tpu_custom_call.1} parent=47 // pred_fallthru
          _
      $region48: #{tpu_custom_call.1} parent=5 // pred_fallthru
        _
      %p309 = scmp.le.s32.totalorder 1, %s20
      %p310 = scmp.lt.s32.totalorder %s20, 3
      %p311 = pnand %p309, %p310
      %p312 = pneg %p311
      // Predicated region
      $region53: #{tpu_custom_call.1} parent=5 // pred_check
        _
      $region54: #{tpu_custom_call.1} parent=5 // pred_check_branch
        %314 = sbr.rel (%p311) target = $region56
      $region55: #{tpu_custom_call.1} parent=5 // pred_region
        %s315 = ssub.s32 %s20, 1
        %s316 = smul.u32 32, %s29
        %p317 = scmp.lt.s32.totalorder %s316, 63
        %s318 = scalar_select %p317, %s316, 63
        %p319 = scmp.lt.s32.totalorder %s30, 0
        %s320 = scalar_select %p319, %s30, 0
        %s321 = sadd.s32 %s320, %s318
        %s322 = smul.addr %s321, 8
        %s323 = scalar_lea.vmem %s0, %s322
        %p324 = pneg %p60
        %p325 = pneg %p57
        %p326 = pneg %p81
        %p327 = pneg %p78
        %p328 = pneg %p102
        %p329 = pneg %p99
        %p330 = pneg %p123
        %p331 = pneg %p120
        %p332 = pneg %p144
        %p333 = pneg %p141
        %p334 = pneg %p165
        %p335 = pneg %p162
        %p336 = pneg %p186
        %p337 = pneg %p183
        %p338 = pneg %p207
        %p339 = pneg %p204
        %p340 = pneg %p228
        %p341 = pneg %p225
        %p342 = pneg %p254
        %p343 = pneg %p251
        %s344 = sand.u32 %s241, 1
        %s345 = scalar_lea.sflag [#allocation5], %s344
        %s346 = sand.u32 %s241, 1
        %s347 = smul.addr %s346, 2
        %s348 = scalar_lea.vmem [#allocation4], %s347
        %s349 = smul.u32 32, %s29
        %p350 = scmp.lt.s32.totalorder %s349, 63
        %s351 = scalar_select %p350, %s349, 63
        %p352 = scmp.lt.s32.totalorder %s30, 0
        %s353 = scalar_select %p352, %s30, 0
        %s354 = sadd.s32 %s353, %s351
        %s355 = smul.addr %s354, 8
        %s356 = scalar_lea.vmem %s0, %s355
        %s357 = smul.u32 32, %s29
        %s358 = smul.u32 2, %s29
        %p360 = scmp.eq.s32.totalorder %s30, 0
        // Predicated region
        $region57: #{tpu_custom_call.1} parent=55 // pred_check
          %p361 = pneg %p360
        $region58: #{tpu_custom_call.1} parent=55 // pred_check_branch
          %363 = sbr.rel (%p361) target = $region60
        $region59: #{tpu_custom_call.1} parent=55 // pred_region
          %364 = vst [vmem:[#allocation2] sm:$0xff] 0.0
          %365 = vst [vmem:[#allocation2 + $0x8] sm:$0xff] 0.0
          %366 = vst [vmem:[#allocation2 + $0x10] sm:$0xff] 0.0
          %367 = vst [vmem:[#allocation2 + $0x18] sm:$0xff] 0.0
          %368 = vst [vmem:[#allocation2 + $0x20] sm:$0xff] 0.0
          %369 = vst [vmem:[#allocation2 + $0x28] sm:$0xff] 0.0
          %370 = vst [vmem:[#allocation2 + $0x30] sm:$0xff] 0.0
          %371 = vst [vmem:[#allocation2 + $0x38] sm:$0xff] 0.0
          %372 = vst [vmem:[#allocation2 + $0x40] sm:$0xff] 0.0
          %373 = vst [vmem:[#allocation2 + $0x48] sm:$0xff] 0.0
          %374 = vst [vmem:[#allocation2 + $0x50] sm:$0xff] 0.0
          %375 = vst [vmem:[#allocation2 + $0x58] sm:$0xff] 0.0
          %376 = vst [vmem:[#allocation2 + $0x60] sm:$0xff] 0.0
          %377 = vst [vmem:[#allocation2 + $0x68] sm:$0xff] 0.0
          %378 = vst [vmem:[#allocation2 + $0x70] sm:$0xff] 0.0
          %379 = vst [vmem:[#allocation2 + $0x78] sm:$0xff] 0.0
          %380 = vst [vmem:[#allocation2 + $0x80] sm:$0xff] 0.0
          %381 = vst [vmem:[#allocation2 + $0x88] sm:$0xff] 0.0
          %382 = vst [vmem:[#allocation2 + $0x90] sm:$0xff] 0.0
          %383 = vst [vmem:[#allocation2 + $0x98] sm:$0xff] 0.0
          %384 = vst [vmem:[#allocation2 + $0xa0] sm:$0xff] 0.0
          %385 = vst [vmem:[#allocation2 + $0xa8] sm:$0xff] 0.0
          %386 = vst [vmem:[#allocation2 + $0xb0] sm:$0xff] 0.0
          %387 = vst [vmem:[#allocation2 + $0xb8] sm:$0xff] 0.0
          %388 = vst [vmem:[#allocation2 + $0xc0] sm:$0xff] 0.0
          %389 = vst [vmem:[#allocation2 + $0xc8] sm:$0xff] 0.0
          %390 = vst [vmem:[#allocation2 + $0xd0] sm:$0xff] 0.0
          %391 = vst [vmem:[#allocation2 + $0xd8] sm:$0xff] 0.0
          %392 = vst [vmem:[#allocation2 + $0xe0] sm:$0xff] 0.0
          %393 = vst [vmem:[#allocation2 + $0xe8] sm:$0xff] 0.0
          %394 = vst [vmem:[#allocation2 + $0xf0] sm:$0xff] 0.0
          %395 = vst [vmem:[#allocation2 + $0xf8] sm:$0xff] 0.0
        $region60: #{tpu_custom_call.1} parent=55 // pred_fallthru
          _
        %v396 = vld [vmem:[%s356] sm:$0xff]
        %v397 = vld [vmem:[%s356 + $0x8] sm:$0xff]
        %v398 = vld [vmem:[%s356 + $0x10] sm:$0xff]
        %v399 = vld [vmem:[%s356 + $0x18] sm:$0xff]
        %v400 = vld [vmem:[%s356 + $0x20] sm:$0xff]
        %v401 = vld [vmem:[%s356 + $0x28] sm:$0xff]
        %v402 = vld [vmem:[%s356 + $0x30] sm:$0xff]
        %v403 = vld [vmem:[%s356 + $0x38] sm:$0xff]
        %v404 = vld [vmem:[%s356 + $0x40] sm:$0xff]
        %v405 = vld [vmem:[%s356 + $0x48] sm:$0xff]
        %v406 = vld [vmem:[%s356 + $0x50] sm:$0xff]
        %v407 = vld [vmem:[%s356 + $0x58] sm:$0xff]
        %v408 = vld [vmem:[%s356 + $0x60] sm:$0xff]
        %v409 = vld [vmem:[%s356 + $0x68] sm:$0xff]
        %v410 = vld [vmem:[%s356 + $0x70] sm:$0xff]
        %v411 = vld [vmem:[%s356 + $0x78] sm:$0xff]
        %v412 = vld [vmem:[%s356 + $0x80] sm:$0xff]
        %v413 = vld [vmem:[%s356 + $0x88] sm:$0xff]
        %v414 = vld [vmem:[%s356 + $0x90] sm:$0xff]
        %v415 = vld [vmem:[%s356 + $0x98] sm:$0xff]
        %v416 = vld [vmem:[%s356 + $0xa0] sm:$0xff]
        %v417 = vld [vmem:[%s356 + $0xa8] sm:$0xff]
        %v418 = vld [vmem:[%s356 + $0xb0] sm:$0xff]
        %v419 = vld [vmem:[%s356 + $0xb8] sm:$0xff]
        %v420 = vld [vmem:[%s356 + $0xc0] sm:$0xff]
        %v421 = vld [vmem:[%s356 + $0xc8] sm:$0xff]
        %v422 = vld [vmem:[%s356 + $0xd0] sm:$0xff]
        %v423 = vld [vmem:[%s356 + $0xd8] sm:$0xff]
        %v424 = vld [vmem:[%s356 + $0xe0] sm:$0xff]
        %v425 = vld [vmem:[%s356 + $0xe8] sm:$0xff]
        %v426 = vld [vmem:[%s356 + $0xf0] sm:$0xff]
        %v427 = vld [vmem:[%s356 + $0xf8] sm:$0xff]
        %v428 = vpack.c.bf16 %v397, %v396
        %v429 = vpack.c.bf16 %v399, %v398
        %v430 = vpack.c.bf16 %v401, %v400
        %v431 = vpack.c.bf16 %v403, %v402
        %v432 = vpack.c.bf16 %v405, %v404
        %v433 = vpack.c.bf16 %v407, %v406
        %v434 = vpack.c.bf16 %v409, %v408
        %v435 = vpack.c.bf16 %v411, %v410
        %v436 = vpack.c.bf16 %v413, %v412
        %v437 = vpack.c.bf16 %v415, %v414
        %v438 = vpack.c.bf16 %v417, %v416
        %v439 = vpack.c.bf16 %v419, %v418
        %v440 = vpack.c.bf16 %v421, %v420
        %v441 = vpack.c.bf16 %v423, %v422
        %v442 = vpack.c.bf16 %v425, %v424
        %v443 = vpack.c.bf16 %v427, %v426
        %v444 = vld [vmem:[#allocation2] sm:$0xff]
        %v445 = vld [vmem:[#allocation2 + $0x8] sm:$0xff]
        %v446 = vld [vmem:[#allocation2 + $0x10] sm:$0xff]
        %v447 = vld [vmem:[#allocation2 + $0x18] sm:$0xff]
        %v448 = vld [vmem:[#allocation2 + $0x20] sm:$0xff]
        %v449 = vld [vmem:[#allocation2 + $0x28] sm:$0xff]
        %v450 = vld [vmem:[#allocation2 + $0x30] sm:$0xff]
        %v451 = vld [vmem:[#allocation2 + $0x38] sm:$0xff]
        %v452 = vld [vmem:[#allocation2 + $0x40] sm:$0xff]
        %v453 = vld [vmem:[#allocation2 + $0x48] sm:$0xff]
        %v454 = vld [vmem:[#allocation2 + $0x50] sm:$0xff]
        %v455 = vld [vmem:[#allocation2 + $0x58] sm:$0xff]
        %v456 = vld [vmem:[#allocation2 + $0x60] sm:$0xff]
        %v457 = vld [vmem:[#allocation2 + $0x68] sm:$0xff]
        %v458 = vld [vmem:[#allocation2 + $0x70] sm:$0xff]
        %v459 = vld [vmem:[#allocation2 + $0x78] sm:$0xff]
        %v460 = vld [vmem:[#allocation2 + $0x80] sm:$0xff]
        %v461 = vld [vmem:[#allocation2 + $0x88] sm:$0xff]
        %v462 = vld [vmem:[#allocation2 + $0x90] sm:$0xff]
        %v463 = vld [vmem:[#allocation2 + $0x98] sm:$0xff]
        %v464 = vld [vmem:[#allocation2 + $0xa0] sm:$0xff]
        %v465 = vld [vmem:[#allocation2 + $0xa8] sm:$0xff]
        %v466 = vld [vmem:[#allocation2 + $0xb0] sm:$0xff]
        %v467 = vld [vmem:[#allocation2 + $0xb8] sm:$0xff]
        %v468 = vld [vmem:[#allocation2 + $0xc0] sm:$0xff]
        %v469 = vld [vmem:[#allocation2 + $0xc8] sm:$0xff]
        %v470 = vld [vmem:[#allocation2 + $0xd0] sm:$0xff]
        %v471 = vld [vmem:[#allocation2 + $0xd8] sm:$0xff]
        %v472 = vld [vmem:[#allocation2 + $0xe0] sm:$0xff]
        %v473 = vld [vmem:[#allocation2 + $0xe8] sm:$0xff]
        %v474 = vld [vmem:[#allocation2 + $0xf0] sm:$0xff]
        %v475 = vld [vmem:[#allocation2 + $0xf8] sm:$0xff]
        %v476 = vld [vmem:[%s1] sm:$0xf]
        %v477 = vld [vmem:[%s1 + $0x4] sm:$0xf]
        %v478 = vld [vmem:[%s1 + $0x8] sm:$0xf]
        %v479 = vld [vmem:[%s1 + $0xc] sm:$0xf]
        %v480 = vld [vmem:[%s1 + $0x10] sm:$0xf]
        %v481 = vld [vmem:[%s1 + $0x14] sm:$0xf]
        %v482 = vld [vmem:[%s1 + $0x18] sm:$0xf]
        %v483 = vld [vmem:[%s1 + $0x1c] sm:$0xf]
        %v484 = vld [vmem:[%s1 + $0x20] sm:$0xf]
        %v485 = vld [vmem:[%s1 + $0x24] sm:$0xf]
        %v486 = vld [vmem:[%s1 + $0x28] sm:$0xf]
        %v487 = vld [vmem:[%s1 + $0x2c] sm:$0xf]
        %v488 = vld [vmem:[%s1 + $0x30] sm:$0xf]
        %v489 = vld [vmem:[%s1 + $0x34] sm:$0xf]
        %v490 = vld [vmem:[%s1 + $0x38] sm:$0xf]
        %v491 = vld [vmem:[%s1 + $0x3c] sm:$0xf]
        %v508 = vunpack.c.l.b16 %v476
        %v509 = vunpack.c.l.b16 %v477
        %v510 = vunpack.c.l.b16 %v478
        %v511 = vunpack.c.l.b16 %v479
        %v512 = vunpack.c.l.b16 %v480
        %v513 = vunpack.c.l.b16 %v481
        %v514 = vunpack.c.l.b16 %v482
        %v515 = vunpack.c.l.b16 %v483
        %v516 = vunpack.c.l.b16 %v484
        %v517 = vunpack.c.l.b16 %v485
        %v518 = vunpack.c.l.b16 %v486
        %v519 = vunpack.c.l.b16 %v487
        %v520 = vunpack.c.l.b16 %v488
        %v521 = vunpack.c.l.b16 %v489
        %v522 = vunpack.c.l.b16 %v490
        %v523 = vunpack.c.l.b16 %v491
        %v524 = vpack.c.b16 %v509, %v508
        %v525 = vpack.c.b16 %v511, %v510
        %v526 = vpack.c.b16 %v513, %v512
        %v527 = vpack.c.b16 %v515, %v514
        %v528 = vpack.c.b16 %v517, %v516
        %v529 = vpack.c.b16 %v519, %v518
        %v530 = vpack.c.b16 %v521, %v520
        %v531 = vpack.c.b16 %v523, %v522
        %vm532 = vcmask 523264
        %v534 = vsel %vm532, %v524, 0
        %v537 = vsel %vm532, %v525, 0
        %v540 = vsel %vm532, %v526, 0
        %v543 = vsel %vm532, %v527, 0
        %v546 = vsel %vm532, %v528, 0
        %v549 = vsel %vm532, %v529, 0
        %v552 = vsel %vm532, %v530, 0
        %v555 = vsel %vm532, %v531, 0
        %v558 = vsel %vm532, %v428, 0
        %v561 = vsel %vm532, %v429, 0
        %v564 = vsel %vm532, %v430, 0
        %v567 = vsel %vm532, %v431, 0
        %v570 = vsel %vm532, %v432, 0
        %v573 = vsel %vm532, %v433, 0
        %v576 = vsel %vm532, %v434, 0
        %v579 = vsel %vm532, %v435, 0
        %v582 = vsel %vm532, %v436, 0
        %v585 = vsel %vm532, %v437, 0
        %v588 = vsel %vm532, %v438, 0
        %v591 = vsel %vm532, %v439, 0
        %v594 = vsel %vm532, %v440, 0
        %v597 = vsel %vm532, %v441, 0
        %v600 = vsel %vm532, %v442, 0
        %v603 = vsel %vm532, %v443, 0
        %605 = vmatprep.subr.bf16.mxu0 0
        %606 = vmatpush1.bf16.xpose.msra.mxu0 %v558
        %607 = vmatprep.subr.bf16.mxu0 0
        %608 = vmatpush1.bf16.xpose.msra.mxu0 %v561
        %609 = vmatprep.subr.bf16.mxu0 0
        %610 = vmatpush1.bf16.xpose.msra.mxu0 %v564
        %611 = vmatprep.subr.bf16.mxu0 0
        %612 = vmatpush1.bf16.xpose.msra.mxu0 %v567
        %613 = vmatprep.subr.bf16.mxu0 0
        %614 = vmatpush1.bf16.xpose.msra.mxu0 %v570
        %615 = vmatprep.subr.bf16.mxu0 0
        %616 = vmatpush1.bf16.xpose.msra.mxu0 %v573
        %617 = vmatprep.subr.bf16.mxu0 0
        %618 = vmatpush1.bf16.xpose.msra.mxu0 %v576
        %619 = vmatprep.subr.bf16.mxu0 0
        %620 = vmatpush1.bf16.xpose.msra.mxu0 %v579
        %621 = vmatprep.subr.bf16.mxu0 0
        %622 = vmatpush1.bf16.xpose.msra.mxu0 %v582
        %623 = vmatprep.subr.bf16.mxu0 0
        %624 = vmatpush1.bf16.xpose.msra.mxu0 %v585
        %625 = vmatprep.subr.bf16.mxu0 0
        %626 = vmatpush1.bf16.xpose.msra.mxu0 %v588
        %627 = vmatprep.subr.bf16.mxu0 0
        %628 = vmatpush1.bf16.xpose.msra.mxu0 %v591
        %629 = vmatprep.subr.bf16.mxu0 0
        %630 = vmatpush1.bf16.xpose.msra.mxu0 %v594
        %631 = vmatprep.subr.bf16.mxu0 0
        %632 = vmatpush1.bf16.xpose.msra.mxu0 %v597
        %633 = vmatprep.subr.bf16.mxu0 0
        %634 = vmatpush1.bf16.xpose.msra.mxu0 %v600
        %635 = vmatprep.subr.bf16.mxu0 0
        %636 = vmatpush1.bf16.xpose.msra.mxu0 %v603
        %637 = vmatprep.mubr.bf16.mxu0 0
        %638 = vmatmul.mubr.bf16.gmra.mrb[0].mxu0 %v534
        %v639 = vpop.f32.mrb[0].mxu0
        %v640 = vadd.f32 0.0, %v639
        %v641 = vpop.f32.mrb[0].mxu0
        %v642 = vadd.f32 0.0, %v641
        %v643 = vpop.f32.mrb[0].mxu0
        %v644 = vadd.f32 0.0, %v643
        %v645 = vpop.f32.mrb[0].mxu0
        %v646 = vadd.f32 0.0, %v645
        %647 = vmatprep.mubr.bf16.mxu0 0
        %648 = vmatmul.mubr.bf16.gmra.mrb[0].mxu0 %v537
        %v649 = vpop.f32.mrb[0].mxu0
        %v650 = vadd.f32 0.0, %v649
        %v651 = vpop.f32.mrb[0].mxu0
        %v652 = vadd.f32 0.0, %v651
        %v653 = vpop.f32.mrb[0].mxu0
        %v654 = vadd.f32 0.0, %v653
        %v655 = vpop.f32.mrb[0].mxu0
        %v656 = vadd.f32 0.0, %v655
        %657 = vmatprep.mubr.bf16.mxu0 0
        %658 = vmatmul.mubr.bf16.gmra.mrb[0].mxu0 %v540
        %v659 = vpop.f32.mrb[0].mxu0
        %v660 = vadd.f32 0.0, %v659
        %v661 = vpop.f32.mrb[0].mxu0
        %v662 = vadd.f32 0.0, %v661
        %v663 = vpop.f32.mrb[0].mxu0
        %v664 = vadd.f32 0.0, %v663
        %v665 = vpop.f32.mrb[0].mxu0
        %v666 = vadd.f32 0.0, %v665
        %667 = vmatprep.mubr.bf16.mxu0 0
        %668 = vmatmul.mubr.bf16.gmra.mrb[0].mxu0 %v543
        %v669 = vpop.f32.mrb[0].mxu0
        %v670 = vadd.f32 0.0, %v669
        %v671 = vpop.f32.mrb[0].mxu0
        %v672 = vadd.f32 0.0, %v671
        %v673 = vpop.f32.mrb[0].mxu0
        %v674 = vadd.f32 0.0, %v673
        %v675 = vpop.f32.mrb[0].mxu0
        %v676 = vadd.f32 0.0, %v675
        %677 = vmatprep.mubr.bf16.mxu0 0
        %678 = vmatmul.mubr.bf16.gmra.mrb[0].mxu0 %v546
        %v679 = vpop.f32.mrb[0].mxu0
        %v680 = vadd.f32 0.0, %v679
        %v681 = vpop.f32.mrb[0].mxu0
        %v682 = vadd.f32 0.0, %v681
        %v683 = vpop.f32.mrb[0].mxu0
        %v684 = vadd.f32 0.0, %v683
        %v685 = vpop.f32.mrb[0].mxu0
        %v686 = vadd.f32 0.0, %v685
        %687 = vmatprep.mubr.bf16.mxu0 0
        %688 = vmatmul.mubr.bf16.gmra.mrb[0].mxu0 %v549
        %v689 = vpop.f32.mrb[0].mxu0
        %v690 = vadd.f32 0.0, %v689
        %v691 = vpop.f32.mrb[0].mxu0
        %v692 = vadd.f32 0.0, %v691
        %v693 = vpop.f32.mrb[0].mxu0
        %v694 = vadd.f32 0.0, %v693
        %v695 = vpop.f32.mrb[0].mxu0
        %v696 = vadd.f32 0.0, %v695
        %697 = vmatprep.mubr.bf16.mxu0 0
        %698 = vmatmul.mubr.bf16.gmra.mrb[0].mxu0 %v552
        %v699 = vpop.f32.mrb[0].mxu0
        %v700 = vadd.f32 0.0, %v699
        %v701 = vpop.f32.mrb[0].mxu0
        %v702 = vadd.f32 0.0, %v701
        %v703 = vpop.f32.mrb[0].mxu0
        %v704 = vadd.f32 0.0, %v703
        %v705 = vpop.f32.mrb[0].mxu0
        %v706 = vadd.f32 0.0, %v705
        %707 = vmatprep.mubr.bf16.mxu0 0
        %708 = vmatmul.mubr.bf16.gmra.mrb[0].mxu0 %v555
        %v709 = vpop.f32.mrb[0].mxu0
        %v710 = vadd.f32 0.0, %v709
        %v711 = vpop.f32.mrb[0].mxu0
        %v712 = vadd.f32 0.0, %v711
        %v713 = vpop.f32.mrb[0].mxu0
        %v714 = vadd.f32 0.0, %v713
        %v715 = vpop.f32.mrb[0].mxu0
        %v716 = vadd.f32 0.0, %v715
        %717 = vdwg.mxu0
        %v718 = vadd.f32 %v444, %v640
        %v719 = vadd.f32 %v445, %v642
        %v720 = vadd.f32 %v446, %v644
        %v721 = vadd.f32 %v447, %v646
        %v722 = vadd.f32 %v448, %v650
        %v723 = vadd.f32 %v449, %v652
        %v724 = vadd.f32 %v450, %v654
        %v725 = vadd.f32 %v451, %v656
        %v726 = vadd.f32 %v452, %v660
        %v727 = vadd.f32 %v453, %v662
        %v728 = vadd.f32 %v454, %v664
        %v729 = vadd.f32 %v455, %v666
        %v730 = vadd.f32 %v456, %v670
        %v731 = vadd.f32 %v457, %v672
        %v732 = vadd.f32 %v458, %v674
        %v733 = vadd.f32 %v459, %v676
        %v734 = vadd.f32 %v460, %v680
        %v735 = vadd.f32 %v461, %v682
        %v736 = vadd.f32 %v462, %v684
        %v737 = vadd.f32 %v463, %v686
        %v738 = vadd.f32 %v464, %v690
        %v739 = vadd.f32 %v465, %v692
        %v740 = vadd.f32 %v466, %v694
        %v741 = vadd.f32 %v467, %v696
        %v742 = vadd.f32 %v468, %v700
        %v743 = vadd.f32 %v469, %v702
        %v744 = vadd.f32 %v470, %v704
        %v745 = vadd.f32 %v471, %v706
        %v746 = vadd.f32 %v472, %v710
        %v747 = vadd.f32 %v473, %v712
        %v748 = vadd.f32 %v474, %v714
        %v749 = vadd.f32 %v475, %v716
        %750 = vst [vmem:[#allocation2] sm:$0xff] %v718
        %751 = vst [vmem:[#allocation2 + $0x8] sm:$0xff] %v719
        %752 = vst [vmem:[#allocation2 + $0x10] sm:$0xff] %v720
        %753 = vst [vmem:[#allocation2 + $0x18] sm:$0xff] %v721
        %754 = vst [vmem:[#allocation2 + $0x20] sm:$0xff] %v722
        %755 = vst [vmem:[#allocation2 + $0x28] sm:$0xff] %v723
        %756 = vst [vmem:[#allocation2 + $0x30] sm:$0xff] %v724
        %757 = vst [vmem:[#allocation2 + $0x38] sm:$0xff] %v725
        %758 = vst [vmem:[#allocation2 + $0x40] sm:$0xff] %v726
        %759 = vst [vmem:[#allocation2 + $0x48] sm:$0xff] %v727
        %760 = vst [vmem:[#allocation2 + $0x50] sm:$0xff] %v728
        %761 = vst [vmem:[#allocation2 + $0x58] sm:$0xff] %v729
        %762 = vst [vmem:[#allocation2 + $0x60] sm:$0xff] %v730
        %763 = vst [vmem:[#allocation2 + $0x68] sm:$0xff] %v731
        %764 = vst [vmem:[#allocation2 + $0x70] sm:$0xff] %v732
        %765 = vst [vmem:[#allocation2 + $0x78] sm:$0xff] %v733
        %766 = vst [vmem:[#allocation2 + $0x80] sm:$0xff] %v734
        %767 = vst [vmem:[#allocation2 + $0x88] sm:$0xff] %v735
        %768 = vst [vmem:[#allocation2 + $0x90] sm:$0xff] %v736
        %769 = vst [vmem:[#allocation2 + $0x98] sm:$0xff] %v737
        %770 = vst [vmem:[#allocation2 + $0xa0] sm:$0xff] %v738
        %771 = vst [vmem:[#allocation2 + $0xa8] sm:$0xff] %v739
        %772 = vst [vmem:[#allocation2 + $0xb0] sm:$0xff] %v740
        %773 = vst [vmem:[#allocation2 + $0xb8] sm:$0xff] %v741
        %774 = vst [vmem:[#allocation2 + $0xc0] sm:$0xff] %v742
        %775 = vst [vmem:[#allocation2 + $0xc8] sm:$0xff] %v743
        %776 = vst [vmem:[#allocation2 + $0xd0] sm:$0xff] %v744
        %777 = vst [vmem:[#allocation2 + $0xd8] sm:$0xff] %v745
        %778 = vst [vmem:[#allocation2 + $0xe0] sm:$0xff] %v746
        %779 = vst [vmem:[#allocation2 + $0xe8] sm:$0xff] %v747
        %780 = vst [vmem:[#allocation2 + $0xf0] sm:$0xff] %v748
        %781 = vst [vmem:[#allocation2 + $0xf8] sm:$0xff] %v749
        // Predicated region
        $region61: #{tpu_custom_call.1} parent=55 // pred_check
          %p782 = pneg %p360
        $region62: #{tpu_custom_call.1} parent=55 // pred_check_branch
          %784 = sbr.rel (%p782) target = $region64
        $region63: #{tpu_custom_call.1} parent=55 // pred_region
          %v785 = vld [vmem:[#allocation2] sm:$0xff]
          %v786 = vld [vmem:[#allocation2 + $0x8] sm:$0xff]
          %v787 = vld [vmem:[#allocation2 + $0x10] sm:$0xff]
          %v788 = vld [vmem:[#allocation2 + $0x18] sm:$0xff]
          %v789 = vld [vmem:[#allocation2 + $0x20] sm:$0xff]
          %v790 = vld [vmem:[#allocation2 + $0x28] sm:$0xff]
          %v791 = vld [vmem:[#allocation2 + $0x30] sm:$0xff]
          %v792 = vld [vmem:[#allocation2 + $0x38] sm:$0xff]
          %v793 = vld [vmem:[#allocation2 + $0x40] sm:$0xff]
          %v794 = vld [vmem:[#allocation2 + $0x48] sm:$0xff]
          %v795 = vld [vmem:[#allocation2 + $0x50] sm:$0xff]
          %v796 = vld [vmem:[#allocation2 + $0x58] sm:$0xff]
          %v797 = vld [vmem:[#allocation2 + $0x60] sm:$0xff]
          %v798 = vld [vmem:[#allocation2 + $0x68] sm:$0xff]
          %v799 = vld [vmem:[#allocation2 + $0x70] sm:$0xff]
          %v800 = vld [vmem:[#allocation2 + $0x78] sm:$0xff]
          %v801 = vld [vmem:[#allocation2 + $0x80] sm:$0xff]
          %v802 = vld [vmem:[#allocation2 + $0x88] sm:$0xff]
          %v803 = vld [vmem:[#allocation2 + $0x90] sm:$0xff]
          %v804 = vld [vmem:[#allocation2 + $0x98] sm:$0xff]
          %v805 = vld [vmem:[#allocation2 + $0xa0] sm:$0xff]
          %v806 = vld [vmem:[#allocation2 + $0xa8] sm:$0xff]
          %v807 = vld [vmem:[#allocation2 + $0xb0] sm:$0xff]
          %v808 = vld [vmem:[#allocation2 + $0xb8] sm:$0xff]
          %v809 = vld [vmem:[#allocation2 + $0xc0] sm:$0xff]
          %v810 = vld [vmem:[#allocation2 + $0xc8] sm:$0xff]
          %v811 = vld [vmem:[#allocation2 + $0xd0] sm:$0xff]
          %v812 = vld [vmem:[#allocation2 + $0xd8] sm:$0xff]
          %v813 = vld [vmem:[#allocation2 + $0xe0] sm:$0xff]
          %v814 = vld [vmem:[#allocation2 + $0xe8] sm:$0xff]
          %v815 = vld [vmem:[#allocation2 + $0xf0] sm:$0xff]
          %v816 = vld [vmem:[#allocation2 + $0xf8] sm:$0xff]
          %v817 = vld [vmem:[%s2] sm:$0xff]
          %v818 = vld [vmem:[%s2 + $0x8] sm:$0xff]
          %v819 = vld [vmem:[%s2 + $0x10] sm:$0xff]
          %v820 = vld [vmem:[%s2 + $0x18] sm:$0xff]
          %v821 = vld [vmem:[%s2 + $0x20] sm:$0xff]
          %v822 = vld [vmem:[%s2 + $0x28] sm:$0xff]
          %v823 = vld [vmem:[%s2 + $0x30] sm:$0xff]
          %v824 = vld [vmem:[%s2 + $0x38] sm:$0xff]
          %v825 = vld [vmem:[%s2 + $0x40] sm:$0xff]
          %v826 = vld [vmem:[%s2 + $0x48] sm:$0xff]
          %v827 = vld [vmem:[%s2 + $0x50] sm:$0xff]
          %v828 = vld [vmem:[%s2 + $0x58] sm:$0xff]
          %v829 = vld [vmem:[%s2 + $0x60] sm:$0xff]
          %v830 = vld [vmem:[%s2 + $0x68] sm:$0xff]
          %v831 = vld [vmem:[%s2 + $0x70] sm:$0xff]
          %v832 = vld [vmem:[%s2 + $0x78] sm:$0xff]
          %834 = vset.pattern.permute.xlu0 0
          %835 = vperm.xlu0 %834, %v817
          %v836 = vpop.permute.xlu0 %835
          %839 = vset.pattern.permute.xlu0 0
          %840 = vperm.xlu0 %839, %v818
          %v841 = vpop.permute.xlu0 %840
          %844 = vset.pattern.permute.xlu0 0
          %845 = vperm.xlu0 %844, %v819
          %v846 = vpop.permute.xlu0 %845
          %849 = vset.pattern.permute.xlu0 0
          %850 = vperm.xlu0 %849, %v820
          %v851 = vpop.permute.xlu0 %850
          %854 = vset.pattern.permute.xlu0 0
          %855 = vperm.xlu0 %854, %v821
          %v856 = vpop.permute.xlu0 %855
          %859 = vset.pattern.permute.xlu0 0
          %860 = vperm.xlu0 %859, %v822
          %v861 = vpop.permute.xlu0 %860
          %864 = vset.pattern.permute.xlu0 0
          %865 = vperm.xlu0 %864, %v823
          %v866 = vpop.permute.xlu0 %865
          %869 = vset.pattern.permute.xlu0 0
          %870 = vperm.xlu0 %869, %v824
          %v871 = vpop.permute.xlu0 %870
          %874 = vset.pattern.permute.xlu0 0
          %875 = vperm.xlu0 %874, %v825
          %v876 = vpop.permute.xlu0 %875
          %879 = vset.pattern.permute.xlu0 0
          %880 = vperm.xlu0 %879, %v826
          %v881 = vpop.permute.xlu0 %880
          %884 = vset.pattern.permute.xlu0 0
          %885 = vperm.xlu0 %884, %v827
          %v886 = vpop.permute.xlu0 %885
          %889 = vset.pattern.permute.xlu0 0
          %890 = vperm.xlu0 %889, %v828
          %v891 = vpop.permute.xlu0 %890
          %894 = vset.pattern.permute.xlu0 0
          %895 = vperm.xlu0 %894, %v829
          %v896 = vpop.permute.xlu0 %895
          %899 = vset.pattern.permute.xlu0 0
          %900 = vperm.xlu0 %899, %v830
          %v901 = vpop.permute.xlu0 %900
          %904 = vset.pattern.permute.xlu0 0
          %905 = vperm.xlu0 %904, %v831
          %v906 = vpop.permute.xlu0 %905
          %909 = vset.pattern.permute.xlu0 0
          %910 = vperm.xlu0 %909, %v832
          %v911 = vpop.permute.xlu0 %910
          %v913 = vadd.f32 %v785, %v836
          %v914 = vadd.f32 %v786, %v836
          %v915 = vadd.f32 %v787, %v841
          %v916 = vadd.f32 %v788, %v841
          %v917 = vadd.f32 %v789, %v846
          %v918 = vadd.f32 %v790, %v846
          %v919 = vadd.f32 %v791, %v851
          %v920 = vadd.f32 %v792, %v851
          %v921 = vadd.f32 %v793, %v856
          %v922 = vadd.f32 %v794, %v856
          %v923 = vadd.f32 %v795, %v861
          %v924 = vadd.f32 %v796, %v861
          %v925 = vadd.f32 %v797, %v866
          %v926 = vadd.f32 %v798, %v866
          %v927 = vadd.f32 %v799, %v871
          %v928 = vadd.f32 %v800, %v871
          %v929 = vadd.f32 %v801, %v876
          %v930 = vadd.f32 %v802, %v876
          %v931 = vadd.f32 %v803, %v881
          %v932 = vadd.f32 %v804, %v881
          %v933 = vadd.f32 %v805, %v886
          %v934 = vadd.f32 %v806, %v886
          %v935 = vadd.f32 %v807, %v891
          %v936 = vadd.f32 %v808, %v891
          %v937 = vadd.f32 %v809, %v896
          %v938 = vadd.f32 %v810, %v896
          %v939 = vadd.f32 %v811, %v901
          %v940 = vadd.f32 %v812, %v901
          %v941 = vadd.f32 %v813, %v906
          %v942 = vadd.f32 %v814, %v906
          %v943 = vadd.f32 %v815, %v911
          %v944 = vadd.f32 %v816, %v911
          %vm945 = vcmp.gt.f32.partialorder %v913, 0.0
          %vm946 = vcmp.gt.f32.partialorder %v914, 0.0
          %vm947 = vcmp.gt.f32.partialorder %v915, 0.0
          %vm948 = vcmp.gt.f32.partialorder %v916, 0.0
          %vm949 = vcmp.gt.f32.partialorder %v917, 0.0
          %vm950 = vcmp.gt.f32.partialorder %v918, 0.0
          %vm951 = vcmp.gt.f32.partialorder %v919, 0.0
          %vm952 = vcmp.gt.f32.partialorder %v920, 0.0
          %vm953 = vcmp.gt.f32.partialorder %v921, 0.0
          %vm954 = vcmp.gt.f32.partialorder %v922, 0.0
          %vm955 = vcmp.gt.f32.partialorder %v923, 0.0
          %vm956 = vcmp.gt.f32.partialorder %v924, 0.0
          %vm957 = vcmp.gt.f32.partialorder %v925, 0.0
          %vm958 = vcmp.gt.f32.partialorder %v926, 0.0
          %vm959 = vcmp.gt.f32.partialorder %v927, 0.0
          %vm960 = vcmp.gt.f32.partialorder %v928, 0.0
          %vm961 = vcmp.gt.f32.partialorder %v929, 0.0
          %vm962 = vcmp.gt.f32.partialorder %v930, 0.0
          %vm963 = vcmp.gt.f32.partialorder %v931, 0.0
          %vm964 = vcmp.gt.f32.partialorder %v932, 0.0
          %vm965 = vcmp.gt.f32.partialorder %v933, 0.0
          %vm966 = vcmp.gt.f32.partialorder %v934, 0.0
          %vm967 = vcmp.gt.f32.partialorder %v935, 0.0
          %vm968 = vcmp.gt.f32.partialorder %v936, 0.0
          %vm969 = vcmp.gt.f32.partialorder %v937, 0.0
          %vm970 = vcmp.gt.f32.partialorder %v938, 0.0
          %vm971 = vcmp.gt.f32.partialorder %v939, 0.0
          %vm972 = vcmp.gt.f32.partialorder %v940, 0.0
          %vm973 = vcmp.gt.f32.partialorder %v941, 0.0
          %vm974 = vcmp.gt.f32.partialorder %v942, 0.0
          %vm975 = vcmp.gt.f32.partialorder %v943, 0.0
          %vm976 = vcmp.gt.f32.partialorder %v944, 0.0
          %v977 = vmul.f32 %v913, 0.1
          %v978 = vmul.f32 %v914, 0.1
          %v979 = vmul.f32 %v915, 0.1
          %v980 = vmul.f32 %v916, 0.1
          %v981 = vmul.f32 %v917, 0.1
          %v982 = vmul.f32 %v918, 0.1
          %v983 = vmul.f32 %v919, 0.1
          %v984 = vmul.f32 %v920, 0.1
          %v985 = vmul.f32 %v921, 0.1
          %v986 = vmul.f32 %v922, 0.1
          %v987 = vmul.f32 %v923, 0.1
          %v988 = vmul.f32 %v924, 0.1
          %v989 = vmul.f32 %v925, 0.1
          %v990 = vmul.f32 %v926, 0.1
          %v991 = vmul.f32 %v927, 0.1
          %v992 = vmul.f32 %v928, 0.1
          %v993 = vmul.f32 %v929, 0.1
          %v994 = vmul.f32 %v930, 0.1
          %v995 = vmul.f32 %v931, 0.1
          %v996 = vmul.f32 %v932, 0.1
          %v997 = vmul.f32 %v933, 0.1
          %v998 = vmul.f32 %v934, 0.1
          %v999 = vmul.f32 %v935, 0.1
          %v1000 = vmul.f32 %v936, 0.1
          %v1001 = vmul.f32 %v937, 0.1
          %v1002 = vmul.f32 %v938, 0.1
          %v1003 = vmul.f32 %v939, 0.1
          %v1004 = vmul.f32 %v940, 0.1
          %v1005 = vmul.f32 %v941, 0.1
          %v1006 = vmul.f32 %v942, 0.1
          %v1007 = vmul.f32 %v943, 0.1
          %v1008 = vmul.f32 %v944, 0.1
          %v1009 = vsel %vm945, %v913, %v977
          %v1010 = vsel %vm946, %v914, %v978
          %v1011 = vsel %vm947, %v915, %v979
          %v1012 = vsel %vm948, %v916, %v980
          %v1013 = vsel %vm949, %v917, %v981
          %v1014 = vsel %vm950, %v918, %v982
          %v1015 = vsel %vm951, %v919, %v983
          %v1016 = vsel %vm952, %v920, %v984
          %v1017 = vsel %vm953, %v921, %v985
          %v1018 = vsel %vm954, %v922, %v986
          %v1019 = vsel %vm955, %v923, %v987
          %v1020 = vsel %vm956, %v924, %v988
          %v1021 = vsel %vm957, %v925, %v989
          %v1022 = vsel %vm958, %v926, %v990
          %v1023 = vsel %vm959, %v927, %v991
          %v1024 = vsel %vm960, %v928, %v992
          %v1025 = vsel %vm961, %v929, %v993
          %v1026 = vsel %vm962, %v930, %v994
          %v1027 = vsel %vm963, %v931, %v995
          %v1028 = vsel %vm964, %v932, %v996
          %v1029 = vsel %vm965, %v933, %v997
          %v1030 = vsel %vm966, %v934, %v998
          %v1031 = vsel %vm967, %v935, %v999
          %v1032 = vsel %vm968, %v936, %v1000
          %v1033 = vsel %vm969, %v937, %v1001
          %v1034 = vsel %vm970, %v938, %v1002
          %v1035 = vsel %vm971, %v939, %v1003
          %v1036 = vsel %vm972, %v940, %v1004
          %v1037 = vsel %vm973, %v941, %v1005
          %v1038 = vsel %vm974, %v942, %v1006
          %v1039 = vsel %vm975, %v943, %v1007
          %v1040 = vsel %vm976, %v944, %v1008
          %v1041 = vld [vmem:[%s3] sm:$0xf]
          %v1042 = vld [vmem:[%s3 + $0x4] sm:$0xf]
          %v1043 = vld [vmem:[%s3 + $0x8] sm:$0xf]
          %v1044 = vld [vmem:[%s3 + $0xc] sm:$0xf]
          %v1045 = vld [vmem:[%s3 + $0x10] sm:$0xf]
          %v1046 = vld [vmem:[%s3 + $0x14] sm:$0xf]
          %v1047 = vld [vmem:[%s3 + $0x18] sm:$0xf]
          %v1048 = vld [vmem:[%s3 + $0x1c] sm:$0xf]
          %v1049 = vpack.c.bf16 %v1011, %v1009
          %v1050 = vpack.c.bf16 %v1012, %v1010
          %v1051 = vpack.c.bf16 %v1015, %v1013
          %v1052 = vpack.c.bf16 %v1016, %v1014
          %v1053 = vpack.c.bf16 %v1019, %v1017
          %v1054 = vpack.c.bf16 %v1020, %v1018
          %v1055 = vpack.c.bf16 %v1023, %v1021
          %v1056 = vpack.c.bf16 %v1024, %v1022
          %v1057 = vpack.c.bf16 %v1027, %v1025
          %v1058 = vpack.c.bf16 %v1028, %v1026
          %v1059 = vpack.c.bf16 %v1031, %v1029
          %v1060 = vpack.c.bf16 %v1032, %v1030
          %v1061 = vpack.c.bf16 %v1035, %v1033
          %v1062 = vpack.c.bf16 %v1036, %v1034
          %v1063 = vpack.c.bf16 %v1039, %v1037
          %v1064 = vpack.c.bf16 %v1040, %v1038
          %v1065 = vld [vmem:[%s4] sm:$0xff]
          %v1066 = vld [vmem:[%s4 + $0x8] sm:$0xff]
          %v1067 = vld [vmem:[%s4 + $0x10] sm:$0xff]
          %v1068 = vld [vmem:[%s4 + $0x18] sm:$0xff]
          %v1069 = vld [vmem:[%s4 + $0x20] sm:$0xff]
          %v1070 = vld [vmem:[%s4 + $0x28] sm:$0xff]
          %v1071 = vld [vmem:[%s4 + $0x30] sm:$0xff]
          %v1072 = vld [vmem:[%s4 + $0x38] sm:$0xff]
          %1074 = vset.pattern.permute.xlu0 0
          %1075 = vperm.xlu0 %1074, %v1065
          %v1076 = vpop.permute.xlu0 %1075
          %1079 = vset.pattern.permute.xlu0 0
          %1080 = vperm.xlu0 %1079, %v1066
          %v1081 = vpop.permute.xlu0 %1080
          %1084 = vset.pattern.permute.xlu0 0
          %1085 = vperm.xlu0 %1084, %v1067
          %v1086 = vpop.permute.xlu0 %1085
          %1089 = vset.pattern.permute.xlu0 0
          %1090 = vperm.xlu0 %1089, %v1068
          %v1091 = vpop.permute.xlu0 %1090
          %1094 = vset.pattern.permute.xlu0 0
          %1095 = vperm.xlu0 %1094, %v1069
          %v1096 = vpop.permute.xlu0 %1095
          %1099 = vset.pattern.permute.xlu0 0
          %1100 = vperm.xlu0 %1099, %v1070
          %v1101 = vpop.permute.xlu0 %1100
          %1104 = vset.pattern.permute.xlu0 0
          %1105 = vperm.xlu0 %1104, %v1071
          %v1106 = vpop.permute.xlu0 %1105
          %1109 = vset.pattern.permute.xlu0 0
          %1110 = vperm.xlu0 %1109, %v1072
          %v1111 = vpop.permute.xlu0 %1110
          %v1121 = vunpack.c.l.b16 %v1041
          %v1122 = vunpack.c.l.b16 %v1042
          %v1123 = vunpack.c.l.b16 %v1043
          %v1124 = vunpack.c.l.b16 %v1044
          %v1125 = vunpack.c.l.b16 %v1045
          %v1126 = vunpack.c.l.b16 %v1046
          %v1127 = vunpack.c.l.b16 %v1047
          %v1128 = vunpack.c.l.b16 %v1048
          %v1129 = vpack.c.b16 %v1122, %v1121
          %v1130 = vpack.c.b16 %v1124, %v1123
          %v1131 = vpack.c.b16 %v1126, %v1125
          %v1132 = vpack.c.b16 %v1128, %v1127
          %1137 = vmatprep.subr.bf16.mxu0 %v1050
          %1138 = vmatpush1.bf16.msra.mxu0 %v1049
          %1139 = vmatprep.subr.bf16.mxu0 %v1052
          %1140 = vmatpush1.bf16.msra.mxu0 %v1051
          %1141 = vmatprep.subr.bf16.mxu0 %v1054
          %1142 = vmatpush1.bf16.msra.mxu0 %v1053
          %1143 = vmatprep.subr.bf16.mxu0 %v1056
          %1144 = vmatpush1.bf16.msra.mxu0 %v1055
          %1145 = vmatprep.subr.bf16.mxu0 %v1058
          %1146 = vmatpush1.bf16.msra.mxu0 %v1057
          %1147 = vmatprep.subr.bf16.mxu0 %v1060
          %1148 = vmatpush1.bf16.msra.mxu0 %v1059
          %1149 = vmatprep.subr.bf16.mxu0 %v1062
          %1150 = vmatpush1.bf16.msra.mxu0 %v1061
          %1151 = vmatprep.subr.bf16.mxu0 %v1064
          %1152 = vmatpush1.bf16.msra.mxu0 %v1063
          %1153 = vmatprep.subr.bf16.mxu0 0
          %1154 = vmatpush1.bf16.msra.mxu0 0
          %1155 = vmatprep.subr.bf16.mxu0 0
          %1156 = vmatpush1.bf16.msra.mxu0 0
          %1157 = vmatprep.subr.bf16.mxu0 0
          %1158 = vmatpush1.bf16.msra.mxu0 0
          %1159 = vmatprep.subr.bf16.mxu0 0
          %1160 = vmatpush1.bf16.msra.mxu0 0
          %1161 = vmatprep.subr.bf16.mxu0 0
          %1162 = vmatpush1.bf16.msra.mxu0 0
          %1163 = vmatprep.subr.bf16.mxu0 0
          %1164 = vmatpush1.bf16.msra.mxu0 0
          %1165 = vmatprep.subr.bf16.mxu0 0
          %1166 = vmatpush1.bf16.msra.mxu0 0
          %1167 = vmatprep.subr.bf16.mxu0 0
          %1168 = vmatpush1.bf16.msra.mxu0 0
          %1169 = vmatprep.mubr.bf16.mxu0 0
          %1170 = vmatmul.mubr.bf16.gmra.mrb[0].mxu0 %v1129
          %v1171 = vpop.f32.mrb[0].mxu0
          %v1172 = vadd.f32 %v1076, %v1171
          %v1173 = vpop.f32.mrb[0].mxu0
          %v1174 = vadd.f32 %v1076, %v1173
          %v1175 = vpop.f32.mrb[0].mxu0
          %v1176 = vadd.f32 %v1081, %v1175
          %v1177 = vpop.f32.mrb[0].mxu0
          %v1178 = vadd.f32 %v1081, %v1177
          %1179 = vmatprep.mubr.bf16.mxu0 0
          %1180 = vmatmul.mubr.bf16.gmra.mrb[0].mxu0 %v1130
          %v1181 = vpop.f32.mrb[0].mxu0
          %v1182 = vadd.f32 %v1086, %v1181
          %v1183 = vpop.f32.mrb[0].mxu0
          %v1184 = vadd.f32 %v1086, %v1183
          %v1185 = vpop.f32.mrb[0].mxu0
          %v1186 = vadd.f32 %v1091, %v1185
          %v1187 = vpop.f32.mrb[0].mxu0
          %v1188 = vadd.f32 %v1091, %v1187
          %1189 = vmatprep.mubr.bf16.mxu0 0
          %1190 = vmatmul.mubr.bf16.gmra.mrb[0].mxu0 %v1131
          %v1191 = vpop.f32.mrb[0].mxu0
          %v1192 = vadd.f32 %v1096, %v1191
          %v1193 = vpop.f32.mrb[0].mxu0
          %v1194 = vadd.f32 %v1096, %v1193
          %v1195 = vpop.f32.mrb[0].mxu0
          %v1196 = vadd.f32 %v1101, %v1195
          %v1197 = vpop.f32.mrb[0].mxu0
          %v1198 = vadd.f32 %v1101, %v1197
          %1199 = vmatprep.mubr.bf16.mxu0 0
          %1200 = vmatmul.mubr.bf16.gmra.mrb[0].mxu0 %v1132
          %v1201 = vpop.f32.mrb[0].mxu0
          %v1202 = vadd.f32 %v1106, %v1201
          %v1203 = vpop.f32.mrb[0].mxu0
          %v1204 = vadd.f32 %v1106, %v1203
          %v1205 = vpop.f32.mrb[0].mxu0
          %v1206 = vadd.f32 %v1111, %v1205
          %v1207 = vpop.f32.mrb[0].mxu0
          %v1208 = vadd.f32 %v1111, %v1207
          %1209 = vdwg.mxu0
          %vm1210 = vcmp.gt.f32.partialorder %v1172, 0.0
          %vm1211 = vcmp.gt.f32.partialorder %v1174, 0.0
          %vm1212 = vcmp.gt.f32.partialorder %v1176, 0.0
          %vm1213 = vcmp.gt.f32.partialorder %v1178, 0.0
          %vm1214 = vcmp.gt.f32.partialorder %v1182, 0.0
          %vm1215 = vcmp.gt.f32.partialorder %v1184, 0.0
          %vm1216 = vcmp.gt.f32.partialorder %v1186, 0.0
          %vm1217 = vcmp.gt.f32.partialorder %v1188, 0.0
          %vm1218 = vcmp.gt.f32.partialorder %v1192, 0.0
          %vm1219 = vcmp.gt.f32.partialorder %v1194, 0.0
          %vm1220 = vcmp.gt.f32.partialorder %v1196, 0.0
          %vm1221 = vcmp.gt.f32.partialorder %v1198, 0.0
          %vm1222 = vcmp.gt.f32.partialorder %v1202, 0.0
          %vm1223 = vcmp.gt.f32.partialorder %v1204, 0.0
          %vm1224 = vcmp.gt.f32.partialorder %v1206, 0.0
          %vm1225 = vcmp.gt.f32.partialorder %v1208, 0.0
          %v1226 = vmul.f32 %v1172, 0.1
          %v1227 = vmul.f32 %v1174, 0.1
          %v1228 = vmul.f32 %v1176, 0.1
          %v1229 = vmul.f32 %v1178, 0.1
          %v1230 = vmul.f32 %v1182, 0.1
          %v1231 = vmul.f32 %v1184, 0.1
          %v1232 = vmul.f32 %v1186, 0.1
          %v1233 = vmul.f32 %v1188, 0.1
          %v1234 = vmul.f32 %v1192, 0.1
          %v1235 = vmul.f32 %v1194, 0.1
          %v1236 = vmul.f32 %v1196, 0.1
          %v1237 = vmul.f32 %v1198, 0.1
          %v1238 = vmul.f32 %v1202, 0.1
          %v1239 = vmul.f32 %v1204, 0.1
          %v1240 = vmul.f32 %v1206, 0.1
          %v1241 = vmul.f32 %v1208, 0.1
          %v1242 = vsel %vm1210, %v1172, %v1226
          %v1243 = vsel %vm1211, %v1174, %v1227
          %v1244 = vsel %vm1212, %v1176, %v1228
          %v1245 = vsel %vm1213, %v1178, %v1229
          %v1246 = vsel %vm1214, %v1182, %v1230
          %v1247 = vsel %vm1215, %v1184, %v1231
          %v1248 = vsel %vm1216, %v1186, %v1232
          %v1249 = vsel %vm1217, %v1188, %v1233
          %v1250 = vsel %vm1218, %v1192, %v1234
          %v1251 = vsel %vm1219, %v1194, %v1235
          %v1252 = vsel %vm1220, %v1196, %v1236
          %v1253 = vsel %vm1221, %v1198, %v1237
          %v1254 = vsel %vm1222, %v1202, %v1238
          %v1255 = vsel %vm1223, %v1204, %v1239
          %v1256 = vsel %vm1224, %v1206, %v1240
          %v1257 = vsel %vm1225, %v1208, %v1241
          %v1258 = vld [vmem:[%s5] sm:$0xf]
          %v1259 = vld [vmem:[%s5 + $0x4] sm:$0xf]
          %v1260 = vld [vmem:[%s5 + $0x8] sm:$0xf]
          %v1261 = vld [vmem:[%s5 + $0xc] sm:$0xf]
          %v1262 = vpack.c.bf16 %v1244, %v1242
          %v1263 = vpack.c.bf16 %v1245, %v1243
          %v1264 = vpack.c.bf16 %v1248, %v1246
          %v1265 = vpack.c.bf16 %v1249, %v1247
          %v1266 = vpack.c.bf16 %v1252, %v1250
          %v1267 = vpack.c.bf16 %v1253, %v1251
          %v1268 = vpack.c.bf16 %v1256, %v1254
          %v1269 = vpack.c.bf16 %v1257, %v1255
          %v1270 = vld [vmem:[%s6] sm:$0xff]
          %v1271 = vld [vmem:[%s6 + $0x8] sm:$0xff]
          %v1272 = vld [vmem:[%s6 + $0x10] sm:$0xff]
          %v1273 = vld [vmem:[%s6 + $0x18] sm:$0xff]
          %1275 = vset.pattern.permute.xlu0 0
          %1276 = vperm.xlu0 %1275, %v1270
          %v1277 = vpop.permute.xlu0 %1276
          %1280 = vset.pattern.permute.xlu0 0
          %1281 = vperm.xlu0 %1280, %v1271
          %v1282 = vpop.permute.xlu0 %1281
          %1285 = vset.pattern.permute.xlu0 0
          %1286 = vperm.xlu0 %1285, %v1272
          %v1287 = vpop.permute.xlu0 %1286
          %1290 = vset.pattern.permute.xlu0 0
          %1291 = vperm.xlu0 %1290, %v1273
          %v1292 = vpop.permute.xlu0 %1291
          %v1298 = vunpack.c.l.b16 %v1258
          %v1299 = vunpack.c.l.b16 %v1259
          %v1300 = vunpack.c.l.b16 %v1260
          %v1301 = vunpack.c.l.b16 %v1261
          %v1302 = vpack.c.b16 %v1299, %v1298
          %v1303 = vpack.c.b16 %v1301, %v1300
          %v1305 = vsel %vm532, %v1302, 0
          %v1308 = vsel %vm532, %v1303, 0
          %1310 = vmatprep.subr.bf16.mxu0 %v1263
          %1311 = vmatpush1.bf16.msra.mxu0 %v1262
          %1312 = vmatprep.subr.bf16.mxu0 %v1265
          %1313 = vmatpush1.bf16.msra.mxu0 %v1264
          %1314 = vmatprep.subr.bf16.mxu0 %v1267
          %1315 = vmatpush1.bf16.msra.mxu0 %v1266
          %1316 = vmatprep.subr.bf16.mxu0 %v1269
          %1317 = vmatpush1.bf16.msra.mxu0 %v1268
          %1318 = vmatprep.subr.bf16.mxu0 0
          %1319 = vmatpush1.bf16.msra.mxu0 0
          %1320 = vmatprep.subr.bf16.mxu0 0
          %1321 = vmatpush1.bf16.msra.mxu0 0
          %1322 = vmatprep.subr.bf16.mxu0 0
          %1323 = vmatpush1.bf16.msra.mxu0 0
          %1324 = vmatprep.subr.bf16.mxu0 0
          %1325 = vmatpush1.bf16.msra.mxu0 0
          %1326 = vmatprep.subr.bf16.mxu0 0
          %1327 = vmatpush1.bf16.msra.mxu0 0
          %1328 = vmatprep.subr.bf16.mxu0 0
          %1329 = vmatpush1.bf16.msra.mxu0 0
          %1330 = vmatprep.subr.bf16.mxu0 0
          %1331 = vmatpush1.bf16.msra.mxu0 0
          %1332 = vmatprep.subr.bf16.mxu0 0
          %1333 = vmatpush1.bf16.msra.mxu0 0
          %1334 = vmatprep.subr.bf16.mxu0 0
          %1335 = vmatpush1.bf16.msra.mxu0 0
          %1336 = vmatprep.subr.bf16.mxu0 0
          %1337 = vmatpush1.bf16.msra.mxu0 0
          %1338 = vmatprep.subr.bf16.mxu0 0
          %1339 = vmatpush1.bf16.msra.mxu0 0
          %1340 = vmatprep.subr.bf16.mxu0 0
          %1341 = vmatpush1.bf16.msra.mxu0 0
          %1342 = vmatprep.mubr.bf16.mxu0 0
          %1343 = vmatmul.mubr.bf16.gmra.mrb[0].mxu0 %v1305
          %v1344 = vpop.f32.mrb[0].mxu0
          %v1345 = vadd.f32 %v1277, %v1344
          %v1346 = vpop.f32.mrb[0].mxu0
          %v1347 = vadd.f32 %v1277, %v1346
          %v1348 = vpop.f32.mrb[0].mxu0
          %v1349 = vadd.f32 %v1282, %v1348
          %v1350 = vpop.f32.mrb[0].mxu0
          %v1351 = vadd.f32 %v1282, %v1350
          %1352 = vmatprep.mubr.bf16.mxu0 0
          %1353 = vmatmul.mubr.bf16.gmra.mrb[0].mxu0 %v1308
          %v1354 = vpop.f32.mrb[0].mxu0
          %v1355 = vadd.f32 %v1287, %v1354
          %v1356 = vpop.f32.mrb[0].mxu0
          %v1357 = vadd.f32 %v1287, %v1356
          %v1358 = vpop.f32.mrb[0].mxu0
          %v1359 = vadd.f32 %v1292, %v1358
          %v1360 = vpop.f32.mrb[0].mxu0
          %v1361 = vadd.f32 %v1292, %v1360
          %1362 = vdwg.mxu0
          %vm1363 = vcmp.gt.f32.partialorder %v1345, 0.0
          %vm1364 = vcmp.gt.f32.partialorder %v1347, 0.0
          %vm1365 = vcmp.gt.f32.partialorder %v1349, 0.0
          %vm1366 = vcmp.gt.f32.partialorder %v1351, 0.0
          %vm1367 = vcmp.gt.f32.partialorder %v1355, 0.0
          %vm1368 = vcmp.gt.f32.partialorder %v1357, 0.0
          %vm1369 = vcmp.gt.f32.partialorder %v1359, 0.0
          %vm1370 = vcmp.gt.f32.partialorder %v1361, 0.0
          %v1371 = vmul.f32 %v1345, 0.1
          %v1372 = vmul.f32 %v1347, 0.1
          %v1373 = vmul.f32 %v1349, 0.1
          %v1374 = vmul.f32 %v1351, 0.1
          %v1375 = vmul.f32 %v1355, 0.1
          %v1376 = vmul.f32 %v1357, 0.1
          %v1377 = vmul.f32 %v1359, 0.1
          %v1378 = vmul.f32 %v1361, 0.1
          %v1379 = vsel %vm1363, %v1345, %v1371
          %v1380 = vsel %vm1364, %v1347, %v1372
          %v1381 = vsel %vm1365, %v1349, %v1373
          %v1382 = vsel %vm1366, %v1351, %v1374
          %v1383 = vsel %vm1367, %v1355, %v1375
          %v1384 = vsel %vm1368, %v1357, %v1376
          %v1385 = vsel %vm1369, %v1359, %v1377
          %v1386 = vsel %vm1370, %v1361, %v1378
          %v1387 = vld [vmem:[%s7] sm:$0xff]
          %v1388 = vld [vmem:[%s7 + $0x8] sm:$0xff]
          %v1389 = vld [vmem:[%s7 + $0x10] sm:$0xff]
          %v1390 = vld [vmem:[%s7 + $0x18] sm:$0xff]
          %1392 = vset.pattern.permute.xlu0 0
          %1393 = vperm.xlu0 %1392, %v1387
          %v1394 = vpop.permute.xlu0 %1393
          %1397 = vset.pattern.permute.xlu0 0
          %1398 = vperm.xlu0 %1397, %v1388
          %v1399 = vpop.permute.xlu0 %1398
          %1402 = vset.pattern.permute.xlu0 0
          %1403 = vperm.xlu0 %1402, %v1389
          %v1404 = vpop.permute.xlu0 %1403
          %1407 = vset.pattern.permute.xlu0 0
          %1408 = vperm.xlu0 %1407, %v1390
          %v1409 = vpop.permute.xlu0 %1408
          %v1411 = vmul.f32 %v1379, %v1394
          %v1412 = vmul.f32 %v1380, %v1394
          %v1413 = vmul.f32 %v1381, %v1399
          %v1414 = vmul.f32 %v1382, %v1399
          %v1415 = vmul.f32 %v1383, %v1404
          %v1416 = vmul.f32 %v1384, %v1404
          %v1417 = vmul.f32 %v1385, %v1409
          %v1418 = vmul.f32 %v1386, %v1409
          %v1419 = vadd.f32 %v1411, %v1413
          %v1420 = vadd.f32 %v1419, %v1415
          %v1421 = vadd.f32 %v1420, %v1417
          %v1422 = vrot.slane %v1421, 4
          %v1423 = vadd.f32 %v1421, %v1422
          %v1424 = vrot.slane %v1423, 2
          %v1425 = vadd.f32 %v1423, %v1424
          %v1426 = vrot.slane %v1425, 1
          %v1427 = vadd.f32 %v1425, %v1426
          %v1428 = vadd.f32 %v1412, %v1414
          %v1429 = vadd.f32 %v1428, %v1416
          %v1430 = vadd.f32 %v1429, %v1418
          %v1431 = vrot.slane %v1430, 4
          %v1432 = vadd.f32 %v1430, %v1431
          %v1433 = vrot.slane %v1432, 2
          %v1434 = vadd.f32 %v1432, %v1433
          %v1435 = vrot.slane %v1434, 1
          %v1436 = vadd.f32 %v1434, %v1435
          %v1437 = vld [vmem:[#allocation3] sm:$0x1]
          %1439 = vset.pattern.permute.xlu0 0
          %1440 = vperm.xlu0 %1439, %v1437
          %v1441 = vpop.permute.xlu0 %1440
          %v1443 = vlaneseq
          %v1444 = vshrl.u32 %v1443, 7
          %v1445 = vsub.s32 0, %v1444
          %v1446 = vrot.slane %v1441, %v1445
          %v1447 = vadd.f32 %v1427, %v1446
          %v1448 = vadd.f32 %v1436, %v1446
          %v1449 = vsub.f32 0.0, %v1447
          %v1450 = vsub.f32 0.0, %v1448
          %v1451 = vmul.f32 %v1449, 1.442695
          %v1452 = vpow.pop %v1451
          %v1453 = vmul.f32 %v1450, 1.442695
          %v1454 = vpow.pop %v1453
          %v1455 = vadd.f32 %v1452, 1.0
          %v1456 = vadd.f32 %v1454, 1.0
          %v1457 = vrcp.pop %v1455
          %v1458 = vmul.f32 1.0, %v1457
          %v1459 = vrcp.pop %v1456
          %v1460 = vmul.f32 1.0, %v1459
          %v1463 = vcombine.low %v1458, %v1460
          %v1465 = vunpack.c.l.s4 1966171168
          %v1466 = vunpack.c.0.s8 %v1465
          %v1467 = vlaneseq
          %v1468 = vshrl.u32 %v1467, 7
          %v1469 = vsub.s32 %v1466, %v1468
          %v1470 = vrot.slane %v1463, %v1469
          %v1472 = vunpack.c.l.s4 1966171168
          %v1473 = vunpack.c.0.s8 %v1472
          %v1474 = vlaneseq
          %v1475 = vshrl.u32 %v1474, 7
          %v1476 = vsub.s32 %v1473, %v1475
          %v1477 = vrot.slane %v1470, %v1476
          %v1479 = vlaneseq
          %vm1480 = vcmp.ge.s32.totalorder %v1479, 0
          %vm1481 = vcmp.lt.s32.totalorder %v1479, 256
          %vm1482 = vmand %vm1480, %vm1481
          %1483 = vst.msk [vmem:[%s348] sm:$0x3] %vm1482, %v1477
        $region64: #{tpu_custom_call.1} parent=55 // pred_fallthru
          _
        %s1484 = sand.u32 %s241, 1
        %s1485 = scalar_lea.sflag [#allocation5], %s1484
        %s1486 = sand.u32 %s241, 1
        %s1487 = smul.addr %s1486, 2
        %s1488 = scalar_lea.vmem [#allocation4], %s1487
        // Predicated region
        $region65: #{tpu_custom_call.1} parent=55 // pred_check
          %p1489 = pneg %p251
        $region66: #{tpu_custom_call.1} parent=55 // pred_check_branch
          %1491 = sbr.rel (%p1489) target = $region68
        $region67: #{tpu_custom_call.1} parent=55 // pred_region
          %s1492 = smul.u32 2, %s29
          %s1494 = ssub.s32 32, 32
          %1495 = vsyncadd %s1485, %s1494
          %s1496 = smul.addr %s1492, 16
          %s1497 = scalar_lea.hbm %s9, %s1496
          %s1499 = sshll.u32 %s1488, 4
          %s1500 = int_to_ptr.vmem [resolvable:$true] %s1499
          %1502 = dma.vmem_to_hbm [thread:$0]  %s1500, 32, %s1497, %s1485
        $region68: #{tpu_custom_call.1} parent=55 // pred_fallthru
          _
      $region56: #{tpu_custom_call.1} parent=5 // pred_fallthru
        _
      %p1503 = scmp.le.s32.totalorder 2, %s20
      // Predicated region
      $region69: #{tpu_custom_call.1} parent=5 // pred_check
        %p1504 = pneg %p1503
      $region70: #{tpu_custom_call.1} parent=5 // pred_check_branch
        %1506 = sbr.rel (%p1504) target = $region72
      $region71: #{tpu_custom_call.1} parent=5 // pred_region
        %s1507 = ssub.s32 %s20, 2
        // Predicated region
        $region73: #{tpu_custom_call.1} parent=71 // pred_check
          %p1508 = pneg %p257
        $region74: #{tpu_custom_call.1} parent=71 // pred_check_branch
          %1510 = sbr.rel (%p1508) target = $region76
        $region75: #{tpu_custom_call.1} parent=71 // pred_region
          %s1511 = sand.u32 %s242, 1
          %s1512 = scalar_lea.sflag [#allocation5], %s1511
          %s1513 = sand.u32 %s242, 1
          %s1514 = smul.addr %s1513, 2
          %s1515 = scalar_lea.vmem [#allocation4], %s1514
          %1516 = dma.done %s1512, 32
        $region76: #{tpu_custom_call.1} parent=71 // pred_fallthru
          _
      $region72: #{tpu_custom_call.1} parent=5 // pred_fallthru
        _
    $region6: #{tpu_custom_call.1} parent=1 // loop_footer
      %s24 = sadd.s32 1, %s20
    $region7: #{tpu_custom_call.1} parent=1 // loop_footer_branch
      %19 = sbr.rel target = $region3
    $region8: #{tpu_custom_call.1} parent=1 // loop_exit
      _
    %1517 = vsyncpa [#allocation5], 1
    %s1518 = scalar_lea.sflag [#allocation5], 1
    %1519 = vsyncpa %s1518, 1

</llo_original>
